<compile_context>
chip_gen: v7x
topology: tpu7x:2x2x1
jax: 0.10.0
libtpu: 0.0.40
codegen_flags: <defaults>
</compile_context>

<pallas_src>
import jax
import jax.numpy as jnp
from jax.experimental import pallas as pl
from jax.experimental.pallas import tpu as pltpu

# ----------------------------- model config ---------------------------------
BATCH = 2
CHANNELS = 4
IMAGE = 16
PATCH = 8
HIDDEN = 32
HEADS = 2
HEAD_DIM = HIDDEN // HEADS
LAYERS = 2
MLP = 4 * HIDDEN           # 128
CLASSES = 10
N_PATCH = (IMAGE // PATCH) ** 2
SEQ = N_PATCH + 1          # +1 for the CLS token (=5)
LN_EPS = 1e-12             # HF ViT default layer_norm_eps

# ----------------------------- kernel layout ---------------------------------
LANES = 128
PAD_SEQ = 8                      # per-batch token rows, sublane aligned
SHIFT = PAD_SEQ.bit_length() - 1  # log2(PAD_SEQ)
TOKENS = BATCH * PAD_SEQ         # 16
GROUPS = 3 * HEADS               # (q,k,v) x heads = 6 lane-groups of 128

# global small-parameter slab rows (shape (GLOB_ROWS, 128))
ROW_PATCH_B = 0
ROW_CLS = 1
ROW_POS = 2                      # rows 2..2+SEQ-1
ROW_LNF_G = 7
ROW_LNF_B = 8
ROW_CLF_B = 9
GLOB_ROWS = 16

# per-layer small-parameter slab rows (shape (LAYERS, LSM_ROWS, 128))
ROW_LN1_G = 0
ROW_LN1_B = 1
ROW_LN2_G = 2
ROW_LN2_B = 3
ROW_BO = 4
ROW_BO2 = 5
ROW_BI = 6
ROW_BQKV = 8                     # rows 8..13: per-(proj,head) qkv bias
LSM_ROWS = 16


def _full_spec(shape):
    # whole-array block (block dims equal the full array dims -> always legal)
    return pl.BlockSpec(shape, lambda: (0,) * len(shape))


# ----------------------------- in-kernel math --------------------------------
def _erf(x):
    # Abramowitz & Stegun 7.1.26 rational approximation (max abs err ~1.5e-7).
    a1, a2, a3, a4, a5 = (0.254829592, -0.284496736, 1.421413741,
                          -1.453152027, 1.061405429)
    p = 0.3275911
    s = jnp.where(x >= 0.0, 1.0, -1.0)
    ax = jnp.abs(x)
    t = 1.0 / (1.0 + p * ax)
    poly = ((((a5 * t + a4) * t + a3) * t + a2) * t + a1) * t
    return s * (1.0 - poly * jnp.exp(-ax * ax))


def _gelu(x):
    # exact-GELU semantics via erf approximation (HF ViT default)
    return 0.5 * x * (1.0 + _erf(x * 0.7071067811865476))


def _layernorm(x, g, b):
    mean = jnp.mean(x, axis=-1, keepdims=True)
    xc = x - mean
    var = jnp.mean(xc * xc, axis=-1, keepdims=True)
    return xc * jax.lax.rsqrt(var + LN_EPS) * g + b


# ------------------------------- fused kernel --------------------------------
def _vit_kernel(patches_ref, patch_w_ref, glob_ref, lsm_ref,
                wqkv_ref, wo_ref, wi_ref, wo2_ref, clf_w_ref, o_ref):
    scale = 1.0 / (HEAD_DIM ** 0.5)
    glob = glob_ref[...]                                   # (GLOB_ROWS, 128)

    # ---- patch embedding + CLS token + position embeddings (values only) ----
    emb = jnp.dot(patches_ref[...], patch_w_ref[...],
                  preferred_element_type=jnp.float32)
    emb = emb + glob[ROW_PATCH_B:ROW_PATCH_B + 1, :HIDDEN]   # (B*N_PATCH, H)
    cls_tok = (glob[ROW_CLS:ROW_CLS + 1, :HIDDEN]
               + glob[ROW_POS:ROW_POS + 1, :HIDDEN])         # (1, H)
    pos_patch = glob[ROW_POS + 1:ROW_POS + SEQ, :HIDDEN]     # (N_PATCH, H)
    pad_rows = jnp.zeros((PAD_SEQ - SEQ, HIDDEN), jnp.float32)

    blocks = []
    for b in range(BATCH):
        pe = emb[b * N_PATCH:(b + 1) * N_PATCH, :] + pos_patch
        blocks.append(jnp.concatenate([cls_tok, pe, pad_rows], axis=0))
    h = jnp.concatenate(blocks, axis=0)                      # (TOKENS, H)

    # ---- attention mask: block-diagonal over batches + pad-key masking ----
    row_ids = jax.lax.broadcasted_iota(jnp.int32, (TOKENS, TOKENS), 0)
    col_ids = jax.lax.broadcasted_iota(jnp.int32, (TOKENS, TOKENS), 1)
    same_batch = jnp.right_shift(row_ids, SHIFT) == jnp.right_shift(col_ids, SHIFT)
    key_valid = jnp.bitwise_and(col_ids, PAD_SEQ - 1) < SEQ
    mask_add = jnp.where(same_batch & key_valid, 0.0, -1e30).astype(jnp.float32)

    # ---- transformer layers (statically unrolled) ----
    for l in range(LAYERS):
        lsm = lsm_ref[l]                                     # (LSM_ROWS, 128)

        # pre-LN attention block
        hn = _layernorm(h, lsm[ROW_LN1_G:ROW_LN1_G + 1, :HIDDEN],
                        lsm[ROW_LN1_B:ROW_LN1_B + 1, :HIDDEN])
        qkv = jnp.dot(hn, wqkv_ref[l],
                      preferred_element_type=jnp.float32)    # (TOKENS, 6*128)

        heads_out = []
        for hd in range(HEADS):
            gq = 0 * HEADS + hd
            gk = 1 * HEADS + hd
            gv = 2 * HEADS + hd
            q = qkv[:, gq * LANES:(gq + 1) * LANES] + lsm[ROW_BQKV + gq:ROW_BQKV + gq + 1, :]
            k = qkv[:, gk * LANES:(gk + 1) * LANES] + lsm[ROW_BQKV + gk:ROW_BQKV + gk + 1, :]
            v = qkv[:, gv * LANES:(gv + 1) * LANES] + lsm[ROW_BQKV + gv:ROW_BQKV + gv + 1, :]
            # contract last dims directly (no explicit k.T relayout); padded
            # lanes of q/k are exact zeros so the score is exact.
            s = jax.lax.dot_general(q, k,
                                    dimension_numbers=(((1,), (1,)), ((), ())),
                                    preferred_element_type=jnp.float32) * scale
            s = s + mask_add
            s = s - jnp.max(s, axis=-1, keepdims=True)
            p = jnp.exp(s)
            p = p * pl.reciprocal(jnp.sum(p, axis=-1, keepdims=True), approx=False)
            heads_out.append(jnp.dot(p, v, preferred_element_type=jnp.float32))

        attn = jnp.concatenate(heads_out, axis=1)            # (TOKENS, HEADS*128)
        h = (jnp.dot(attn, wo_ref[l], preferred_element_type=jnp.float32)
             + lsm[ROW_BO:ROW_BO + 1, :HIDDEN] + h)

        # pre-LN MLP block
        hn = _layernorm(h, lsm[ROW_LN2_G:ROW_LN2_G + 1, :HIDDEN],
                        lsm[ROW_LN2_B:ROW_LN2_B + 1, :HIDDEN])
        mid = _gelu(jnp.dot(hn, wi_ref[l], preferred_element_type=jnp.float32)
                    + lsm[ROW_BI:ROW_BI + 1, :])
        h = (jnp.dot(mid, wo2_ref[l], preferred_element_type=jnp.float32)
             + lsm[ROW_BO2:ROW_BO2 + 1, :HIDDEN] + h)

    # ---- final LN + batched classifier head on the CLS tokens (-> .logits) ----
    hf = _layernorm(h, glob[ROW_LNF_G:ROW_LNF_G + 1, :HIDDEN],
                    glob[ROW_LNF_B:ROW_LNF_B + 1, :HIDDEN])
    cls_rows = jnp.concatenate([hf[0:1, :], hf[PAD_SEQ:PAD_SEQ + 1, :]], axis=0)
    logits = (jnp.dot(cls_rows, clf_w_ref[...], preferred_element_type=jnp.float32)
              + glob[ROW_CLF_B:ROW_CLF_B + 1, :])            # (B, 128) lane-dense
    o_ref[...] = logits.astype(o_ref.dtype)


# ---------------------------- parameters -------------------------------------
def init_params(key):
    ks = iter(jax.random.split(key, 64))

    def nrm(shape, scale=0.02):
        return jax.random.normal(next(ks), shape, jnp.float32) * scale

    patch_w = nrm((CHANNELS * PATCH * PATCH, HIDDEN))
    patch_b = nrm((HIDDEN,))
    cls_tok = nrm((HIDDEN,))
    pos = nrm((SEQ, HIDDEN))
    clf_w = nrm((HIDDEN, CLASSES))

    # global small-parameter slab (one DMA)
    glob = jnp.zeros((GLOB_ROWS, LANES), jnp.float32)
    glob = glob.at[ROW_PATCH_B, :HIDDEN].set(patch_b)
    glob = glob.at[ROW_CLS, :HIDDEN].set(cls_tok)
    glob = glob.at[ROW_POS:ROW_POS + SEQ, :HIDDEN].set(pos)
    glob = glob.at[ROW_LNF_G, :HIDDEN].set(1.0)       # lnf gamma (beta stays 0)
    # classifier bias row (ROW_CLF_B) stays zero, incl. class padding

    clf_w_pad = jnp.zeros((HIDDEN, LANES), jnp.float32).at[:, :CLASSES].set(clf_w)

    w_qkv, wo_l, wi_l, wo2_l, lsm_l = [], [], [], [], []
    for _ in range(LAYERS):
        wq, wk, wv = nrm((HIDDEN, HIDDEN)), nrm((HIDDEN, HIDDEN)), nrm((HIDDEN, HIDDEN))
        bq, bk, bv = nrm((HIDDEN,)), nrm((HIDDEN,)), nrm((HIDDEN,))
        wo_nat, bo = nrm((HIDDEN, HIDDEN)), nrm((HIDDEN,))
        wi_nat, bi = nrm((HIDDEN, MLP)), nrm((MLP,))
        wo2_nat, bo2 = nrm((MLP, HIDDEN)), nrm((HIDDEN,))

        # fused QKV weight, each (proj, head) padded to its own 128-lane group
        wqkv_p = jnp.zeros((HIDDEN, GROUPS * LANES), jnp.float32)
        for pi, wp in enumerate((wq, wk, wv)):
            for hd in range(HEADS):
                g = pi * HEADS + hd
                wqkv_p = wqkv_p.at[:, g * LANES:g * LANES + HEAD_DIM].set(
                    wp[:, hd * HEAD_DIM:(hd + 1) * HEAD_DIM])
        w_qkv.append(wqkv_p)

        # output projection zero-padded to consume the head-padded attn outputs
        wo_p = jnp.zeros((HEADS * LANES, HIDDEN), jnp.float32)
        for hd in range(HEADS):
            wo_p = wo_p.at[hd * LANES:hd * LANES + HEAD_DIM, :].set(
                wo_nat[hd * HEAD_DIM:(hd + 1) * HEAD_DIM, :])
        wo_l.append(wo_p)

        wi_l.append(wi_nat)
        wo2_l.append(wo2_nat)

        # per-layer small-parameter slab
        lsm = jnp.zeros((LSM_ROWS, LANES), jnp.float32)
        lsm = lsm.at[ROW_LN1_G, :HIDDEN].set(1.0)
        lsm = lsm.at[ROW_LN2_G, :HIDDEN].set(1.0)
        lsm = lsm.at[ROW_BO, :HIDDEN].set(bo)
        lsm = lsm.at[ROW_BO2, :HIDDEN].set(bo2)
        lsm = lsm.at[ROW_BI, :MLP].set(bi)
        for pi, bp in enumerate((bq, bk, bv)):
            for hd in range(HEADS):
                g = pi * HEADS + hd
                lsm = lsm.at[ROW_BQKV + g, :HEAD_DIM].set(
                    bp[hd * HEAD_DIM:(hd + 1) * HEAD_DIM])
        lsm_l.append(lsm)

    return {
        "patch_w": patch_w,
        "glob": glob,
        "lsm": jnp.stack(lsm_l),
        "w_qkv": jnp.stack(w_qkv),
        "wo": jnp.stack(wo_l),
        "wi": jnp.stack(wi_l),
        "wo2": jnp.stack(wo2_l),
        "clf_w": clf_w_pad,
    }


# ------------------------------ forward ---------------------------------------
def vit_forward(x, params):
    """x: (B, C, H, W) NCHW float32 -> logits (B, CLASSES)."""
    B, C, Himg, Wimg = x.shape
    P = PATCH
    nh, nw = Himg // P, Wimg // P

    # patch unfold (cheap glue): (B,C,H,W) -> (B*num_patches, C*P*P), matching a
    # flattened Conv2d weight layout (C, P, P).
    patches = x.reshape(B, C, nh, P, nw, P)
    patches = patches.transpose(0, 2, 4, 1, 3, 5).reshape(B * nh * nw, C * P * P)

    args = [patches, params["patch_w"], params["glob"], params["lsm"],
            params["w_qkv"], params["wo"], params["wi"], params["wo2"],
            params["clf_w"]]

    logits_pad = pl.pallas_call(
        _vit_kernel,
        out_shape=jax.ShapeDtypeStruct((BATCH, LANES), jnp.float32),
        in_specs=[_full_spec(a.shape) for a in args],
        out_specs=_full_spec((BATCH, LANES)),
    )(*args)
    return logits_pad[:, :CLASSES]


if __name__ == "__main__":
    key = jax.random.PRNGKey(0)
    k_params, k_x = jax.random.split(key)
    params = init_params(k_params)
    x = jax.random.normal(k_x, (BATCH, CHANNELS, IMAGE, IMAGE), jnp.float32)

    logits = jax.jit(vit_forward)(x, params)
    logits = jax.block_until_ready(logits)

    assert logits.shape == (BATCH, CLASSES)
    assert bool(jnp.all(jnp.isfinite(logits)))
    print("KERNEL_OK")
</pallas_src>

<mosaic_0001>
module attributes {stable_mosaic.version = 11 : i64} {
  func.func @_vit_kernel(%arg0: memref<8x256xf32, #tpu.memory_space<vmem>>, %arg1: memref<256x32xf32, #tpu.memory_space<vmem>>, %arg2: memref<16x128xf32, #tpu.memory_space<vmem>>, %arg3: memref<2x16x128xf32, #tpu.memory_space<vmem>>, %arg4: memref<2x32x768xf32, #tpu.memory_space<vmem>>, %arg5: memref<2x256x32xf32, #tpu.memory_space<vmem>>, %arg6: memref<2x32x128xf32, #tpu.memory_space<vmem>>, %arg7: memref<2x128x32xf32, #tpu.memory_space<vmem>>, %arg8: memref<32x128xf32, #tpu.memory_space<vmem>>, %arg9: memref<2x128xf32, #tpu.memory_space<vmem>>) attributes {dimension_semantics = [], scalar_prefetch = 0 : i64, scratch_operands = 0 : i64, tpu.core_type = #tpu.core_type<tc>} {
    %c0 = arith.constant 0 : index
    %c0_0 = arith.constant 0 : index
    %0 = vector.load %arg2[%c0, %c0_0] : memref<16x128xf32, #tpu.memory_space<vmem>>, vector<16x128xf32>
    %c0_1 = arith.constant 0 : index
    %c0_2 = arith.constant 0 : index
    %1 = vector.load %arg0[%c0_1, %c0_2] : memref<8x256xf32, #tpu.memory_space<vmem>>, vector<8x256xf32>
    %c0_3 = arith.constant 0 : index
    %c0_4 = arith.constant 0 : index
    %2 = vector.load %arg1[%c0_3, %c0_4] : memref<256x32xf32, #tpu.memory_space<vmem>>, vector<256x32xf32>
    %cst = arith.constant dense<0.000000e+00> : vector<8x32xf32>
    %3 = tpu.matmul %1, %2, %cst {dimension_numbers = #tpu.dot_dimension_numbers<[1], [0], [0], [1], [0, 0, 1, 1], [], []>} : vector<8x256xf32>, vector<256x32xf32>, vector<8x32xf32> -> vector<8x32xf32>
    %4 = vector.extract_strided_slice %0 {offsets = [0, 0], sizes = [1, 32], strides = [1, 1]} : vector<16x128xf32> to vector<1x32xf32>
    %5 = vector.broadcast %4 : vector<1x32xf32> to vector<8x32xf32>
    %6 = arith.addf %3, %5 : vector<8x32xf32>
    %7 = vector.extract_strided_slice %0 {offsets = [1, 0], sizes = [1, 32], strides = [1, 1]} : vector<16x128xf32> to vector<1x32xf32>
    %8 = vector.extract_strided_slice %0 {offsets = [2, 0], sizes = [1, 32], strides = [1, 1]} : vector<16x128xf32> to vector<1x32xf32>
    %9 = arith.addf %7, %8 : vector<1x32xf32>
    %10 = vector.extract_strided_slice %0 {offsets = [3, 0], sizes = [4, 32], strides = [1, 1]} : vector<16x128xf32> to vector<4x32xf32>
    %cst_5 = arith.constant 0.000000e+00 : f32
    %11 = vector.broadcast %cst_5 : f32 to vector<3x32xf32>
    %12 = vector.extract_strided_slice %6 {offsets = [0, 0], sizes = [4, 32], strides = [1, 1]} : vector<8x32xf32> to vector<4x32xf32>
    %13 = arith.addf %12, %10 : vector<4x32xf32>
    %14 = tpu.concatenate %9, %13, %11 in 0 : vector<1x32xf32>, vector<4x32xf32>, vector<3x32xf32> -> vector<8x32xf32>
    %15 = vector.extract_strided_slice %6 {offsets = [4, 0], sizes = [4, 32], strides = [1, 1]} : vector<8x32xf32> to vector<4x32xf32>
    %16 = arith.addf %15, %10 : vector<4x32xf32>
    %17 = tpu.concatenate %9, %16, %11 in 0 : vector<1x32xf32>, vector<4x32xf32>, vector<3x32xf32> -> vector<8x32xf32>
    %18 = tpu.concatenate %14, %17 in 0 : vector<8x32xf32>, vector<8x32xf32> -> vector<16x32xf32>
    %19 = tpu.iota {dimensions = array<i32: 0>} : vector<16x16xi32>
    %20 = tpu.iota {dimensions = array<i32: 1>} : vector<16x16xi32>
    %c3_i32 = arith.constant 3 : i32
    %21 = vector.broadcast %c3_i32 : i32 to vector<16x16xi32>
    %22 = arith.shrsi %19, %21 : vector<16x16xi32>
    %c3_i32_6 = arith.constant 3 : i32
    %23 = vector.broadcast %c3_i32_6 : i32 to vector<16x16xi32>
    %24 = arith.shrsi %20, %23 : vector<16x16xi32>
    %25 = arith.cmpi eq, %22, %24 : vector<16x16xi32>
    %c7_i32 = arith.constant 7 : i32
    %26 = vector.broadcast %c7_i32 : i32 to vector<16x16xi32>
    %27 = arith.andi %20, %26 : vector<16x16xi32>
    %c5_i32 = arith.constant 5 : i32
    %28 = vector.broadcast %c5_i32 : i32 to vector<16x16xi32>
    %29 = arith.cmpi slt, %27, %28 : vector<16x16xi32>
    %30 = arith.andi %25, %29 : vector<16x16xi1>
    %cst_7 = arith.constant 0.000000e+00 : f32
    %cst_8 = arith.constant -1.000000e+30 : f32
    %31 = vector.broadcast %cst_7 : f32 to vector<16x16xf32>
    %32 = vector.broadcast %cst_8 : f32 to vector<16x16xf32>
    %33 = arith.select %30, %31, %32 : vector<16x16xi1>, vector<16x16xf32>
    %c0_9 = arith.constant 0 : index
    %c0_10 = arith.constant 0 : index
    %c0_11 = arith.constant 0 : index
    %34 = vector.load %arg3[%c0_9, %c0_10, %c0_11] : memref<2x16x128xf32, #tpu.memory_space<vmem>>, vector<1x16x128xf32>
    %35 = vector.shape_cast %34 : vector<1x16x128xf32> to vector<16x128xf32>
    %36 = vector.extract_strided_slice %35 {offsets = [0, 0], sizes = [1, 32], strides = [1, 1]} : vector<16x128xf32> to vector<1x32xf32>
    %37 = vector.extract_strided_slice %35 {offsets = [1, 0], sizes = [1, 32], strides = [1, 1]} : vector<16x128xf32> to vector<1x32xf32>
    %cst_12 = arith.constant dense<0.000000e+00> : vector<16xf32>
    %38 = vector.multi_reduction <add>, %18, %cst_12 [1] : vector<16x32xf32> to vector<16xf32>
    %39 = vector.shape_cast %38 : vector<16xf32> to vector<16x1xf32>
    %cst_13 = arith.constant 3.200000e+01 : f32
    %40 = vector.broadcast %cst_13 : f32 to vector<16x1xf32>
    %41 = arith.divf %39, %40 : vector<16x1xf32>
    %42 = vector.broadcast %41 : vector<16x1xf32> to vector<16x32xf32>
    %43 = arith.subf %18, %42 : vector<16x32xf32>
    %44 = arith.mulf %43, %43 : vector<16x32xf32>
    %cst_14 = arith.constant dense<0.000000e+00> : vector<16xf32>
    %45 = vector.multi_reduction <add>, %44, %cst_14 [1] : vector<16x32xf32> to vector<16xf32>
    %46 = vector.shape_cast %45 : vector<16xf32> to vector<16x1xf32>
    %cst_15 = arith.constant 3.200000e+01 : f32
    %47 = vector.broadcast %cst_15 : f32 to vector<16x1xf32>
    %48 = arith.divf %46, %47 : vector<16x1xf32>
    %cst_16 = arith.constant 9.99999996E-13 : f32
    %49 = vector.broadcast %cst_16 : f32 to vector<16x1xf32>
    %50 = arith.addf %48, %49 : vector<16x1xf32>
    %51 = math.rsqrt %50 : vector<16x1xf32>
    %52 = vector.broadcast %51 : vector<16x1xf32> to vector<16x32xf32>
    %53 = arith.mulf %43, %52 : vector<16x32xf32>
    %54 = vector.broadcast %36 : vector<1x32xf32> to vector<16x32xf32>
    %55 = arith.mulf %53, %54 : vector<16x32xf32>
    %56 = vector.broadcast %37 : vector<1x32xf32> to vector<16x32xf32>
    %57 = arith.addf %55, %56 : vector<16x32xf32>
    %c0_17 = arith.constant 0 : index
    %c0_18 = arith.constant 0 : index
    %c0_19 = arith.constant 0 : index
    %58 = vector.load %arg4[%c0_17, %c0_18, %c0_19] : memref<2x32x768xf32, #tpu.memory_space<vmem>>, vector<1x32x768xf32>
    %59 = vector.shape_cast %58 : vector<1x32x768xf32> to vector<32x768xf32>
    %cst_20 = arith.constant dense<0.000000e+00> : vector<16x768xf32>
    %60 = tpu.matmul %57, %59, %cst_20 {dimension_numbers = #tpu.dot_dimension_numbers<[1], [0], [0], [1], [0, 0, 1, 1], [], []>} : vector<16x32xf32>, vector<32x768xf32>, vector<16x768xf32> -> vector<16x768xf32>
    %61 = vector.extract_strided_slice %60 {offsets = [0, 0], sizes = [16, 128], strides = [1, 1]} : vector<16x768xf32> to vector<16x128xf32>
    %62 = vector.extract_strided_slice %35 {offsets = [8, 0], sizes = [1, 128], strides = [1, 1]} : vector<16x128xf32> to vector<1x128xf32>
    %63 = vector.broadcast %62 : vector<1x128xf32> to vector<16x128xf32>
    %64 = arith.addf %61, %63 : vector<16x128xf32>
    %65 = vector.extract_strided_slice %60 {offsets = [0, 256], sizes = [16, 128], strides = [1, 1]} : vector<16x768xf32> to vector<16x128xf32>
    %66 = vector.extract_strided_slice %35 {offsets = [10, 0], sizes = [1, 128], strides = [1, 1]} : vector<16x128xf32> to vector<1x128xf32>
    %67 = vector.broadcast %66 : vector<1x128xf32> to vector<16x128xf32>
    %68 = arith.addf %65, %67 : vector<16x128xf32>
    %69 = vector.extract_strided_slice %60 {offsets = [0, 512], sizes = [16, 128], strides = [1, 1]} : vector<16x768xf32> to vector<16x128xf32>
    %70 = vector.extract_strided_slice %35 {offsets = [12, 0], sizes = [1, 128], strides = [1, 1]} : vector<16x128xf32> to vector<1x128xf32>
    %71 = vector.broadcast %70 : vector<1x128xf32> to vector<16x128xf32>
    %72 = arith.addf %69, %71 : vector<16x128xf32>
    %cst_21 = arith.constant dense<0.000000e+00> : vector<16x16xf32>
    %73 = tpu.matmul %64, %68, %cst_21 {dimension_numbers = #tpu.dot_dimension_numbers<[1], [1], [0], [0], [0, 0, 1, 0], [], []>} : vector<16x128xf32>, vector<16x128xf32>, vector<16x16xf32> -> vector<16x16xf32>
    %cst_22 = arith.constant 2.500000e-01 : f32
    %74 = vector.broadcast %cst_22 : f32 to vector<16x16xf32>
    %75 = arith.mulf %73, %74 : vector<16x16xf32>
    %76 = arith.addf %75, %33 : vector<16x16xf32>
    %cst_23 = arith.constant dense<0xFF800000> : vector<16xf32>
    %77 = vector.multi_reduction <maximumf>, %76, %cst_23 [1] : vector<16x16xf32> to vector<16xf32>
    %78 = vector.shape_cast %77 : vector<16xf32> to vector<16x1xf32>
    %79 = vector.broadcast %78 : vector<16x1xf32> to vector<16x16xf32>
    %80 = arith.subf %76, %79 : vector<16x16xf32>
    %81 = math.exp %80 : vector<16x16xf32>
    %cst_24 = arith.constant dense<0.000000e+00> : vector<16xf32>
    %82 = vector.multi_reduction <add>, %81, %cst_24 [1] : vector<16x16xf32> to vector<16xf32>
    %83 = vector.shape_cast %82 : vector<16xf32> to vector<16x1xf32>
    %84 = tpu.reciprocal %83 : vector<16x1xf32> -> vector<16x1xf32>
    %85 = vector.broadcast %84 : vector<16x1xf32> to vector<16x16xf32>
    %86 = arith.mulf %81, %85 : vector<16x16xf32>
    %cst_25 = arith.constant dense<0.000000e+00> : vector<16x128xf32>
    %87 = tpu.matmul %86, %72, %cst_25 {dimension_numbers = #tpu.dot_dimension_numbers<[1], [0], [0], [1], [0, 0, 1, 1], [], []>} : vector<16x16xf32>, vector<16x128xf32>, vector<16x128xf32> -> vector<16x128xf32>
    %88 = vector.extract_strided_slice %60 {offsets = [0, 128], sizes = [16, 128], strides = [1, 1]} : vector<16x768xf32> to vector<16x128xf32>
    %89 = vector.extract_strided_slice %35 {offsets = [9, 0], sizes = [1, 128], strides = [1, 1]} : vector<16x128xf32> to vector<1x128xf32>
    %90 = vector.broadcast %89 : vector<1x128xf32> to vector<16x128xf32>
    %91 = arith.addf %88, %90 : vector<16x128xf32>
    %92 = vector.extract_strided_slice %60 {offsets = [0, 384], sizes = [16, 128], strides = [1, 1]} : vector<16x768xf32> to vector<16x128xf32>
    %93 = vector.extract_strided_slice %35 {offsets = [11, 0], sizes = [1, 128], strides = [1, 1]} : vector<16x128xf32> to vector<1x128xf32>
    %94 = vector.broadcast %93 : vector<1x128xf32> to vector<16x128xf32>
    %95 = arith.addf %92, %94 : vector<16x128xf32>
    %96 = vector.extract_strided_slice %60 {offsets = [0, 640], sizes = [16, 128], strides = [1, 1]} : vector<16x768xf32> to vector<16x128xf32>
    %97 = vector.extract_strided_slice %35 {offsets = [13, 0], sizes = [1, 128], strides = [1, 1]} : vector<16x128xf32> to vector<1x128xf32>
    %98 = vector.broadcast %97 : vector<1x128xf32> to vector<16x128xf32>
    %99 = arith.addf %96, %98 : vector<16x128xf32>
    %cst_26 = arith.constant dense<0.000000e+00> : vector<16x16xf32>
    %100 = tpu.matmul %91, %95, %cst_26 {dimension_numbers = #tpu.dot_dimension_numbers<[1], [1], [0], [0], [0, 0, 1, 0], [], []>} : vector<16x128xf32>, vector<16x128xf32>, vector<16x16xf32> -> vector<16x16xf32>
    %cst_27 = arith.constant 2.500000e-01 : f32
    %101 = vector.broadcast %cst_27 : f32 to vector<16x16xf32>
    %102 = arith.mulf %100, %101 : vector<16x16xf32>
    %103 = arith.addf %102, %33 : vector<16x16xf32>
    %cst_28 = arith.constant dense<0xFF800000> : vector<16xf32>
    %104 = vector.multi_reduction <maximumf>, %103, %cst_28 [1] : vector<16x16xf32> to vector<16xf32>
    %105 = vector.shape_cast %104 : vector<16xf32> to vector<16x1xf32>
    %106 = vector.broadcast %105 : vector<16x1xf32> to vector<16x16xf32>
    %107 = arith.subf %103, %106 : vector<16x16xf32>
    %108 = math.exp %107 : vector<16x16xf32>
    %cst_29 = arith.constant dense<0.000000e+00> : vector<16xf32>
    %109 = vector.multi_reduction <add>, %108, %cst_29 [1] : vector<16x16xf32> to vector<16xf32>
    %110 = vector.shape_cast %109 : vector<16xf32> to vector<16x1xf32>
    %111 = tpu.reciprocal %110 : vector<16x1xf32> -> vector<16x1xf32>
    %112 = vector.broadcast %111 : vector<16x1xf32> to vector<16x16xf32>
    %113 = arith.mulf %108, %112 : vector<16x16xf32>
    %cst_30 = arith.constant dense<0.000000e+00> : vector<16x128xf32>
    %114 = tpu.matmul %113, %99, %cst_30 {dimension_numbers = #tpu.dot_dimension_numbers<[1], [0], [0], [1], [0, 0, 1, 1], [], []>} : vector<16x16xf32>, vector<16x128xf32>, vector<16x128xf32> -> vector<16x128xf32>
    %115 = tpu.concatenate %87, %114 in 1 : vector<16x128xf32>, vector<16x128xf32> -> vector<16x256xf32>
    %c0_31 = arith.constant 0 : index
    %c0_32 = arith.constant 0 : index
    %c0_33 = arith.constant 0 : index
    %116 = vector.load %arg5[%c0_31, %c0_32, %c0_33] : memref<2x256x32xf32, #tpu.memory_space<vmem>>, vector<1x256x32xf32>
    %117 = vector.shape_cast %116 : vector<1x256x32xf32> to vector<256x32xf32>
    %cst_34 = arith.constant dense<0.000000e+00> : vector<16x32xf32>
    %118 = tpu.matmul %115, %117, %cst_34 {dimension_numbers = #tpu.dot_dimension_numbers<[1], [0], [0], [1], [0, 0, 1, 1], [], []>} : vector<16x256xf32>, vector<256x32xf32>, vector<16x32xf32> -> vector<16x32xf32>
    %119 = vector.extract_strided_slice %35 {offsets = [4, 0], sizes = [1, 32], strides = [1, 1]} : vector<16x128xf32> to vector<1x32xf32>
    %120 = vector.broadcast %119 : vector<1x32xf32> to vector<16x32xf32>
    %121 = arith.addf %118, %120 : vector<16x32xf32>
    %122 = arith.addf %121, %18 : vector<16x32xf32>
    %123 = vector.extract_strided_slice %35 {offsets = [2, 0], sizes = [1, 32], strides = [1, 1]} : vector<16x128xf32> to vector<1x32xf32>
    %124 = vector.extract_strided_slice %35 {offsets = [3, 0], sizes = [1, 32], strides = [1, 1]} : vector<16x128xf32> to vector<1x32xf32>
    %cst_35 = arith.constant dense<0.000000e+00> : vector<16xf32>
    %125 = vector.multi_reduction <add>, %122, %cst_35 [1] : vector<16x32xf32> to vector<16xf32>
    %126 = vector.shape_cast %125 : vector<16xf32> to vector<16x1xf32>
    %cst_36 = arith.constant 3.200000e+01 : f32
    %127 = vector.broadcast %cst_36 : f32 to vector<16x1xf32>
    %128 = arith.divf %126, %127 : vector<16x1xf32>
    %129 = vector.broadcast %128 : vector<16x1xf32> to vector<16x32xf32>
    %130 = arith.subf %122, %129 : vector<16x32xf32>
    %131 = arith.mulf %130, %130 : vector<16x32xf32>
    %cst_37 = arith.constant dense<0.000000e+00> : vector<16xf32>
    %132 = vector.multi_reduction <add>, %131, %cst_37 [1] : vector<16x32xf32> to vector<16xf32>
    %133 = vector.shape_cast %132 : vector<16xf32> to vector<16x1xf32>
    %cst_38 = arith.constant 3.200000e+01 : f32
    %134 = vector.broadcast %cst_38 : f32 to vector<16x1xf32>
    %135 = arith.divf %133, %134 : vector<16x1xf32>
    %cst_39 = arith.constant 9.99999996E-13 : f32
    %136 = vector.broadcast %cst_39 : f32 to vector<16x1xf32>
    %137 = arith.addf %135, %136 : vector<16x1xf32>
    %138 = math.rsqrt %137 : vector<16x1xf32>
    %139 = vector.broadcast %138 : vector<16x1xf32> to vector<16x32xf32>
    %140 = arith.mulf %130, %139 : vector<16x32xf32>
    %141 = vector.broadcast %123 : vector<1x32xf32> to vector<16x32xf32>
    %142 = arith.mulf %140, %141 : vector<16x32xf32>
    %143 = vector.broadcast %124 : vector<1x32xf32> to vector<16x32xf32>
    %144 = arith.addf %142, %143 : vector<16x32xf32>
    %c0_40 = arith.constant 0 : index
    %c0_41 = arith.constant 0 : index
    %c0_42 = arith.constant 0 : index
    %145 = vector.load %arg6[%c0_40, %c0_41, %c0_42] : memref<2x32x128xf32, #tpu.memory_space<vmem>>, vector<1x32x128xf32>
    %146 = vector.shape_cast %145 : vector<1x32x128xf32> to vector<32x128xf32>
    %cst_43 = arith.constant dense<0.000000e+00> : vector<16x128xf32>
    %147 = tpu.matmul %144, %146, %cst_43 {dimension_numbers = #tpu.dot_dimension_numbers<[1], [0], [0], [1], [0, 0, 1, 1], [], []>} : vector<16x32xf32>, vector<32x128xf32>, vector<16x128xf32> -> vector<16x128xf32>
    %148 = vector.extract_strided_slice %35 {offsets = [6, 0], sizes = [1, 128], strides = [1, 1]} : vector<16x128xf32> to vector<1x128xf32>
    %149 = vector.broadcast %148 : vector<1x128xf32> to vector<16x128xf32>
    %150 = arith.addf %147, %149 : vector<16x128xf32>
    %cst_44 = arith.constant 5.000000e-01 : f32
    %151 = vector.broadcast %cst_44 : f32 to vector<16x128xf32>
    %152 = arith.mulf %151, %150 : vector<16x128xf32>
    %cst_45 = arith.constant 0.707106769 : f32
    %153 = vector.broadcast %cst_45 : f32 to vector<16x128xf32>
    %154 = arith.mulf %150, %153 : vector<16x128xf32>
    %cst_46 = arith.constant 0.000000e+00 : f32
    %155 = vector.broadcast %cst_46 : f32 to vector<16x128xf32>
    %156 = arith.cmpf oge, %154, %155 : vector<16x128xf32>
    %cst_47 = arith.constant 1.000000e+00 : f32
    %cst_48 = arith.constant -1.000000e+00 : f32
    %157 = vector.broadcast %cst_47 : f32 to vector<16x128xf32>
    %158 = vector.broadcast %cst_48 : f32 to vector<16x128xf32>
    %159 = arith.select %156, %157, %158 : vector<16x128xi1>, vector<16x128xf32>
    %160 = math.absf %154 : vector<16x128xf32>
    %cst_49 = arith.constant 0.327591091 : f32
    %161 = vector.broadcast %cst_49 : f32 to vector<16x128xf32>
    %162 = arith.mulf %161, %160 : vector<16x128xf32>
    %cst_50 = arith.constant 1.000000e+00 : f32
    %163 = vector.broadcast %cst_50 : f32 to vector<16x128xf32>
    %164 = arith.addf %163, %162 : vector<16x128xf32>
    %cst_51 = arith.constant 1.000000e+00 : f32
    %165 = vector.broadcast %cst_51 : f32 to vector<16x128xf32>
    %166 = arith.divf %165, %164 : vector<16x128xf32>
    %cst_52 = arith.constant 1.06140542 : f32
    %167 = vector.broadcast %cst_52 : f32 to vector<16x128xf32>
    %168 = arith.mulf %167, %166 : vector<16x128xf32>
    %cst_53 = arith.constant -1.45315206 : f32
    %169 = vector.broadcast %cst_53 : f32 to vector<16x128xf32>
    %170 = arith.addf %168, %169 : vector<16x128xf32>
    %171 = arith.mulf %170, %166 : vector<16x128xf32>
    %cst_54 = arith.constant 1.42141378 : f32
    %172 = vector.broadcast %cst_54 : f32 to vector<16x128xf32>
    %173 = arith.addf %171, %172 : vector<16x128xf32>
    %174 = arith.mulf %173, %166 : vector<16x128xf32>
    %cst_55 = arith.constant -0.284496725 : f32
    %175 = vector.broadcast %cst_55 : f32 to vector<16x128xf32>
    %176 = arith.addf %174, %175 : vector<16x128xf32>
    %177 = arith.mulf %176, %166 : vector<16x128xf32>
    %cst_56 = arith.constant 0.254829586 : f32
    %178 = vector.broadcast %cst_56 : f32 to vector<16x128xf32>
    %179 = arith.addf %177, %178 : vector<16x128xf32>
    %180 = arith.mulf %179, %166 : vector<16x128xf32>
    %cst_57 = arith.constant 0.000000e+00 : f32
    %181 = vector.broadcast %cst_57 : f32 to vector<16x128xf32>
    %182 = arith.subf %181, %160 : vector<16x128xf32>
    %183 = arith.mulf %182, %160 : vector<16x128xf32>
    %184 = math.exp %183 : vector<16x128xf32>
    %185 = arith.mulf %180, %184 : vector<16x128xf32>
    %cst_58 = arith.constant 1.000000e+00 : f32
    %186 = vector.broadcast %cst_58 : f32 to vector<16x128xf32>
    %187 = arith.subf %186, %185 : vector<16x128xf32>
    %188 = arith.mulf %159, %187 : vector<16x128xf32>
    %cst_59 = arith.constant 1.000000e+00 : f32
    %189 = vector.broadcast %cst_59 : f32 to vector<16x128xf32>
    %190 = arith.addf %189, %188 : vector<16x128xf32>
    %191 = arith.mulf %152, %190 : vector<16x128xf32>
    %c0_60 = arith.constant 0 : index
    %c0_61 = arith.constant 0 : index
    %c0_62 = arith.constant 0 : index
    %192 = vector.load %arg7[%c0_60, %c0_61, %c0_62] : memref<2x128x32xf32, #tpu.memory_space<vmem>>, vector<1x128x32xf32>
    %193 = vector.shape_cast %192 : vector<1x128x32xf32> to vector<128x32xf32>
    %cst_63 = arith.constant dense<0.000000e+00> : vector<16x32xf32>
    %194 = tpu.matmul %191, %193, %cst_63 {dimension_numbers = #tpu.dot_dimension_numbers<[1], [0], [0], [1], [0, 0, 1, 1], [], []>} : vector<16x128xf32>, vector<128x32xf32>, vector<16x32xf32> -> vector<16x32xf32>
    %195 = vector.extract_strided_slice %35 {offsets = [5, 0], sizes = [1, 32], strides = [1, 1]} : vector<16x128xf32> to vector<1x32xf32>
    %196 = vector.broadcast %195 : vector<1x32xf32> to vector<16x32xf32>
    %197 = arith.addf %194, %196 : vector<16x32xf32>
    %198 = arith.addf %197, %122 : vector<16x32xf32>
    %c1 = arith.constant 1 : index
    %c0_64 = arith.constant 0 : index
    %c0_65 = arith.constant 0 : index
    %199 = vector.load %arg3[%c1, %c0_64, %c0_65] : memref<2x16x128xf32, #tpu.memory_space<vmem>>, vector<1x16x128xf32>
    %200 = vector.shape_cast %199 : vector<1x16x128xf32> to vector<16x128xf32>
    %201 = vector.extract_strided_slice %200 {offsets = [0, 0], sizes = [1, 32], strides = [1, 1]} : vector<16x128xf32> to vector<1x32xf32>
    %202 = vector.extract_strided_slice %200 {offsets = [1, 0], sizes = [1, 32], strides = [1, 1]} : vector<16x128xf32> to vector<1x32xf32>
    %cst_66 = arith.constant dense<0.000000e+00> : vector<16xf32>
    %203 = vector.multi_reduction <add>, %198, %cst_66 [1] : vector<16x32xf32> to vector<16xf32>
    %204 = vector.shape_cast %203 : vector<16xf32> to vector<16x1xf32>
    %cst_67 = arith.constant 3.200000e+01 : f32
    %205 = vector.broadcast %cst_67 : f32 to vector<16x1xf32>
    %206 = arith.divf %204, %205 : vector<16x1xf32>
    %207 = vector.broadcast %206 : vector<16x1xf32> to vector<16x32xf32>
    %208 = arith.subf %198, %207 : vector<16x32xf32>
    %209 = arith.mulf %208, %208 : vector<16x32xf32>
    %cst_68 = arith.constant dense<0.000000e+00> : vector<16xf32>
    %210 = vector.multi_reduction <add>, %209, %cst_68 [1] : vector<16x32xf32> to vector<16xf32>
    %211 = vector.shape_cast %210 : vector<16xf32> to vector<16x1xf32>
    %cst_69 = arith.constant 3.200000e+01 : f32
    %212 = vector.broadcast %cst_69 : f32 to vector<16x1xf32>
    %213 = arith.divf %211, %212 : vector<16x1xf32>
    %cst_70 = arith.constant 9.99999996E-13 : f32
    %214 = vector.broadcast %cst_70 : f32 to vector<16x1xf32>
    %215 = arith.addf %213, %214 : vector<16x1xf32>
    %216 = math.rsqrt %215 : vector<16x1xf32>
    %217 = vector.broadcast %216 : vector<16x1xf32> to vector<16x32xf32>
    %218 = arith.mulf %208, %217 : vector<16x32xf32>
    %219 = vector.broadcast %201 : vector<1x32xf32> to vector<16x32xf32>
    %220 = arith.mulf %218, %219 : vector<16x32xf32>
    %221 = vector.broadcast %202 : vector<1x32xf32> to vector<16x32xf32>
    %222 = arith.addf %220, %221 : vector<16x32xf32>
    %c1_71 = arith.constant 1 : index
    %c0_72 = arith.constant 0 : index
    %c0_73 = arith.constant 0 : index
    %223 = vector.load %arg4[%c1_71, %c0_72, %c0_73] : memref<2x32x768xf32, #tpu.memory_space<vmem>>, vector<1x32x768xf32>
    %224 = vector.shape_cast %223 : vector<1x32x768xf32> to vector<32x768xf32>
    %cst_74 = arith.constant dense<0.000000e+00> : vector<16x768xf32>
    %225 = tpu.matmul %222, %224, %cst_74 {dimension_numbers = #tpu.dot_dimension_numbers<[1], [0], [0], [1], [0, 0, 1, 1], [], []>} : vector<16x32xf32>, vector<32x768xf32>, vector<16x768xf32> -> vector<16x768xf32>
    %226 = vector.extract_strided_slice %225 {offsets = [0, 0], sizes = [16, 128], strides = [1, 1]} : vector<16x768xf32> to vector<16x128xf32>
    %227 = vector.extract_strided_slice %200 {offsets = [8, 0], sizes = [1, 128], strides = [1, 1]} : vector<16x128xf32> to vector<1x128xf32>
    %228 = vector.broadcast %227 : vector<1x128xf32> to vector<16x128xf32>
    %229 = arith.addf %226, %228 : vector<16x128xf32>
    %230 = vector.extract_strided_slice %225 {offsets = [0, 256], sizes = [16, 128], strides = [1, 1]} : vector<16x768xf32> to vector<16x128xf32>
    %231 = vector.extract_strided_slice %200 {offsets = [10, 0], sizes = [1, 128], strides = [1, 1]} : vector<16x128xf32> to vector<1x128xf32>
    %232 = vector.broadcast %231 : vector<1x128xf32> to vector<16x128xf32>
    %233 = arith.addf %230, %232 : vector<16x128xf32>
    %234 = vector.extract_strided_slice %225 {offsets = [0, 512], sizes = [16, 128], strides = [1, 1]} : vector<16x768xf32> to vector<16x128xf32>
    %235 = vector.extract_strided_slice %200 {offsets = [12, 0], sizes = [1, 128], strides = [1, 1]} : vector<16x128xf32> to vector<1x128xf32>
    %236 = vector.broadcast %235 : vector<1x128xf32> to vector<16x128xf32>
    %237 = arith.addf %234, %236 : vector<16x128xf32>
    %cst_75 = arith.constant dense<0.000000e+00> : vector<16x16xf32>
    %238 = tpu.matmul %229, %233, %cst_75 {dimension_numbers = #tpu.dot_dimension_numbers<[1], [1], [0], [0], [0, 0, 1, 0], [], []>} : vector<16x128xf32>, vector<16x128xf32>, vector<16x16xf32> -> vector<16x16xf32>
    %cst_76 = arith.constant 2.500000e-01 : f32
    %239 = vector.broadcast %cst_76 : f32 to vector<16x16xf32>
    %240 = arith.mulf %238, %239 : vector<16x16xf32>
    %241 = arith.addf %240, %33 : vector<16x16xf32>
    %cst_77 = arith.constant dense<0xFF800000> : vector<16xf32>
    %242 = vector.multi_reduction <maximumf>, %241, %cst_77 [1] : vector<16x16xf32> to vector<16xf32>
    %243 = vector.shape_cast %242 : vector<16xf32> to vector<16x1xf32>
    %244 = vector.broadcast %243 : vector<16x1xf32> to vector<16x16xf32>
    %245 = arith.subf %241, %244 : vector<16x16xf32>
    %246 = math.exp %245 : vector<16x16xf32>
    %cst_78 = arith.constant dense<0.000000e+00> : vector<16xf32>
    %247 = vector.multi_reduction <add>, %246, %cst_78 [1] : vector<16x16xf32> to vector<16xf32>
    %248 = vector.shape_cast %247 : vector<16xf32> to vector<16x1xf32>
    %249 = tpu.reciprocal %248 : vector<16x1xf32> -> vector<16x1xf32>
    %250 = vector.broadcast %249 : vector<16x1xf32> to vector<16x16xf32>
    %251 = arith.mulf %246, %250 : vector<16x16xf32>
    %cst_79 = arith.constant dense<0.000000e+00> : vector<16x128xf32>
    %252 = tpu.matmul %251, %237, %cst_79 {dimension_numbers = #tpu.dot_dimension_numbers<[1], [0], [0], [1], [0, 0, 1, 1], [], []>} : vector<16x16xf32>, vector<16x128xf32>, vector<16x128xf32> -> vector<16x128xf32>
    %253 = vector.extract_strided_slice %225 {offsets = [0, 128], sizes = [16, 128], strides = [1, 1]} : vector<16x768xf32> to vector<16x128xf32>
    %254 = vector.extract_strided_slice %200 {offsets = [9, 0], sizes = [1, 128], strides = [1, 1]} : vector<16x128xf32> to vector<1x128xf32>
    %255 = vector.broadcast %254 : vector<1x128xf32> to vector<16x128xf32>
    %256 = arith.addf %253, %255 : vector<16x128xf32>
    %257 = vector.extract_strided_slice %225 {offsets = [0, 384], sizes = [16, 128], strides = [1, 1]} : vector<16x768xf32> to vector<16x128xf32>
    %258 = vector.extract_strided_slice %200 {offsets = [11, 0], sizes = [1, 128], strides = [1, 1]} : vector<16x128xf32> to vector<1x128xf32>
    %259 = vector.broadcast %258 : vector<1x128xf32> to vector<16x128xf32>
    %260 = arith.addf %257, %259 : vector<16x128xf32>
    %261 = vector.extract_strided_slice %225 {offsets = [0, 640], sizes = [16, 128], strides = [1, 1]} : vector<16x768xf32> to vector<16x128xf32>
    %262 = vector.extract_strided_slice %200 {offsets = [13, 0], sizes = [1, 128], strides = [1, 1]} : vector<16x128xf32> to vector<1x128xf32>
    %263 = vector.broadcast %262 : vector<1x128xf32> to vector<16x128xf32>
    %264 = arith.addf %261, %263 : vector<16x128xf32>
    %cst_80 = arith.constant dense<0.000000e+00> : vector<16x16xf32>
    %265 = tpu.matmul %256, %260, %cst_80 {dimension_numbers = #tpu.dot_dimension_numbers<[1], [1], [0], [0], [0, 0, 1, 0], [], []>} : vector<16x128xf32>, vector<16x128xf32>, vector<16x16xf32> -> vector<16x16xf32>
    %cst_81 = arith.constant 2.500000e-01 : f32
    %266 = vector.broadcast %cst_81 : f32 to vector<16x16xf32>
    %267 = arith.mulf %265, %266 : vector<16x16xf32>
    %268 = arith.addf %267, %33 : vector<16x16xf32>
    %cst_82 = arith.constant dense<0xFF800000> : vector<16xf32>
    %269 = vector.multi_reduction <maximumf>, %268, %cst_82 [1] : vector<16x16xf32> to vector<16xf32>
    %270 = vector.shape_cast %269 : vector<16xf32> to vector<16x1xf32>
    %271 = vector.broadcast %270 : vector<16x1xf32> to vector<16x16xf32>
    %272 = arith.subf %268, %271 : vector<16x16xf32>
    %273 = math.exp %272 : vector<16x16xf32>
    %cst_83 = arith.constant dense<0.000000e+00> : vector<16xf32>
    %274 = vector.multi_reduction <add>, %273, %cst_83 [1] : vector<16x16xf32> to vector<16xf32>
    %275 = vector.shape_cast %274 : vector<16xf32> to vector<16x1xf32>
    %276 = tpu.reciprocal %275 : vector<16x1xf32> -> vector<16x1xf32>
    %277 = vector.broadcast %276 : vector<16x1xf32> to vector<16x16xf32>
    %278 = arith.mulf %273, %277 : vector<16x16xf32>
    %cst_84 = arith.constant dense<0.000000e+00> : vector<16x128xf32>
    %279 = tpu.matmul %278, %264, %cst_84 {dimension_numbers = #tpu.dot_dimension_numbers<[1], [0], [0], [1], [0, 0, 1, 1], [], []>} : vector<16x16xf32>, vector<16x128xf32>, vector<16x128xf32> -> vector<16x128xf32>
    %280 = tpu.concatenate %252, %279 in 1 : vector<16x128xf32>, vector<16x128xf32> -> vector<16x256xf32>
    %c1_85 = arith.constant 1 : index
    %c0_86 = arith.constant 0 : index
    %c0_87 = arith.constant 0 : index
    %281 = vector.load %arg5[%c1_85, %c0_86, %c0_87] : memref<2x256x32xf32, #tpu.memory_space<vmem>>, vector<1x256x32xf32>
    %282 = vector.shape_cast %281 : vector<1x256x32xf32> to vector<256x32xf32>
    %cst_88 = arith.constant dense<0.000000e+00> : vector<16x32xf32>
    %283 = tpu.matmul %280, %282, %cst_88 {dimension_numbers = #tpu.dot_dimension_numbers<[1], [0], [0], [1], [0, 0, 1, 1], [], []>} : vector<16x256xf32>, vector<256x32xf32>, vector<16x32xf32> -> vector<16x32xf32>
    %284 = vector.extract_strided_slice %200 {offsets = [4, 0], sizes = [1, 32], strides = [1, 1]} : vector<16x128xf32> to vector<1x32xf32>
    %285 = vector.broadcast %284 : vector<1x32xf32> to vector<16x32xf32>
    %286 = arith.addf %283, %285 : vector<16x32xf32>
    %287 = arith.addf %286, %198 : vector<16x32xf32>
    %288 = vector.extract_strided_slice %200 {offsets = [2, 0], sizes = [1, 32], strides = [1, 1]} : vector<16x128xf32> to vector<1x32xf32>
    %289 = vector.extract_strided_slice %200 {offsets = [3, 0], sizes = [1, 32], strides = [1, 1]} : vector<16x128xf32> to vector<1x32xf32>
    %cst_89 = arith.constant dense<0.000000e+00> : vector<16xf32>
    %290 = vector.multi_reduction <add>, %287, %cst_89 [1] : vector<16x32xf32> to vector<16xf32>
    %291 = vector.shape_cast %290 : vector<16xf32> to vector<16x1xf32>
    %cst_90 = arith.constant 3.200000e+01 : f32
    %292 = vector.broadcast %cst_90 : f32 to vector<16x1xf32>
    %293 = arith.divf %291, %292 : vector<16x1xf32>
    %294 = vector.broadcast %293 : vector<16x1xf32> to vector<16x32xf32>
    %295 = arith.subf %287, %294 : vector<16x32xf32>
    %296 = arith.mulf %295, %295 : vector<16x32xf32>
    %cst_91 = arith.constant dense<0.000000e+00> : vector<16xf32>
    %297 = vector.multi_reduction <add>, %296, %cst_91 [1] : vector<16x32xf32> to vector<16xf32>
    %298 = vector.shape_cast %297 : vector<16xf32> to vector<16x1xf32>
    %cst_92 = arith.constant 3.200000e+01 : f32
    %299 = vector.broadcast %cst_92 : f32 to vector<16x1xf32>
    %300 = arith.divf %298, %299 : vector<16x1xf32>
    %cst_93 = arith.constant 9.99999996E-13 : f32
    %301 = vector.broadcast %cst_93 : f32 to vector<16x1xf32>
    %302 = arith.addf %300, %301 : vector<16x1xf32>
    %303 = math.rsqrt %302 : vector<16x1xf32>
    %304 = vector.broadcast %303 : vector<16x1xf32> to vector<16x32xf32>
    %305 = arith.mulf %295, %304 : vector<16x32xf32>
    %306 = vector.broadcast %288 : vector<1x32xf32> to vector<16x32xf32>
    %307 = arith.mulf %305, %306 : vector<16x32xf32>
    %308 = vector.broadcast %289 : vector<1x32xf32> to vector<16x32xf32>
    %309 = arith.addf %307, %308 : vector<16x32xf32>
    %c1_94 = arith.constant 1 : index
    %c0_95 = arith.constant 0 : index
    %c0_96 = arith.constant 0 : index
    %310 = vector.load %arg6[%c1_94, %c0_95, %c0_96] : memref<2x32x128xf32, #tpu.memory_space<vmem>>, vector<1x32x128xf32>
    %311 = vector.shape_cast %310 : vector<1x32x128xf32> to vector<32x128xf32>
    %cst_97 = arith.constant dense<0.000000e+00> : vector<16x128xf32>
    %312 = tpu.matmul %309, %311, %cst_97 {dimension_numbers = #tpu.dot_dimension_numbers<[1], [0], [0], [1], [0, 0, 1, 1], [], []>} : vector<16x32xf32>, vector<32x128xf32>, vector<16x128xf32> -> vector<16x128xf32>
    %313 = vector.extract_strided_slice %200 {offsets = [6, 0], sizes = [1, 128], strides = [1, 1]} : vector<16x128xf32> to vector<1x128xf32>
    %314 = vector.broadcast %313 : vector<1x128xf32> to vector<16x128xf32>
    %315 = arith.addf %312, %314 : vector<16x128xf32>
    %cst_98 = arith.constant 5.000000e-01 : f32
    %316 = vector.broadcast %cst_98 : f32 to vector<16x128xf32>
    %317 = arith.mulf %316, %315 : vector<16x128xf32>
    %cst_99 = arith.constant 0.707106769 : f32
    %318 = vector.broadcast %cst_99 : f32 to vector<16x128xf32>
    %319 = arith.mulf %315, %318 : vector<16x128xf32>
    %cst_100 = arith.constant 0.000000e+00 : f32
    %320 = vector.broadcast %cst_100 : f32 to vector<16x128xf32>
    %321 = arith.cmpf oge, %319, %320 : vector<16x128xf32>
    %cst_101 = arith.constant 1.000000e+00 : f32
    %cst_102 = arith.constant -1.000000e+00 : f32
    %322 = vector.broadcast %cst_101 : f32 to vector<16x128xf32>
    %323 = vector.broadcast %cst_102 : f32 to vector<16x128xf32>
    %324 = arith.select %321, %322, %323 : vector<16x128xi1>, vector<16x128xf32>
    %325 = math.absf %319 : vector<16x128xf32>
    %cst_103 = arith.constant 0.327591091 : f32
    %326 = vector.broadcast %cst_103 : f32 to vector<16x128xf32>
    %327 = arith.mulf %326, %325 : vector<16x128xf32>
    %cst_104 = arith.constant 1.000000e+00 : f32
    %328 = vector.broadcast %cst_104 : f32 to vector<16x128xf32>
    %329 = arith.addf %328, %327 : vector<16x128xf32>
    %cst_105 = arith.constant 1.000000e+00 : f32
    %330 = vector.broadcast %cst_105 : f32 to vector<16x128xf32>
    %331 = arith.divf %330, %329 : vector<16x128xf32>
    %cst_106 = arith.constant 1.06140542 : f32
    %332 = vector.broadcast %cst_106 : f32 to vector<16x128xf32>
    %333 = arith.mulf %332, %331 : vector<16x128xf32>
    %cst_107 = arith.constant -1.45315206 : f32
    %334 = vector.broadcast %cst_107 : f32 to vector<16x128xf32>
    %335 = arith.addf %333, %334 : vector<16x128xf32>
    %336 = arith.mulf %335, %331 : vector<16x128xf32>
    %cst_108 = arith.constant 1.42141378 : f32
    %337 = vector.broadcast %cst_108 : f32 to vector<16x128xf32>
    %338 = arith.addf %336, %337 : vector<16x128xf32>
    %339 = arith.mulf %338, %331 : vector<16x128xf32>
    %cst_109 = arith.constant -0.284496725 : f32
    %340 = vector.broadcast %cst_109 : f32 to vector<16x128xf32>
    %341 = arith.addf %339, %340 : vector<16x128xf32>
    %342 = arith.mulf %341, %331 : vector<16x128xf32>
    %cst_110 = arith.constant 0.254829586 : f32
    %343 = vector.broadcast %cst_110 : f32 to vector<16x128xf32>
    %344 = arith.addf %342, %343 : vector<16x128xf32>
    %345 = arith.mulf %344, %331 : vector<16x128xf32>
    %cst_111 = arith.constant 0.000000e+00 : f32
    %346 = vector.broadcast %cst_111 : f32 to vector<16x128xf32>
    %347 = arith.subf %346, %325 : vector<16x128xf32>
    %348 = arith.mulf %347, %325 : vector<16x128xf32>
    %349 = math.exp %348 : vector<16x128xf32>
    %350 = arith.mulf %345, %349 : vector<16x128xf32>
    %cst_112 = arith.constant 1.000000e+00 : f32
    %351 = vector.broadcast %cst_112 : f32 to vector<16x128xf32>
    %352 = arith.subf %351, %350 : vector<16x128xf32>
    %353 = arith.mulf %324, %352 : vector<16x128xf32>
    %cst_113 = arith.constant 1.000000e+00 : f32
    %354 = vector.broadcast %cst_113 : f32 to vector<16x128xf32>
    %355 = arith.addf %354, %353 : vector<16x128xf32>
    %356 = arith.mulf %317, %355 : vector<16x128xf32>
    %c1_114 = arith.constant 1 : index
    %c0_115 = arith.constant 0 : index
    %c0_116 = arith.constant 0 : index
    %357 = vector.load %arg7[%c1_114, %c0_115, %c0_116] : memref<2x128x32xf32, #tpu.memory_space<vmem>>, vector<1x128x32xf32>
    %358 = vector.shape_cast %357 : vector<1x128x32xf32> to vector<128x32xf32>
    %cst_117 = arith.constant dense<0.000000e+00> : vector<16x32xf32>
    %359 = tpu.matmul %356, %358, %cst_117 {dimension_numbers = #tpu.dot_dimension_numbers<[1], [0], [0], [1], [0, 0, 1, 1], [], []>} : vector<16x128xf32>, vector<128x32xf32>, vector<16x32xf32> -> vector<16x32xf32>
    %360 = vector.extract_strided_slice %200 {offsets = [5, 0], sizes = [1, 32], strides = [1, 1]} : vector<16x128xf32> to vector<1x32xf32>
    %361 = vector.broadcast %360 : vector<1x32xf32> to vector<16x32xf32>
    %362 = arith.addf %359, %361 : vector<16x32xf32>
    %363 = arith.addf %362, %287 : vector<16x32xf32>
    %364 = vector.extract_strided_slice %0 {offsets = [7, 0], sizes = [1, 32], strides = [1, 1]} : vector<16x128xf32> to vector<1x32xf32>
    %365 = vector.extract_strided_slice %0 {offsets = [8, 0], sizes = [1, 32], strides = [1, 1]} : vector<16x128xf32> to vector<1x32xf32>
    %cst_118 = arith.constant dense<0.000000e+00> : vector<16xf32>
    %366 = vector.multi_reduction <add>, %363, %cst_118 [1] : vector<16x32xf32> to vector<16xf32>
    %367 = vector.shape_cast %366 : vector<16xf32> to vector<16x1xf32>
    %cst_119 = arith.constant 3.200000e+01 : f32
    %368 = vector.broadcast %cst_119 : f32 to vector<16x1xf32>
    %369 = arith.divf %367, %368 : vector<16x1xf32>
    %370 = vector.broadcast %369 : vector<16x1xf32> to vector<16x32xf32>
    %371 = arith.subf %363, %370 : vector<16x32xf32>
    %372 = arith.mulf %371, %371 : vector<16x32xf32>
    %cst_120 = arith.constant dense<0.000000e+00> : vector<16xf32>
    %373 = vector.multi_reduction <add>, %372, %cst_120 [1] : vector<16x32xf32> to vector<16xf32>
    %374 = vector.shape_cast %373 : vector<16xf32> to vector<16x1xf32>
    %cst_121 = arith.constant 3.200000e+01 : f32
    %375 = vector.broadcast %cst_121 : f32 to vector<16x1xf32>
    %376 = arith.divf %374, %375 : vector<16x1xf32>
    %cst_122 = arith.constant 9.99999996E-13 : f32
    %377 = vector.broadcast %cst_122 : f32 to vector<16x1xf32>
    %378 = arith.addf %376, %377 : vector<16x1xf32>
    %379 = math.rsqrt %378 : vector<16x1xf32>
    %380 = vector.broadcast %379 : vector<16x1xf32> to vector<16x32xf32>
    %381 = arith.mulf %371, %380 : vector<16x32xf32>
    %382 = vector.broadcast %364 : vector<1x32xf32> to vector<16x32xf32>
    %383 = arith.mulf %381, %382 : vector<16x32xf32>
    %384 = vector.broadcast %365 : vector<1x32xf32> to vector<16x32xf32>
    %385 = arith.addf %383, %384 : vector<16x32xf32>
    %386 = vector.extract_strided_slice %385 {offsets = [0, 0], sizes = [1, 32], strides = [1, 1]} : vector<16x32xf32> to vector<1x32xf32>
    %387 = vector.extract_strided_slice %385 {offsets = [8, 0], sizes = [1, 32], strides = [1, 1]} : vector<16x32xf32> to vector<1x32xf32>
    %388 = tpu.concatenate %386, %387 in 0 : vector<1x32xf32>, vector<1x32xf32> -> vector<2x32xf32>
    %c0_123 = arith.constant 0 : index
    %c0_124 = arith.constant 0 : index
    %389 = vector.load %arg8[%c0_123, %c0_124] : memref<32x128xf32, #tpu.memory_space<vmem>>, vector<32x128xf32>
    %cst_125 = arith.constant dense<0.000000e+00> : vector<2x128xf32>
    %390 = tpu.matmul %388, %389, %cst_125 {dimension_numbers = #tpu.dot_dimension_numbers<[1], [0], [0], [1], [0, 0, 1, 1], [], []>} : vector<2x32xf32>, vector<32x128xf32>, vector<2x128xf32> -> vector<2x128xf32>
    %391 = vector.extract_strided_slice %0 {offsets = [9, 0], sizes = [1, 128], strides = [1, 1]} : vector<16x128xf32> to vector<1x128xf32>
    %392 = vector.broadcast %391 : vector<1x128xf32> to vector<2x128xf32>
    %393 = arith.addf %390, %392 : vector<2x128xf32>
    %c0_126 = arith.constant 0 : index
    %c0_127 = arith.constant 0 : index
    %394 = vector.load %arg9[%c0_126, %c0_127] : memref<2x128xf32, #tpu.memory_space<vmem>>, vector<2x128xf32>
    tpu.vector_store %arg9[%c0_126, %c0_127], %393 {strides = array<i32>} : memref<2x128xf32, #tpu.memory_space<vmem>>, vector<2x128xf32>,
    return
  }
}

</mosaic_0001>

<llo_original>
// kernel: vit_forward.1
$region0: #{vit_forward.1}
  #allocation0 [shape = 'u32[]', space=smem, size = 0x4, offset = 0x4, fixed_abs, tag = 'smem constant byte address 0x4 - core index']
  #allocation1 [shape = 'u32[144,128]{1,0:T(1,128)}', space=vmem, size = 0x12000, scoped, tag = 'internal scratch']
  %s0 = inlined_call_operand.vmem [shape: f32[8,256], index: 0, kind: input, shape index: {}]
  %s1 = inlined_call_operand.vmem [shape: f32[256,32], index: 1, kind: input, shape index: {}]
  %s2 = inlined_call_operand.vmem [shape: f32[16,128], index: 2, kind: input, shape index: {}]
  %s3 = inlined_call_operand.vmem [shape: f32[2,16,128], index: 3, kind: input, shape index: {}]
  %s4 = inlined_call_operand.vmem [shape: f32[2,32,768], index: 4, kind: input, shape index: {}]
  %s5 = inlined_call_operand.vmem [shape: f32[2,256,32], index: 5, kind: input, shape index: {}]
  %s6 = inlined_call_operand.vmem [shape: f32[2,32,128], index: 6, kind: input, shape index: {}]
  %s7 = inlined_call_operand.vmem [shape: f32[2,128,32], index: 7, kind: input, shape index: {}]
  %s8 = inlined_call_operand.vmem [shape: f32[32,128], index: 8, kind: input, shape index: {}]
  %s9 = inlined_call_operand.hbm [shape: f32[2,128], index: 9, kind: output, shape index: {}]
  %s10 = sld [smem:[#allocation0]]
  $region46: #{vit_forward.1} parent=0
    _
  %s12 = ssub.s32 1, %s10
  %s13 = scalar_select 0, %s12, %s10
  $region1: #{vit_forward.1} parent=0
    #allocation2 [shape = 'u8[1024]{0}', space=vmem, size = 0x400, scoped, tag = 'output window, operand 0, single buffered']
    #allocation3 [shape = 's32[1]{0}', space=sflag, size = 0x4, scoped, tag = 'scoped memory for vit_forward.1']
    %14 = vsyncpa [#allocation3], 0
    // Predicated region
    $region2: #{vit_forward.1} parent=1 // pred_check
      _
    $region3: #{vit_forward.1} parent=1 // pred_check_branch
      %16 = sbr.rel (0) target = $region5
    $region4: #{vit_forward.1} parent=1 // pred_region
      _
    $region5: #{vit_forward.1} parent=1 // pred_fallthru
      _
    // Predicated region
    $region6: #{vit_forward.1} parent=1 // pred_check
      _
    $region7: #{vit_forward.1} parent=1 // pred_check_branch
      %18 = sbr.rel (0) target = $region9
    $region8: #{vit_forward.1} parent=1 // pred_region
      _
    $region9: #{vit_forward.1} parent=1 // pred_fallthru
      _
    // Predicated region
    $region10: #{vit_forward.1} parent=1 // pred_check
      _
    $region11: #{vit_forward.1} parent=1 // pred_check_branch
      %20 = sbr.rel (0) target = $region13
    $region12: #{vit_forward.1} parent=1 // pred_region
      _
    $region13: #{vit_forward.1} parent=1 // pred_fallthru
      _
    // Predicated region
    $region14: #{vit_forward.1} parent=1 // pred_check
      _
    $region15: #{vit_forward.1} parent=1 // pred_check_branch
      %22 = sbr.rel (0) target = $region17
    $region16: #{vit_forward.1} parent=1 // pred_region
      _
    $region17: #{vit_forward.1} parent=1 // pred_fallthru
      _
    // Predicated region
    $region18: #{vit_forward.1} parent=1 // pred_check
      _
    $region19: #{vit_forward.1} parent=1 // pred_check_branch
      %24 = sbr.rel (0) target = $region21
    $region20: #{vit_forward.1} parent=1 // pred_region
      _
    $region21: #{vit_forward.1} parent=1 // pred_fallthru
      _
    // Predicated region
    $region22: #{vit_forward.1} parent=1 // pred_check
      _
    $region23: #{vit_forward.1} parent=1 // pred_check_branch
      %26 = sbr.rel (0) target = $region25
    $region24: #{vit_forward.1} parent=1 // pred_region
      _
    $region25: #{vit_forward.1} parent=1 // pred_fallthru
      _
    // Predicated region
    $region26: #{vit_forward.1} parent=1 // pred_check
      _
    $region27: #{vit_forward.1} parent=1 // pred_check_branch
      %28 = sbr.rel (0) target = $region29
    $region28: #{vit_forward.1} parent=1 // pred_region
      _
    $region29: #{vit_forward.1} parent=1 // pred_fallthru
      _
    // Predicated region
    $region30: #{vit_forward.1} parent=1 // pred_check
      _
    $region31: #{vit_forward.1} parent=1 // pred_check_branch
      %30 = sbr.rel (0) target = $region33
    $region32: #{vit_forward.1} parent=1 // pred_region
      _
    $region33: #{vit_forward.1} parent=1 // pred_fallthru
      _
    // Predicated region
    $region34: #{vit_forward.1} parent=1 // pred_check
      _
    $region35: #{vit_forward.1} parent=1 // pred_check_branch
      %32 = sbr.rel (0) target = $region37
    $region36: #{vit_forward.1} parent=1 // pred_region
      _
    $region37: #{vit_forward.1} parent=1 // pred_fallthru
      _
    %v33 = vld [vmem:[%s2] sm:$0xff]
    %v34 = vld [vmem:[%s2 + $0x8] sm:$0xff]
    %v35 = vld [vmem:[%s0] sm:$0xff]
    %v36 = vld [vmem:[%s0 + $0x8] sm:$0xff]
    %v37 = vld [vmem:[%s1] sm:$0xff]
    %v38 = vld [vmem:[%s1 + $0x8] sm:$0xff]
    %v39 = vld [vmem:[%s1 + $0x10] sm:$0xff]
    %v40 = vld [vmem:[%s1 + $0x18] sm:$0xff]
    %v41 = vld [vmem:[%s1 + $0x20] sm:$0xff]
    %v42 = vld [vmem:[%s1 + $0x28] sm:$0xff]
    %v43 = vld [vmem:[%s1 + $0x30] sm:$0xff]
    %v44 = vld [vmem:[%s1 + $0x38] sm:$0xff]
    %v45 = vld [vmem:[%s1 + $0x40] sm:$0xff]
    %v46 = vld [vmem:[%s1 + $0x48] sm:$0xff]
    %v47 = vld [vmem:[%s1 + $0x50] sm:$0xff]
    %v48 = vld [vmem:[%s1 + $0x58] sm:$0xff]
    %v49 = vld [vmem:[%s1 + $0x60] sm:$0xff]
    %v50 = vld [vmem:[%s1 + $0x68] sm:$0xff]
    %v51 = vld [vmem:[%s1 + $0x70] sm:$0xff]
    %v52 = vld [vmem:[%s1 + $0x78] sm:$0xff]
    %v53 = vld [vmem:[%s1 + $0x80] sm:$0xff]
    %v54 = vld [vmem:[%s1 + $0x88] sm:$0xff]
    %v55 = vld [vmem:[%s1 + $0x90] sm:$0xff]
    %v56 = vld [vmem:[%s1 + $0x98] sm:$0xff]
    %v57 = vld [vmem:[%s1 + $0xa0] sm:$0xff]
    %v58 = vld [vmem:[%s1 + $0xa8] sm:$0xff]
    %v59 = vld [vmem:[%s1 + $0xb0] sm:$0xff]
    %v60 = vld [vmem:[%s1 + $0xb8] sm:$0xff]
    %v61 = vld [vmem:[%s1 + $0xc0] sm:$0xff]
    %v62 = vld [vmem:[%s1 + $0xc8] sm:$0xff]
    %v63 = vld [vmem:[%s1 + $0xd0] sm:$0xff]
    %v64 = vld [vmem:[%s1 + $0xd8] sm:$0xff]
    %v65 = vld [vmem:[%s1 + $0xe0] sm:$0xff]
    %v66 = vld [vmem:[%s1 + $0xe8] sm:$0xff]
    %v67 = vld [vmem:[%s1 + $0xf0] sm:$0xff]
    %v68 = vld [vmem:[%s1 + $0xf8] sm:$0xff]
    %v69 = vlaneseq
    %v70 = vshrl.u32 %v69, 7
    %v71 = vsub.s32 0, %v70
    %v72 = vrot.slane %v33, %v71
    %73 = vmatprep.subr.mxu0 0.0
    %74 = vmatpush1.msra.mxu0 %v37
    %75 = vmatprep.subr.mxu0 0.0
    %76 = vmatpush1.msra.mxu0 %v38
    %77 = vmatprep.subr.mxu0 0.0
    %78 = vmatpush1.msra.mxu0 %v39
    %79 = vmatprep.subr.mxu0 0.0
    %80 = vmatpush1.msra.mxu0 %v40
    %81 = vmatprep.subr.mxu0 0.0
    %82 = vmatpush1.msra.mxu0 %v41
    %83 = vmatprep.subr.mxu0 0.0
    %84 = vmatpush1.msra.mxu0 %v42
    %85 = vmatprep.subr.mxu0 0.0
    %86 = vmatpush1.msra.mxu0 %v43
    %87 = vmatprep.subr.mxu0 0.0
    %88 = vmatpush1.msra.mxu0 %v44
    %89 = vmatprep.subr.mxu0 0.0
    %90 = vmatpush1.msra.mxu0 %v45
    %91 = vmatprep.subr.mxu0 0.0
    %92 = vmatpush1.msra.mxu0 %v46
    %93 = vmatprep.subr.mxu0 0.0
    %94 = vmatpush1.msra.mxu0 %v47
    %95 = vmatprep.subr.mxu0 0.0
    %96 = vmatpush1.msra.mxu0 %v48
    %97 = vmatprep.subr.mxu0 0.0
    %98 = vmatpush1.msra.mxu0 %v49
    %99 = vmatprep.subr.mxu0 0.0
    %100 = vmatpush1.msra.mxu0 %v50
    %101 = vmatprep.subr.mxu0 0.0
    %102 = vmatpush1.msra.mxu0 %v51
    %103 = vmatprep.subr.mxu0 0.0
    %104 = vmatpush1.msra.mxu0 %v52
    %105 = vmatprep.subr.mxu0 0.0
    %106 = vmatpush1.msra.mxu0 %v53
    %107 = vmatprep.subr.mxu0 0.0
    %108 = vmatpush1.msra.mxu0 %v54
    %109 = vmatprep.subr.mxu0 0.0
    %110 = vmatpush1.msra.mxu0 %v55
    %111 = vmatprep.subr.mxu0 0.0
    %112 = vmatpush1.msra.mxu0 %v56
    %113 = vmatprep.subr.mxu0 0.0
    %114 = vmatpush1.msra.mxu0 %v57
    %115 = vmatprep.subr.mxu0 0.0
    %116 = vmatpush1.msra.mxu0 %v58
    %117 = vmatprep.subr.mxu0 0.0
    %118 = vmatpush1.msra.mxu0 %v59
    %119 = vmatprep.subr.mxu0 0.0
    %120 = vmatpush1.msra.mxu0 %v60
    %121 = vmatprep.subr.mxu0 0.0
    %122 = vmatpush1.msra.mxu0 %v61
    %123 = vmatprep.subr.mxu0 0.0
    %124 = vmatpush1.msra.mxu0 %v62
    %125 = vmatprep.subr.mxu0 0.0
    %126 = vmatpush1.msra.mxu0 %v63
    %127 = vmatprep.subr.mxu0 0.0
    %128 = vmatpush1.msra.mxu0 %v64
    %129 = vmatprep.subr.mxu0 0.0
    %130 = vmatpush1.msra.mxu0 %v65
    %131 = vmatprep.subr.mxu0 0.0
    %132 = vmatpush1.msra.mxu0 %v66
    %133 = vmatprep.subr.mxu0 0.0
    %134 = vmatpush1.msra.mxu0 %v67
    %135 = vmatprep.subr.mxu0 0.0
    %136 = vmatpush1.msra.mxu0 %v68
    %137 = vmatprep.mubr.f32.mxu0 %v36
    %138 = vmatmul.mubr.f32.gmra.mrb[0].mxu0 %v35
    %v139 = vpop.f32.mrb[0].mxu0
    %v140 = vadd.f32 %v72, %v139
    %v141 = vpop.f32.mrb[0].mxu0
    %142 = vdwg.mxu0
    %v144 = vrot.slane %v33, 1
    %v146 = vadd.f32 %v33, %v144
    %v147 = vrot.slane %v33, 3
    %v149 = vadd.f32 %v140, %v147
    %v151 = vrot.slane %v146, 1
    %v154 = vrot.slane %v149, 7
    %vm156 = vcmask 1040384
    %v157 = vsel %vm156, %v151, %v154
    %vm158 = vcmask 1044480
    %v159 = vsel %vm158, %v157, 0.0
    %v160 = vrot.slane %v33, 7
    %v162 = vadd.f32 %v140, %v160
    %v164 = vrot.slane %v162, 3
    %v166 = vsel %vm156, %v151, %v164
    %v167 = vsel %vm158, %v166, 0.0
    %v168 = vlaneseq
    %v169 = vshrl.u32 %v168, 7
    %v170 = vadd.s32 %v169, 8
    %v171 = vlaneseq
    %v172 = vand.u32 %v171, 127
    %v173 = vshra.s32 %v169, 3
    %v174 = vshra.s32 %v170, 3
    %v175 = vshra.s32 %v172, 3
    %vm176 = vcmp.eq.s32.totalorder %v173, %v175
    %vm177 = vcmp.eq.s32.totalorder %v174, %v175
    %v178 = vand.u32 %v172, 7
    %vm179 = vcmp.lt.s32.totalorder %v178, 5
    %vm180 = vmand %vm176, %vm179
    %vm181 = vmand %vm177, %vm179
    %v182 = vsel %vm180, 0.0, -1e+30
    %v183 = vsel %vm181, 0.0, -1e+30
    %v184 = vld [vmem:[%s3] sm:$0xff]
    %v185 = vld [vmem:[%s3 + $0x8] sm:$0xff]
    %vm186 = vcmask 261120
    %v187 = vsel %vm186, %v159, 0.0
    %188 = vadd.xlane.f32.xlu0 %v187
    %v189 = vpop.xlane.xlu0 %188
    %v190 = vsel %vm186, %v167, 0.0
    %191 = vadd.xlane.f32.xlu0 %v190
    %v192 = vpop.xlane.xlu0 %191
    %v193 = vrcp.pop 32.0
    %v194 = vmul.f32 %v189, %v193
    %v195 = vmul.f32 %v192, %v193
    %v196 = vsub.f32 %v159, %v194
    %v197 = vsub.f32 %v167, %v195
    %v198 = vmul.f32 %v196, %v196
    %v199 = vmul.f32 %v197, %v197
    %v200 = vsel %vm186, %v198, 0.0
    %201 = vadd.xlane.f32.xlu0 %v200
    %v202 = vpop.xlane.xlu0 %201
    %v203 = vsel %vm186, %v199, 0.0
    %204 = vadd.xlane.f32.xlu0 %v203
    %v205 = vpop.xlane.xlu0 %204
    %v206 = vmul.f32 %v202, %v193
    %v207 = vmul.f32 %v205, %v193
    %v208 = vadd.f32 %v206, 1e-12
    %v209 = vadd.f32 %v207, 1e-12
    %v210 = vrsqrt.pop %v208
    %v211 = vrsqrt.pop %v209
    %v212 = vmul.f32 %v196, %v210
    %v213 = vmul.f32 %v197, %v211
    %v214 = vlaneseq
    %v215 = vshrl.u32 %v214, 7
    %v216 = vsub.s32 0, %v215
    %v217 = vrot.slane %v184, %v216
    %v218 = vmul.f32 %v212, %v217
    %v219 = vmul.f32 %v213, %v217
    %v220 = vlaneseq
    %v221 = vshrl.u32 %v220, 7
    %v222 = vsub.s32 1, %v221
    %v223 = vrot.slane %v184, %v222
    %v224 = vadd.f32 %v218, %v223
    %v225 = vadd.f32 %v219, %v223
    %v226 = vld [vmem:[%s4] sm:$0xff]
    %v227 = vld [vmem:[%s4 + $0x8] sm:$0xff]
    %v228 = vld [vmem:[%s4 + $0x10] sm:$0xff]
    %v229 = vld [vmem:[%s4 + $0x18] sm:$0xff]
    %v230 = vld [vmem:[%s4 + $0x20] sm:$0xff]
    %v231 = vld [vmem:[%s4 + $0x28] sm:$0xff]
    %v232 = vld [vmem:[%s4 + $0x30] sm:$0xff]
    %v233 = vld [vmem:[%s4 + $0x38] sm:$0xff]
    %v234 = vld [vmem:[%s4 + $0x40] sm:$0xff]
    %v235 = vld [vmem:[%s4 + $0x48] sm:$0xff]
    %v236 = vld [vmem:[%s4 + $0x50] sm:$0xff]
    %v237 = vld [vmem:[%s4 + $0x58] sm:$0xff]
    %v238 = vld [vmem:[%s4 + $0x60] sm:$0xff]
    %v239 = vld [vmem:[%s4 + $0x68] sm:$0xff]
    %v240 = vld [vmem:[%s4 + $0x70] sm:$0xff]
    %v241 = vld [vmem:[%s4 + $0x78] sm:$0xff]
    %v242 = vld [vmem:[%s4 + $0x80] sm:$0xff]
    %v243 = vld [vmem:[%s4 + $0x88] sm:$0xff]
    %v244 = vld [vmem:[%s4 + $0x90] sm:$0xff]
    %v245 = vld [vmem:[%s4 + $0x98] sm:$0xff]
    %v246 = vld [vmem:[%s4 + $0xa0] sm:$0xff]
    %v247 = vld [vmem:[%s4 + $0xa8] sm:$0xff]
    %v248 = vld [vmem:[%s4 + $0xb0] sm:$0xff]
    %v249 = vld [vmem:[%s4 + $0xb8] sm:$0xff]
    %v251 = vsel %vm186, %v224, 0
    %v254 = vsel %vm186, %v225, 0
    %256 = vmatprep.subr.mxu0 %v227
    %257 = vmatpush1.msra.mxu0 %v226
    %258 = vmatprep.subr.mxu0 %v233
    %259 = vmatpush1.msra.mxu0 %v232
    %260 = vmatprep.subr.mxu0 %v239
    %261 = vmatpush1.msra.mxu0 %v238
    %262 = vmatprep.subr.mxu0 %v245
    %263 = vmatpush1.msra.mxu0 %v244
    %264 = vmatprep.subr.mxu0 0.0
    %265 = vmatpush1.msra.mxu0 0.0
    %266 = vmatprep.subr.mxu0 0.0
    %267 = vmatpush1.msra.mxu0 0.0
    %268 = vmatprep.subr.mxu0 0.0
    %269 = vmatpush1.msra.mxu0 0.0
    %270 = vmatprep.subr.mxu0 0.0
    %271 = vmatpush1.msra.mxu0 0.0
    %272 = vmatprep.subr.mxu0 0.0
    %273 = vmatpush1.msra.mxu0 0.0
    %274 = vmatprep.subr.mxu0 0.0
    %275 = vmatpush1.msra.mxu0 0.0
    %276 = vmatprep.subr.mxu0 0.0
    %277 = vmatpush1.msra.mxu0 0.0
    %278 = vmatprep.subr.mxu0 0.0
    %279 = vmatpush1.msra.mxu0 0.0
    %280 = vmatprep.subr.mxu0 0.0
    %281 = vmatpush1.msra.mxu0 0.0
    %282 = vmatprep.subr.mxu0 0.0
    %283 = vmatpush1.msra.mxu0 0.0
    %284 = vmatprep.subr.mxu0 0.0
    %285 = vmatpush1.msra.mxu0 0.0
    %286 = vmatprep.subr.mxu0 0.0
    %287 = vmatpush1.msra.mxu0 0.0
    %288 = vmatprep.subr.mxu0 0.0
    %289 = vmatpush1.msra.mxu0 0.0
    %290 = vmatprep.subr.mxu0 0.0
    %291 = vmatpush1.msra.mxu0 0.0
    %292 = vmatprep.subr.mxu0 0.0
    %293 = vmatpush1.msra.mxu0 0.0
    %294 = vmatprep.subr.mxu0 0.0
    %295 = vmatpush1.msra.mxu0 0.0
    %296 = vmatprep.subr.mxu0 0.0
    %297 = vmatpush1.msra.mxu0 0.0
    %298 = vmatprep.subr.mxu0 0.0
    %299 = vmatpush1.msra.mxu0 0.0
    %300 = vmatprep.subr.mxu0 0.0
    %301 = vmatpush1.msra.mxu0 0.0
    %302 = vmatprep.subr.mxu0 0.0
    %303 = vmatpush1.msra.mxu0 0.0
    %304 = vmatprep.subr.mxu0 0.0
    %305 = vmatpush1.msra.mxu0 0.0
    %306 = vmatprep.subr.mxu0 0.0
    %307 = vmatpush1.msra.mxu0 0.0
    %308 = vmatprep.subr.mxu0 0.0
    %309 = vmatpush1.msra.mxu0 0.0
    %310 = vmatprep.subr.mxu0 0.0
    %311 = vmatpush1.msra.mxu0 0.0
    %312 = vmatprep.subr.mxu0 0.0
    %313 = vmatpush1.msra.mxu0 0.0
    %314 = vmatprep.subr.mxu0 0.0
    %315 = vmatpush1.msra.mxu0 0.0
    %316 = vmatprep.subr.mxu0 0.0
    %317 = vmatpush1.msra.mxu0 0.0
    %318 = vmatprep.subr.mxu0 0.0
    %319 = vmatpush1.msra.mxu0 0.0
    %320 = vmatprep.mubr.f32.mxu0 0.0
    %321 = vmatmul.mubr.f32.gmra.mrb[0].mxu0 %v251
    %v322 = vpop.f32.mrb[0].mxu0
    %v323 = vadd.f32 0.0, %v322
    %v324 = vpop.f32.mrb[0].mxu0
    %v325 = vadd.f32 0.0, %v324
    %326 = vmatprep.mubr.f32.mxu0 0.0
    %327 = vmatmul.mubr.f32.gmra.mrb[0].mxu0 %v254
    %v328 = vpop.f32.mrb[0].mxu0
    %v329 = vadd.f32 0.0, %v328
    %v330 = vpop.f32.mrb[0].mxu0
    %v331 = vadd.f32 0.0, %v330
    %332 = vdwg.mxu0
    %333 = vmatprep.subr.mxu0 %v229
    %334 = vmatpush1.msra.mxu0 %v228
    %335 = vmatprep.subr.mxu0 %v235
    %336 = vmatpush1.msra.mxu0 %v234
    %337 = vmatprep.subr.mxu0 %v241
    %338 = vmatpush1.msra.mxu0 %v240
    %339 = vmatprep.subr.mxu0 %v247
    %340 = vmatpush1.msra.mxu0 %v246
    %341 = vmatprep.subr.mxu0 0.0
    %342 = vmatpush1.msra.mxu0 0.0
    %343 = vmatprep.subr.mxu0 0.0
    %344 = vmatpush1.msra.mxu0 0.0
    %345 = vmatprep.subr.mxu0 0.0
    %346 = vmatpush1.msra.mxu0 0.0
    %347 = vmatprep.subr.mxu0 0.0
    %348 = vmatpush1.msra.mxu0 0.0
    %349 = vmatprep.subr.mxu0 0.0
    %350 = vmatpush1.msra.mxu0 0.0
    %351 = vmatprep.subr.mxu0 0.0
    %352 = vmatpush1.msra.mxu0 0.0
    %353 = vmatprep.subr.mxu0 0.0
    %354 = vmatpush1.msra.mxu0 0.0
    %355 = vmatprep.subr.mxu0 0.0
    %356 = vmatpush1.msra.mxu0 0.0
    %357 = vmatprep.subr.mxu0 0.0
    %358 = vmatpush1.msra.mxu0 0.0
    %359 = vmatprep.subr.mxu0 0.0
    %360 = vmatpush1.msra.mxu0 0.0
    %361 = vmatprep.subr.mxu0 0.0
    %362 = vmatpush1.msra.mxu0 0.0
    %363 = vmatprep.subr.mxu0 0.0
    %364 = vmatpush1.msra.mxu0 0.0
    %365 = vmatprep.subr.mxu0 0.0
    %366 = vmatpush1.msra.mxu0 0.0
    %367 = vmatprep.subr.mxu0 0.0
    %368 = vmatpush1.msra.mxu0 0.0
    %369 = vmatprep.subr.mxu0 0.0
    %370 = vmatpush1.msra.mxu0 0.0
    %371 = vmatprep.subr.mxu0 0.0
    %372 = vmatpush1.msra.mxu0 0.0
    %373 = vmatprep.subr.mxu0 0.0
    %374 = vmatpush1.msra.mxu0 0.0
    %375 = vmatprep.subr.mxu0 0.0
    %376 = vmatpush1.msra.mxu0 0.0
    %377 = vmatprep.subr.mxu0 0.0
    %378 = vmatpush1.msra.mxu0 0.0
    %379 = vmatprep.subr.mxu0 0.0
    %380 = vmatpush1.msra.mxu0 0.0
    %381 = vmatprep.subr.mxu0 0.0
    %382 = vmatpush1.msra.mxu0 0.0
    %383 = vmatprep.subr.mxu0 0.0
    %384 = vmatpush1.msra.mxu0 0.0
    %385 = vmatprep.subr.mxu0 0.0
    %386 = vmatpush1.msra.mxu0 0.0
    %387 = vmatprep.subr.mxu0 0.0
    %388 = vmatpush1.msra.mxu0 0.0
    %389 = vmatprep.subr.mxu0 0.0
    %390 = vmatpush1.msra.mxu0 0.0
    %391 = vmatprep.subr.mxu0 0.0
    %392 = vmatpush1.msra.mxu0 0.0
    %393 = vmatprep.subr.mxu0 0.0
    %394 = vmatpush1.msra.mxu0 0.0
    %395 = vmatprep.subr.mxu0 0.0
    %396 = vmatpush1.msra.mxu0 0.0
    %397 = vmatprep.mubr.f32.mxu0 0.0
    %398 = vmatmul.mubr.f32.gmra.mrb[0].mxu0 %v251
    %v399 = vpop.f32.mrb[0].mxu0
    %v400 = vadd.f32 0.0, %v399
    %v401 = vpop.f32.mrb[0].mxu0
    %v402 = vadd.f32 0.0, %v401
    %403 = vmatprep.mubr.f32.mxu0 0.0
    %404 = vmatmul.mubr.f32.gmra.mrb[0].mxu0 %v254
    %v405 = vpop.f32.mrb[0].mxu0
    %v406 = vadd.f32 0.0, %v405
    %v407 = vpop.f32.mrb[0].mxu0
    %v408 = vadd.f32 0.0, %v407
    %409 = vdwg.mxu0
    %410 = vmatprep.subr.mxu0 %v231
    %411 = vmatpush1.msra.mxu0 %v230
    %412 = vmatprep.subr.mxu0 %v237
    %413 = vmatpush1.msra.mxu0 %v236
    %414 = vmatprep.subr.mxu0 %v243
    %415 = vmatpush1.msra.mxu0 %v242
    %416 = vmatprep.subr.mxu0 %v249
    %417 = vmatpush1.msra.mxu0 %v248
    %418 = vmatprep.subr.mxu0 0.0
    %419 = vmatpush1.msra.mxu0 0.0
    %420 = vmatprep.subr.mxu0 0.0
    %421 = vmatpush1.msra.mxu0 0.0
    %422 = vmatprep.subr.mxu0 0.0
    %423 = vmatpush1.msra.mxu0 0.0
    %424 = vmatprep.subr.mxu0 0.0
    %425 = vmatpush1.msra.mxu0 0.0
    %426 = vmatprep.subr.mxu0 0.0
    %427 = vmatpush1.msra.mxu0 0.0
    %428 = vmatprep.subr.mxu0 0.0
    %429 = vmatpush1.msra.mxu0 0.0
    %430 = vmatprep.subr.mxu0 0.0
    %431 = vmatpush1.msra.mxu0 0.0
    %432 = vmatprep.subr.mxu0 0.0
    %433 = vmatpush1.msra.mxu0 0.0
    %434 = vmatprep.subr.mxu0 0.0
    %435 = vmatpush1.msra.mxu0 0.0
    %436 = vmatprep.subr.mxu0 0.0
    %437 = vmatpush1.msra.mxu0 0.0
    %438 = vmatprep.subr.mxu0 0.0
    %439 = vmatpush1.msra.mxu0 0.0
    %440 = vmatprep.subr.mxu0 0.0
    %441 = vmatpush1.msra.mxu0 0.0
    %442 = vmatprep.subr.mxu0 0.0
    %443 = vmatpush1.msra.mxu0 0.0
    %444 = vmatprep.subr.mxu0 0.0
    %445 = vmatpush1.msra.mxu0 0.0
    %446 = vmatprep.subr.mxu0 0.0
    %447 = vmatpush1.msra.mxu0 0.0
    %448 = vmatprep.subr.mxu0 0.0
    %449 = vmatpush1.msra.mxu0 0.0
    %450 = vmatprep.subr.mxu0 0.0
    %451 = vmatpush1.msra.mxu0 0.0
    %452 = vmatprep.subr.mxu0 0.0
    %453 = vmatpush1.msra.mxu0 0.0
    %454 = vmatprep.subr.mxu0 0.0
    %455 = vmatpush1.msra.mxu0 0.0
    %456 = vmatprep.subr.mxu0 0.0
    %457 = vmatpush1.msra.mxu0 0.0
    %458 = vmatprep.subr.mxu0 0.0
    %459 = vmatpush1.msra.mxu0 0.0
    %460 = vmatprep.subr.mxu0 0.0
    %461 = vmatpush1.msra.mxu0 0.0
    %462 = vmatprep.subr.mxu0 0.0
    %463 = vmatpush1.msra.mxu0 0.0
    %464 = vmatprep.subr.mxu0 0.0
    %465 = vmatpush1.msra.mxu0 0.0
    %466 = vmatprep.subr.mxu0 0.0
    %467 = vmatpush1.msra.mxu0 0.0
    %468 = vmatprep.subr.mxu0 0.0
    %469 = vmatpush1.msra.mxu0 0.0
    %470 = vmatprep.subr.mxu0 0.0
    %471 = vmatpush1.msra.mxu0 0.0
    %472 = vmatprep.subr.mxu0 0.0
    %473 = vmatpush1.msra.mxu0 0.0
    %474 = vmatprep.mubr.f32.mxu0 0.0
    %475 = vmatmul.mubr.f32.gmra.mrb[0].mxu0 %v251
    %v476 = vpop.f32.mrb[0].mxu0
    %v477 = vadd.f32 0.0, %v476
    %v478 = vpop.f32.mrb[0].mxu0
    %v479 = vadd.f32 0.0, %v478
    %480 = vmatprep.mubr.f32.mxu0 0.0
    %481 = vmatmul.mubr.f32.gmra.mrb[0].mxu0 %v254
    %v482 = vpop.f32.mrb[0].mxu0
    %v483 = vadd.f32 0.0, %v482
    %v484 = vpop.f32.mrb[0].mxu0
    %v485 = vadd.f32 0.0, %v484
    %486 = vdwg.mxu0
    %v487 = vlaneseq
    %v488 = vshrl.u32 %v487, 7
    %v489 = vsub.s32 0, %v488
    %v490 = vrot.slane %v185, %v489
    %v491 = vadd.f32 %v323, %v490
    %v492 = vadd.f32 %v329, %v490
    %v493 = vlaneseq
    %v494 = vshrl.u32 %v493, 7
    %v495 = vsub.s32 2, %v494
    %v496 = vrot.slane %v185, %v495
    %v497 = vadd.f32 %v400, %v496
    %v498 = vadd.f32 %v406, %v496
    %v499 = vlaneseq
    %v500 = vshrl.u32 %v499, 7
    %v501 = vsub.s32 4, %v500
    %v502 = vrot.slane %v185, %v501
    %v503 = vadd.f32 %v477, %v502
    %v504 = vadd.f32 %v483, %v502
    %505 = vmatprep.subr.mxu0 0.0
    %506 = vmatpush1.xpose.msra.mxu0 %v497
    %507 = vmatprep.subr.mxu0 0.0
    %508 = vmatpush1.xpose.msra.mxu0 %v498
    %509 = vmatprep.subr.mxu0 0.0
    %510 = vmatpush1.xpose.msra.mxu0 0.0
    %511 = vmatprep.subr.mxu0 0.0
    %512 = vmatpush1.xpose.msra.mxu0 0.0
    %513 = vmatprep.subr.mxu0 0.0
    %514 = vmatpush1.xpose.msra.mxu0 0.0
    %515 = vmatprep.subr.mxu0 0.0
    %516 = vmatpush1.xpose.msra.mxu0 0.0
    %517 = vmatprep.subr.mxu0 0.0
    %518 = vmatpush1.xpose.msra.mxu0 0.0
    %519 = vmatprep.subr.mxu0 0.0
    %520 = vmatpush1.xpose.msra.mxu0 0.0
    %521 = vmatprep.subr.mxu0 0.0
    %522 = vmatpush1.xpose.msra.mxu0 0.0
    %523 = vmatprep.subr.mxu0 0.0
    %524 = vmatpush1.xpose.msra.mxu0 0.0
    %525 = vmatprep.subr.mxu0 0.0
    %526 = vmatpush1.xpose.msra.mxu0 0.0
    %527 = vmatprep.subr.mxu0 0.0
    %528 = vmatpush1.xpose.msra.mxu0 0.0
    %529 = vmatprep.subr.mxu0 0.0
    %530 = vmatpush1.xpose.msra.mxu0 0.0
    %531 = vmatprep.subr.mxu0 0.0
    %532 = vmatpush1.xpose.msra.mxu0 0.0
    %533 = vmatprep.subr.mxu0 0.0
    %534 = vmatpush1.xpose.msra.mxu0 0.0
    %535 = vmatprep.subr.mxu0 0.0
    %536 = vmatpush1.xpose.msra.mxu0 0.0
    %537 = vmatprep.subr.mxu0 0.0
    %538 = vmatpush1.xpose.msra.mxu0 0.0
    %539 = vmatprep.subr.mxu0 0.0
    %540 = vmatpush1.xpose.msra.mxu0 0.0
    %541 = vmatprep.subr.mxu0 0.0
    %542 = vmatpush1.xpose.msra.mxu0 0.0
    %543 = vmatprep.subr.mxu0 0.0
    %544 = vmatpush1.xpose.msra.mxu0 0.0
    %545 = vmatprep.subr.mxu0 0.0
    %546 = vmatpush1.xpose.msra.mxu0 0.0
    %547 = vmatprep.subr.mxu0 0.0
    %548 = vmatpush1.xpose.msra.mxu0 0.0
    %549 = vmatprep.subr.mxu0 0.0
    %550 = vmatpush1.xpose.msra.mxu0 0.0
    %551 = vmatprep.subr.mxu0 0.0
    %552 = vmatpush1.xpose.msra.mxu0 0.0
    %553 = vmatprep.subr.mxu0 0.0
    %554 = vmatpush1.xpose.msra.mxu0 0.0
    %555 = vmatprep.subr.mxu0 0.0
    %556 = vmatpush1.xpose.msra.mxu0 0.0
    %557 = vmatprep.subr.mxu0 0.0
    %558 = vmatpush1.xpose.msra.mxu0 0.0
    %559 = vmatprep.subr.mxu0 0.0
    %560 = vmatpush1.xpose.msra.mxu0 0.0
    %561 = vmatprep.subr.mxu0 0.0
    %562 = vmatpush1.xpose.msra.mxu0 0.0
    %563 = vmatprep.subr.mxu0 0.0
    %564 = vmatpush1.xpose.msra.mxu0 0.0
    %565 = vmatprep.subr.mxu0 0.0
    %566 = vmatpush1.xpose.msra.mxu0 0.0
    %567 = vmatprep.subr.mxu0 0.0
    %568 = vmatpush1.xpose.msra.mxu0 0.0
    %569 = vmatprep.mubr.f32.mxu0 0.0
    %570 = vmatmul.mubr.f32.gmra.mrb[0].mxu0 %v491
    %v571 = vpop.f32.mrb[0].mxu0
    %v572 = vadd.f32 0.0, %v571
    %v573 = vpop.f32.mrb[0].mxu0
    %574 = vmatprep.mubr.f32.mxu0 0.0
    %575 = vmatmul.mubr.f32.gmra.mrb[0].mxu0 %v492
    %v576 = vpop.f32.mrb[0].mxu0
    %v577 = vadd.f32 0.0, %v576
    %v578 = vpop.f32.mrb[0].mxu0
    %579 = vdwg.mxu0
    %v580 = vmul.f32 %v572, 0.25
    %v581 = vmul.f32 %v577, 0.25
    %v582 = vadd.f32 %v580, %v182
    %v583 = vadd.f32 %v581, %v183
    %vm584 = vcmask 130048
    %v585 = vsel %vm584, %v582, -inf
    %586 = vmax.xlane.f32.xlu0 %v585
    %v587 = vpop.xlane.xlu0 %586
    %v588 = vsel %vm584, %v583, -inf
    %589 = vmax.xlane.f32.xlu0 %v588
    %v590 = vpop.xlane.xlu0 %589
    %v591 = vsub.f32 %v582, %v587
    %v592 = vsub.f32 %v583, %v590
    %v593 = vmul.f32 %v591, 1.442695
    %v594 = vpow.pop %v593
    %v595 = vmul.f32 %v592, 1.442695
    %v596 = vpow.pop %v595
    %v597 = vsel %vm584, %v594, 0.0
    %598 = vadd.xlane.f32.xlu0 %v597
    %v599 = vpop.xlane.xlu0 %598
    %v600 = vsel %vm584, %v596, 0.0
    %601 = vadd.xlane.f32.xlu0 %v600
    %v602 = vpop.xlane.xlu0 %601
    %v603 = vrcp.pop %v599
    %v604 = vrcp.pop %v602
    %v605 = vmul.f32 %v594, %v603
    %v606 = vmul.f32 %v596, %v604
    %v608 = vsel %vm584, %v605, 0
    %v611 = vsel %vm584, %v606, 0
    %613 = vmatprep.subr.mxu0 0.0
    %614 = vmatpush1.msra.mxu0 %v503
    %615 = vmatprep.subr.mxu0 0.0
    %616 = vmatpush1.msra.mxu0 %v504
    %617 = vmatprep.subr.mxu0 0.0
    %618 = vmatpush1.msra.mxu0 0.0
    %619 = vmatprep.subr.mxu0 0.0
    %620 = vmatpush1.msra.mxu0 0.0
    %621 = vmatprep.subr.mxu0 0.0
    %622 = vmatpush1.msra.mxu0 0.0
    %623 = vmatprep.subr.mxu0 0.0
    %624 = vmatpush1.msra.mxu0 0.0
    %625 = vmatprep.subr.mxu0 0.0
    %626 = vmatpush1.msra.mxu0 0.0
    %627 = vmatprep.subr.mxu0 0.0
    %628 = vmatpush1.msra.mxu0 0.0
    %629 = vmatprep.subr.mxu0 0.0
    %630 = vmatpush1.msra.mxu0 0.0
    %631 = vmatprep.subr.mxu0 0.0
    %632 = vmatpush1.msra.mxu0 0.0
    %633 = vmatprep.subr.mxu0 0.0
    %634 = vmatpush1.msra.mxu0 0.0
    %635 = vmatprep.subr.mxu0 0.0
    %636 = vmatpush1.msra.mxu0 0.0
    %637 = vmatprep.subr.mxu0 0.0
    %638 = vmatpush1.msra.mxu0 0.0
    %639 = vmatprep.subr.mxu0 0.0
    %640 = vmatpush1.msra.mxu0 0.0
    %641 = vmatprep.subr.mxu0 0.0
    %642 = vmatpush1.msra.mxu0 0.0
    %643 = vmatprep.subr.mxu0 0.0
    %644 = vmatpush1.msra.mxu0 0.0
    %645 = vmatprep.subr.mxu0 0.0
    %646 = vmatpush1.msra.mxu0 0.0
    %647 = vmatprep.subr.mxu0 0.0
    %648 = vmatpush1.msra.mxu0 0.0
    %649 = vmatprep.subr.mxu0 0.0
    %650 = vmatpush1.msra.mxu0 0.0
    %651 = vmatprep.subr.mxu0 0.0
    %652 = vmatpush1.msra.mxu0 0.0
    %653 = vmatprep.subr.mxu0 0.0
    %654 = vmatpush1.msra.mxu0 0.0
    %655 = vmatprep.subr.mxu0 0.0
    %656 = vmatpush1.msra.mxu0 0.0
    %657 = vmatprep.subr.mxu0 0.0
    %658 = vmatpush1.msra.mxu0 0.0
    %659 = vmatprep.subr.mxu0 0.0
    %660 = vmatpush1.msra.mxu0 0.0
    %661 = vmatprep.subr.mxu0 0.0
    %662 = vmatpush1.msra.mxu0 0.0
    %663 = vmatprep.subr.mxu0 0.0
    %664 = vmatpush1.msra.mxu0 0.0
    %665 = vmatprep.subr.mxu0 0.0
    %666 = vmatpush1.msra.mxu0 0.0
    %667 = vmatprep.subr.mxu0 0.0
    %668 = vmatpush1.msra.mxu0 0.0
    %669 = vmatprep.subr.mxu0 0.0
    %670 = vmatpush1.msra.mxu0 0.0
    %671 = vmatprep.subr.mxu0 0.0
    %672 = vmatpush1.msra.mxu0 0.0
    %673 = vmatprep.subr.mxu0 0.0
    %674 = vmatpush1.msra.mxu0 0.0
    %675 = vmatprep.subr.mxu0 0.0
    %676 = vmatpush1.msra.mxu0 0.0
    %677 = vmatprep.mubr.f32.mxu0 0.0
    %678 = vmatmul.mubr.f32.gmra.mrb[0].mxu0 %v608
    %v679 = vpop.f32.mrb[0].mxu0
    %v680 = vadd.f32 0.0, %v679
    %v681 = vpop.f32.mrb[0].mxu0
    %682 = vmatprep.mubr.f32.mxu0 0.0
    %683 = vmatmul.mubr.f32.gmra.mrb[0].mxu0 %v611
    %v684 = vpop.f32.mrb[0].mxu0
    %v685 = vadd.f32 0.0, %v684
    %v686 = vpop.f32.mrb[0].mxu0
    %687 = vdwg.mxu0
    %v688 = vlaneseq
    %v689 = vshrl.u32 %v688, 7
    %v690 = vsub.s32 1, %v689
    %v691 = vrot.slane %v185, %v690
    %v692 = vadd.f32 %v325, %v691
    %v693 = vadd.f32 %v331, %v691
    %v694 = vlaneseq
    %v695 = vshrl.u32 %v694, 7
    %v696 = vsub.s32 3, %v695
    %v697 = vrot.slane %v185, %v696
    %v698 = vadd.f32 %v402, %v697
    %v699 = vadd.f32 %v408, %v697
    %v700 = vlaneseq
    %v701 = vshrl.u32 %v700, 7
    %v702 = vsub.s32 5, %v701
    %v703 = vrot.slane %v185, %v702
    %v704 = vadd.f32 %v479, %v703
    %v705 = vadd.f32 %v485, %v703
    %706 = vmatprep.subr.mxu0 0.0
    %707 = vmatpush1.xpose.msra.mxu0 %v698
    %708 = vmatprep.subr.mxu0 0.0
    %709 = vmatpush1.xpose.msra.mxu0 %v699
    %710 = vmatprep.subr.mxu0 0.0
    %711 = vmatpush1.xpose.msra.mxu0 0.0
    %712 = vmatprep.subr.mxu0 0.0
    %713 = vmatpush1.xpose.msra.mxu0 0.0
    %714 = vmatprep.subr.mxu0 0.0
    %715 = vmatpush1.xpose.msra.mxu0 0.0
    %716 = vmatprep.subr.mxu0 0.0
    %717 = vmatpush1.xpose.msra.mxu0 0.0
    %718 = vmatprep.subr.mxu0 0.0
    %719 = vmatpush1.xpose.msra.mxu0 0.0
    %720 = vmatprep.subr.mxu0 0.0
    %721 = vmatpush1.xpose.msra.mxu0 0.0
    %722 = vmatprep.subr.mxu0 0.0
    %723 = vmatpush1.xpose.msra.mxu0 0.0
    %724 = vmatprep.subr.mxu0 0.0
    %725 = vmatpush1.xpose.msra.mxu0 0.0
    %726 = vmatprep.subr.mxu0 0.0
    %727 = vmatpush1.xpose.msra.mxu0 0.0
    %728 = vmatprep.subr.mxu0 0.0
    %729 = vmatpush1.xpose.msra.mxu0 0.0
    %730 = vmatprep.subr.mxu0 0.0
    %731 = vmatpush1.xpose.msra.mxu0 0.0
    %732 = vmatprep.subr.mxu0 0.0
    %733 = vmatpush1.xpose.msra.mxu0 0.0
    %734 = vmatprep.subr.mxu0 0.0
    %735 = vmatpush1.xpose.msra.mxu0 0.0
    %736 = vmatprep.subr.mxu0 0.0
    %737 = vmatpush1.xpose.msra.mxu0 0.0
    %738 = vmatprep.subr.mxu0 0.0
    %739 = vmatpush1.xpose.msra.mxu0 0.0
    %740 = vmatprep.subr.mxu0 0.0
    %741 = vmatpush1.xpose.msra.mxu0 0.0
    %742 = vmatprep.subr.mxu0 0.0
    %743 = vmatpush1.xpose.msra.mxu0 0.0
    %744 = vmatprep.subr.mxu0 0.0
    %745 = vmatpush1.xpose.msra.mxu0 0.0
    %746 = vmatprep.subr.mxu0 0.0
    %747 = vmatpush1.xpose.msra.mxu0 0.0
    %748 = vmatprep.subr.mxu0 0.0
    %749 = vmatpush1.xpose.msra.mxu0 0.0
    %750 = vmatprep.subr.mxu0 0.0
    %751 = vmatpush1.xpose.msra.mxu0 0.0
    %752 = vmatprep.subr.mxu0 0.0
    %753 = vmatpush1.xpose.msra.mxu0 0.0
    %754 = vmatprep.subr.mxu0 0.0
    %755 = vmatpush1.xpose.msra.mxu0 0.0
    %756 = vmatprep.subr.mxu0 0.0
    %757 = vmatpush1.xpose.msra.mxu0 0.0
    %758 = vmatprep.subr.mxu0 0.0
    %759 = vmatpush1.xpose.msra.mxu0 0.0
    %760 = vmatprep.subr.mxu0 0.0
    %761 = vmatpush1.xpose.msra.mxu0 0.0
    %762 = vmatprep.subr.mxu0 0.0
    %763 = vmatpush1.xpose.msra.mxu0 0.0
    %764 = vmatprep.subr.mxu0 0.0
    %765 = vmatpush1.xpose.msra.mxu0 0.0
    %766 = vmatprep.subr.mxu0 0.0
    %767 = vmatpush1.xpose.msra.mxu0 0.0
    %768 = vmatprep.subr.mxu0 0.0
    %769 = vmatpush1.xpose.msra.mxu0 0.0
    %770 = vmatprep.mubr.f32.mxu0 0.0
    %771 = vmatmul.mubr.f32.gmra.mrb[0].mxu0 %v692
    %v772 = vpop.f32.mrb[0].mxu0
    %v773 = vadd.f32 0.0, %v772
    %v774 = vpop.f32.mrb[0].mxu0
    %775 = vmatprep.mubr.f32.mxu0 0.0
    %776 = vmatmul.mubr.f32.gmra.mrb[0].mxu0 %v693
    %v777 = vpop.f32.mrb[0].mxu0
    %v778 = vadd.f32 0.0, %v777
    %v779 = vpop.f32.mrb[0].mxu0
    %780 = vdwg.mxu0
    %v781 = vmul.f32 %v773, 0.25
    %v782 = vmul.f32 %v778, 0.25
    %v783 = vadd.f32 %v781, %v182
    %v784 = vadd.f32 %v782, %v183
    %v785 = vsel %vm584, %v783, -inf
    %786 = vmax.xlane.f32.xlu0 %v785
    %v787 = vpop.xlane.xlu0 %786
    %v788 = vsel %vm584, %v784, -inf
    %789 = vmax.xlane.f32.xlu0 %v788
    %v790 = vpop.xlane.xlu0 %789
    %v791 = vsub.f32 %v783, %v787
    %v792 = vsub.f32 %v784, %v790
    %v793 = vmul.f32 %v791, 1.442695
    %v794 = vpow.pop %v793
    %v795 = vmul.f32 %v792, 1.442695
    %v796 = vpow.pop %v795
    %v797 = vsel %vm584, %v794, 0.0
    %798 = vadd.xlane.f32.xlu0 %v797
    %v799 = vpop.xlane.xlu0 %798
    %v800 = vsel %vm584, %v796, 0.0
    %801 = vadd.xlane.f32.xlu0 %v800
    %v802 = vpop.xlane.xlu0 %801
    %v803 = vrcp.pop %v799
    %v804 = vrcp.pop %v802
    %v805 = vmul.f32 %v794, %v803
    %v806 = vmul.f32 %v796, %v804
    %v808 = vsel %vm584, %v805, 0
    %v811 = vsel %vm584, %v806, 0
    %813 = vmatprep.subr.mxu0 0.0
    %814 = vmatpush1.msra.mxu0 %v704
    %815 = vmatprep.subr.mxu0 0.0
    %816 = vmatpush1.msra.mxu0 %v705
    %817 = vmatprep.subr.mxu0 0.0
    %818 = vmatpush1.msra.mxu0 0.0
    %819 = vmatprep.subr.mxu0 0.0
    %820 = vmatpush1.msra.mxu0 0.0
    %821 = vmatprep.subr.mxu0 0.0
    %822 = vmatpush1.msra.mxu0 0.0
    %823 = vmatprep.subr.mxu0 0.0
    %824 = vmatpush1.msra.mxu0 0.0
    %825 = vmatprep.subr.mxu0 0.0
    %826 = vmatpush1.msra.mxu0 0.0
    %827 = vmatprep.subr.mxu0 0.0
    %828 = vmatpush1.msra.mxu0 0.0
    %829 = vmatprep.subr.mxu0 0.0
    %830 = vmatpush1.msra.mxu0 0.0
    %831 = vmatprep.subr.mxu0 0.0
    %832 = vmatpush1.msra.mxu0 0.0
    %833 = vmatprep.subr.mxu0 0.0
    %834 = vmatpush1.msra.mxu0 0.0
    %835 = vmatprep.subr.mxu0 0.0
    %836 = vmatpush1.msra.mxu0 0.0
    %837 = vmatprep.subr.mxu0 0.0
    %838 = vmatpush1.msra.mxu0 0.0
    %839 = vmatprep.subr.mxu0 0.0
    %840 = vmatpush1.msra.mxu0 0.0
    %841 = vmatprep.subr.mxu0 0.0
    %842 = vmatpush1.msra.mxu0 0.0
    %843 = vmatprep.subr.mxu0 0.0
    %844 = vmatpush1.msra.mxu0 0.0
    %845 = vmatprep.subr.mxu0 0.0
    %846 = vmatpush1.msra.mxu0 0.0
    %847 = vmatprep.subr.mxu0 0.0
    %848 = vmatpush1.msra.mxu0 0.0
    %849 = vmatprep.subr.mxu0 0.0
    %850 = vmatpush1.msra.mxu0 0.0
    %851 = vmatprep.subr.mxu0 0.0
    %852 = vmatpush1.msra.mxu0 0.0
    %853 = vmatprep.subr.mxu0 0.0
    %854 = vmatpush1.msra.mxu0 0.0
    %855 = vmatprep.subr.mxu0 0.0
    %856 = vmatpush1.msra.mxu0 0.0
    %857 = vmatprep.subr.mxu0 0.0
    %858 = vmatpush1.msra.mxu0 0.0
    %859 = vmatprep.subr.mxu0 0.0
    %860 = vmatpush1.msra.mxu0 0.0
    %861 = vmatprep.subr.mxu0 0.0
    %862 = vmatpush1.msra.mxu0 0.0
    %863 = vmatprep.subr.mxu0 0.0
    %864 = vmatpush1.msra.mxu0 0.0
    %865 = vmatprep.subr.mxu0 0.0
    %866 = vmatpush1.msra.mxu0 0.0
    %867 = vmatprep.subr.mxu0 0.0
    %868 = vmatpush1.msra.mxu0 0.0
    %869 = vmatprep.subr.mxu0 0.0
    %870 = vmatpush1.msra.mxu0 0.0
    %871 = vmatprep.subr.mxu0 0.0
    %872 = vmatpush1.msra.mxu0 0.0
    %873 = vmatprep.subr.mxu0 0.0
    %874 = vmatpush1.msra.mxu0 0.0
    %875 = vmatprep.subr.mxu0 0.0
    %876 = vmatpush1.msra.mxu0 0.0
    %877 = vmatprep.mubr.f32.mxu0 0.0
    %878 = vmatmul.mubr.f32.gmra.mrb[0].mxu0 %v808
    %v879 = vpop.f32.mrb[0].mxu0
    %v880 = vadd.f32 0.0, %v879
    %v881 = vpop.f32.mrb[0].mxu0
    %882 = vmatprep.mubr.f32.mxu0 0.0
    %883 = vmatmul.mubr.f32.gmra.mrb[0].mxu0 %v811
    %v884 = vpop.f32.mrb[0].mxu0
    %v885 = vadd.f32 0.0, %v884
    %v886 = vpop.f32.mrb[0].mxu0
    %887 = vdwg.mxu0
    %v888 = vld [vmem:[%s5] sm:$0xff]
    %v889 = vld [vmem:[%s5 + $0x8] sm:$0xff]
    %v890 = vld [vmem:[%s5 + $0x10] sm:$0xff]
    %v891 = vld [vmem:[%s5 + $0x18] sm:$0xff]
    %v892 = vld [vmem:[%s5 + $0x20] sm:$0xff]
    %v893 = vld [vmem:[%s5 + $0x28] sm:$0xff]
    %v894 = vld [vmem:[%s5 + $0x30] sm:$0xff]
    %v895 = vld [vmem:[%s5 + $0x38] sm:$0xff]
    %v896 = vld [vmem:[%s5 + $0x40] sm:$0xff]
    %v897 = vld [vmem:[%s5 + $0x48] sm:$0xff]
    %v898 = vld [vmem:[%s5 + $0x50] sm:$0xff]
    %v899 = vld [vmem:[%s5 + $0x58] sm:$0xff]
    %v900 = vld [vmem:[%s5 + $0x60] sm:$0xff]
    %v901 = vld [vmem:[%s5 + $0x68] sm:$0xff]
    %v902 = vld [vmem:[%s5 + $0x70] sm:$0xff]
    %v903 = vld [vmem:[%s5 + $0x78] sm:$0xff]
    %v904 = vld [vmem:[%s5 + $0x80] sm:$0xff]
    %v905 = vld [vmem:[%s5 + $0x88] sm:$0xff]
    %v906 = vld [vmem:[%s5 + $0x90] sm:$0xff]
    %v907 = vld [vmem:[%s5 + $0x98] sm:$0xff]
    %v908 = vld [vmem:[%s5 + $0xa0] sm:$0xff]
    %v909 = vld [vmem:[%s5 + $0xa8] sm:$0xff]
    %v910 = vld [vmem:[%s5 + $0xb0] sm:$0xff]
    %v911 = vld [vmem:[%s5 + $0xb8] sm:$0xff]
    %v912 = vld [vmem:[%s5 + $0xc0] sm:$0xff]
    %v913 = vld [vmem:[%s5 + $0xc8] sm:$0xff]
    %v914 = vld [vmem:[%s5 + $0xd0] sm:$0xff]
    %v915 = vld [vmem:[%s5 + $0xd8] sm:$0xff]
    %v916 = vld [vmem:[%s5 + $0xe0] sm:$0xff]
    %v917 = vld [vmem:[%s5 + $0xe8] sm:$0xff]
    %v918 = vld [vmem:[%s5 + $0xf0] sm:$0xff]
    %v919 = vld [vmem:[%s5 + $0xf8] sm:$0xff]
    %v920 = vlaneseq
    %v921 = vshrl.u32 %v920, 7
    %v922 = vsub.s32 4, %v921
    %v923 = vrot.slane %v184, %v922
    %924 = vmatprep.subr.mxu0 0.0
    %925 = vmatpush1.msra.mxu0 %v888
    %926 = vmatprep.subr.mxu0 0.0
    %927 = vmatpush1.msra.mxu0 %v889
    %928 = vmatprep.subr.mxu0 0.0
    %929 = vmatpush1.msra.mxu0 %v890
    %930 = vmatprep.subr.mxu0 0.0
    %931 = vmatpush1.msra.mxu0 %v891
    %932 = vmatprep.subr.mxu0 0.0
    %933 = vmatpush1.msra.mxu0 %v892
    %934 = vmatprep.subr.mxu0 0.0
    %935 = vmatpush1.msra.mxu0 %v893
    %936 = vmatprep.subr.mxu0 0.0
    %937 = vmatpush1.msra.mxu0 %v894
    %938 = vmatprep.subr.mxu0 0.0
    %939 = vmatpush1.msra.mxu0 %v895
    %940 = vmatprep.subr.mxu0 0.0
    %941 = vmatpush1.msra.mxu0 %v896
    %942 = vmatprep.subr.mxu0 0.0
    %943 = vmatpush1.msra.mxu0 %v897
    %944 = vmatprep.subr.mxu0 0.0
    %945 = vmatpush1.msra.mxu0 %v898
    %946 = vmatprep.subr.mxu0 0.0
    %947 = vmatpush1.msra.mxu0 %v899
    %948 = vmatprep.subr.mxu0 0.0
    %949 = vmatpush1.msra.mxu0 %v900
    %950 = vmatprep.subr.mxu0 0.0
    %951 = vmatpush1.msra.mxu0 %v901
    %952 = vmatprep.subr.mxu0 0.0
    %953 = vmatpush1.msra.mxu0 %v902
    %954 = vmatprep.subr.mxu0 0.0
    %955 = vmatpush1.msra.mxu0 %v903
    %956 = vmatprep.subr.mxu0 0.0
    %957 = vmatpush1.msra.mxu0 %v904
    %958 = vmatprep.subr.mxu0 0.0
    %959 = vmatpush1.msra.mxu0 %v905
    %960 = vmatprep.subr.mxu0 0.0
    %961 = vmatpush1.msra.mxu0 %v906
    %962 = vmatprep.subr.mxu0 0.0
    %963 = vmatpush1.msra.mxu0 %v907
    %964 = vmatprep.subr.mxu0 0.0
    %965 = vmatpush1.msra.mxu0 %v908
    %966 = vmatprep.subr.mxu0 0.0
    %967 = vmatpush1.msra.mxu0 %v909
    %968 = vmatprep.subr.mxu0 0.0
    %969 = vmatpush1.msra.mxu0 %v910
    %970 = vmatprep.subr.mxu0 0.0
    %971 = vmatpush1.msra.mxu0 %v911
    %972 = vmatprep.subr.mxu0 0.0
    %973 = vmatpush1.msra.mxu0 %v912
    %974 = vmatprep.subr.mxu0 0.0
    %975 = vmatpush1.msra.mxu0 %v913
    %976 = vmatprep.subr.mxu0 0.0
    %977 = vmatpush1.msra.mxu0 %v914
    %978 = vmatprep.subr.mxu0 0.0
    %979 = vmatpush1.msra.mxu0 %v915
    %980 = vmatprep.subr.mxu0 0.0
    %981 = vmatpush1.msra.mxu0 %v916
    %982 = vmatprep.subr.mxu0 0.0
    %983 = vmatpush1.msra.mxu0 %v917
    %984 = vmatprep.subr.mxu0 0.0
    %985 = vmatpush1.msra.mxu0 %v918
    %986 = vmatprep.subr.mxu0 0.0
    %987 = vmatpush1.msra.mxu0 %v919
    %988 = vmatprep.mubr.f32.mxu0 %v880
    %989 = vmatmul.mubr.f32.gmra.mrb[0].mxu0 %v680
    %v990 = vpop.f32.mrb[0].mxu0
    %v991 = vadd.f32 %v923, %v990
    %v992 = vpop.f32.mrb[0].mxu0
    %993 = vmatprep.mubr.f32.mxu0 %v885
    %994 = vmatmul.mubr.f32.gmra.mrb[0].mxu0 %v685
    %v995 = vpop.f32.mrb[0].mxu0
    %v996 = vadd.f32 %v923, %v995
    %v997 = vpop.f32.mrb[0].mxu0
    %998 = vdwg.mxu0
    %v999 = vadd.f32 %v991, %v159
    %v1000 = vadd.f32 %v996, %v167
    %v1001 = vsel %vm186, %v999, 0.0
    %1002 = vadd.xlane.f32.xlu0 %v1001
    %v1003 = vpop.xlane.xlu0 %1002
    %v1004 = vsel %vm186, %v1000, 0.0
    %1005 = vadd.xlane.f32.xlu0 %v1004
    %v1006 = vpop.xlane.xlu0 %1005
    %v1007 = vmul.f32 %v1003, %v193
    %v1008 = vmul.f32 %v1006, %v193
    %v1009 = vsub.f32 %v999, %v1007
    %v1010 = vsub.f32 %v1000, %v1008
    %v1011 = vmul.f32 %v1009, %v1009
    %v1012 = vmul.f32 %v1010, %v1010
    %v1013 = vsel %vm186, %v1011, 0.0
    %1014 = vadd.xlane.f32.xlu0 %v1013
    %v1015 = vpop.xlane.xlu0 %1014
    %v1016 = vsel %vm186, %v1012, 0.0
    %1017 = vadd.xlane.f32.xlu0 %v1016
    %v1018 = vpop.xlane.xlu0 %1017
    %v1019 = vmul.f32 %v1015, %v193
    %v1020 = vmul.f32 %v1018, %v193
    %v1021 = vadd.f32 %v1019, 1e-12
    %v1022 = vadd.f32 %v1020, 1e-12
    %v1023 = vrsqrt.pop %v1021
    %v1024 = vrsqrt.pop %v1022
    %v1025 = vmul.f32 %v1009, %v1023
    %v1026 = vmul.f32 %v1010, %v1024
    %v1027 = vlaneseq
    %v1028 = vshrl.u32 %v1027, 7
    %v1029 = vsub.s32 2, %v1028
    %v1030 = vrot.slane %v184, %v1029
    %v1031 = vmul.f32 %v1025, %v1030
    %v1032 = vmul.f32 %v1026, %v1030
    %v1033 = vlaneseq
    %v1034 = vshrl.u32 %v1033, 7
    %v1035 = vsub.s32 3, %v1034
    %v1036 = vrot.slane %v184, %v1035
    %v1037 = vadd.f32 %v1031, %v1036
    %v1038 = vadd.f32 %v1032, %v1036
    %v1039 = vld [vmem:[%s6] sm:$0xff]
    %v1040 = vld [vmem:[%s6 + $0x8] sm:$0xff]
    %v1041 = vld [vmem:[%s6 + $0x10] sm:$0xff]
    %v1042 = vld [vmem:[%s6 + $0x18] sm:$0xff]
    %v1043 = vlaneseq
    %v1044 = vshrl.u32 %v1043, 7
    %v1045 = vsub.s32 6, %v1044
    %v1046 = vrot.slane %v184, %v1045
    %v1048 = vsel %vm186, %v1037, 0
    %v1051 = vsel %vm186, %v1038, 0
    %1053 = vmatprep.subr.mxu0 0.0
    %1054 = vmatpush1.msra.mxu0 %v1039
    %1055 = vmatprep.subr.mxu0 0.0
    %1056 = vmatpush1.msra.mxu0 %v1040
    %1057 = vmatprep.subr.mxu0 0.0
    %1058 = vmatpush1.msra.mxu0 %v1041
    %1059 = vmatprep.subr.mxu0 0.0
    %1060 = vmatpush1.msra.mxu0 %v1042
    %1061 = vmatprep.subr.mxu0 0.0
    %1062 = vmatpush1.msra.mxu0 0.0
    %1063 = vmatprep.subr.mxu0 0.0
    %1064 = vmatpush1.msra.mxu0 0.0
    %1065 = vmatprep.subr.mxu0 0.0
    %1066 = vmatpush1.msra.mxu0 0.0
    %1067 = vmatprep.subr.mxu0 0.0
    %1068 = vmatpush1.msra.mxu0 0.0
    %1069 = vmatprep.subr.mxu0 0.0
    %1070 = vmatpush1.msra.mxu0 0.0
    %1071 = vmatprep.subr.mxu0 0.0
    %1072 = vmatpush1.msra.mxu0 0.0
    %1073 = vmatprep.subr.mxu0 0.0
    %1074 = vmatpush1.msra.mxu0 0.0
    %1075 = vmatprep.subr.mxu0 0.0
    %1076 = vmatpush1.msra.mxu0 0.0
    %1077 = vmatprep.subr.mxu0 0.0
    %1078 = vmatpush1.msra.mxu0 0.0
    %1079 = vmatprep.subr.mxu0 0.0
    %1080 = vmatpush1.msra.mxu0 0.0
    %1081 = vmatprep.subr.mxu0 0.0
    %1082 = vmatpush1.msra.mxu0 0.0
    %1083 = vmatprep.subr.mxu0 0.0
    %1084 = vmatpush1.msra.mxu0 0.0
    %1085 = vmatprep.subr.mxu0 0.0
    %1086 = vmatpush1.msra.mxu0 0.0
    %1087 = vmatprep.subr.mxu0 0.0
    %1088 = vmatpush1.msra.mxu0 0.0
    %1089 = vmatprep.subr.mxu0 0.0
    %1090 = vmatpush1.msra.mxu0 0.0
    %1091 = vmatprep.subr.mxu0 0.0
    %1092 = vmatpush1.msra.mxu0 0.0
    %1093 = vmatprep.subr.mxu0 0.0
    %1094 = vmatpush1.msra.mxu0 0.0
    %1095 = vmatprep.subr.mxu0 0.0
    %1096 = vmatpush1.msra.mxu0 0.0
    %1097 = vmatprep.subr.mxu0 0.0
    %1098 = vmatpush1.msra.mxu0 0.0
    %1099 = vmatprep.subr.mxu0 0.0
    %1100 = vmatpush1.msra.mxu0 0.0
    %1101 = vmatprep.subr.mxu0 0.0
    %1102 = vmatpush1.msra.mxu0 0.0
    %1103 = vmatprep.subr.mxu0 0.0
    %1104 = vmatpush1.msra.mxu0 0.0
    %1105 = vmatprep.subr.mxu0 0.0
    %1106 = vmatpush1.msra.mxu0 0.0
    %1107 = vmatprep.subr.mxu0 0.0
    %1108 = vmatpush1.msra.mxu0 0.0
    %1109 = vmatprep.subr.mxu0 0.0
    %1110 = vmatpush1.msra.mxu0 0.0
    %1111 = vmatprep.subr.mxu0 0.0
    %1112 = vmatpush1.msra.mxu0 0.0
    %1113 = vmatprep.subr.mxu0 0.0
    %1114 = vmatpush1.msra.mxu0 0.0
    %1115 = vmatprep.subr.mxu0 0.0
    %1116 = vmatpush1.msra.mxu0 0.0
    %1117 = vmatprep.mubr.f32.mxu0 0.0
    %1118 = vmatmul.mubr.f32.gmra.mrb[0].mxu0 %v1048
    %v1119 = vpop.f32.mrb[0].mxu0
    %v1120 = vadd.f32 %v1046, %v1119
    %v1121 = vpop.f32.mrb[0].mxu0
    %1122 = vmatprep.mubr.f32.mxu0 0.0
    %1123 = vmatmul.mubr.f32.gmra.mrb[0].mxu0 %v1051
    %v1124 = vpop.f32.mrb[0].mxu0
    %v1125 = vadd.f32 %v1046, %v1124
    %v1126 = vpop.f32.mrb[0].mxu0
    %1127 = vdwg.mxu0
    %v1128 = vmul.f32 %v1120, 0.5
    %v1129 = vmul.f32 %v1125, 0.5
    %v1130 = vmul.f32 %v1120, 0.70710677
    %v1131 = vmul.f32 %v1125, 0.70710677
    %vm1132 = vcmp.ge.f32.partialorder %v1130, 0.0
    %vm1133 = vcmp.ge.f32.partialorder %v1131, 0.0
    %v1134 = vsel %vm1132, 1.0, -1.0
    %v1135 = vsel %vm1133, 1.0, -1.0
    %v1136 = vand.u32 2147483647, %v1130
    %v1137 = vand.u32 2147483647, %v1131
    %v1138 = vmul.f32 %v1136, 0.3275911
    %v1139 = vmul.f32 %v1137, 0.3275911
    %v1140 = vadd.f32 %v1138, 1.0
    %v1141 = vadd.f32 %v1139, 1.0
    %v1142 = vrcp.pop %v1140
    %v1143 = vmul.f32 1.0, %v1142
    %v1144 = vrcp.pop %v1141
    %v1145 = vmul.f32 1.0, %v1144
    %v1146 = vmul.f32 %v1143, 1.0614054
    %v1147 = vmul.f32 %v1145, 1.0614054
    %v1148 = vadd.f32 %v1146, -1.4531521
    %v1149 = vadd.f32 %v1147, -1.4531521
    %v1150 = vmul.f32 %v1148, %v1143
    %v1151 = vmul.f32 %v1149, %v1145
    %v1152 = vadd.f32 %v1150, 1.4214138
    %v1153 = vadd.f32 %v1151, 1.4214138
    %v1154 = vmul.f32 %v1152, %v1143
    %v1155 = vmul.f32 %v1153, %v1145
    %v1156 = vadd.f32 %v1154, -0.28449672
    %v1157 = vadd.f32 %v1155, -0.28449672
    %v1158 = vmul.f32 %v1156, %v1143
    %v1159 = vmul.f32 %v1157, %v1145
    %v1160 = vadd.f32 %v1158, 0.2548296
    %v1161 = vadd.f32 %v1159, 0.2548296
    %v1162 = vmul.f32 %v1160, %v1143
    %v1163 = vmul.f32 %v1161, %v1145
    %v1164 = vsub.f32 0.0, %v1136
    %v1165 = vsub.f32 0.0, %v1137
    %v1166 = vmul.f32 %v1164, %v1136
    %v1167 = vmul.f32 %v1165, %v1137
    %v1168 = vmul.f32 %v1166, 1.442695
    %v1169 = vpow.pop %v1168
    %v1170 = vmul.f32 %v1167, 1.442695
    %v1171 = vpow.pop %v1170
    %v1172 = vmul.f32 %v1162, %v1169
    %v1173 = vmul.f32 %v1163, %v1171
    %v1174 = vsub.f32 1.0, %v1172
    %v1175 = vsub.f32 1.0, %v1173
    %v1176 = vmul.f32 %v1134, %v1174
    %v1177 = vmul.f32 %v1135, %v1175
    %v1178 = vadd.f32 %v1176, 1.0
    %v1179 = vadd.f32 %v1177, 1.0
    %v1180 = vmul.f32 %v1128, %v1178
    %v1181 = vmul.f32 %v1129, %v1179
    %v1182 = vld [vmem:[%s7] sm:$0xff]
    %v1183 = vld [vmem:[%s7 + $0x8] sm:$0xff]
    %v1184 = vld [vmem:[%s7 + $0x10] sm:$0xff]
    %v1185 = vld [vmem:[%s7 + $0x18] sm:$0xff]
    %v1186 = vld [vmem:[%s7 + $0x20] sm:$0xff]
    %v1187 = vld [vmem:[%s7 + $0x28] sm:$0xff]
    %v1188 = vld [vmem:[%s7 + $0x30] sm:$0xff]
    %v1189 = vld [vmem:[%s7 + $0x38] sm:$0xff]
    %v1190 = vld [vmem:[%s7 + $0x40] sm:$0xff]
    %v1191 = vld [vmem:[%s7 + $0x48] sm:$0xff]
    %v1192 = vld [vmem:[%s7 + $0x50] sm:$0xff]
    %v1193 = vld [vmem:[%s7 + $0x58] sm:$0xff]
    %v1194 = vld [vmem:[%s7 + $0x60] sm:$0xff]
    %v1195 = vld [vmem:[%s7 + $0x68] sm:$0xff]
    %v1196 = vld [vmem:[%s7 + $0x70] sm:$0xff]
    %v1197 = vld [vmem:[%s7 + $0x78] sm:$0xff]
    %v1198 = vlaneseq
    %v1199 = vshrl.u32 %v1198, 7
    %v1200 = vsub.s32 5, %v1199
    %v1201 = vrot.slane %v184, %v1200
    %1202 = vmatprep.subr.mxu0 0.0
    %1203 = vmatpush1.msra.mxu0 %v1182
    %1204 = vmatprep.subr.mxu0 0.0
    %1205 = vmatpush1.msra.mxu0 %v1183
    %1206 = vmatprep.subr.mxu0 0.0
    %1207 = vmatpush1.msra.mxu0 %v1184
    %1208 = vmatprep.subr.mxu0 0.0
    %1209 = vmatpush1.msra.mxu0 %v1185
    %1210 = vmatprep.subr.mxu0 0.0
    %1211 = vmatpush1.msra.mxu0 %v1186
    %1212 = vmatprep.subr.mxu0 0.0
    %1213 = vmatpush1.msra.mxu0 %v1187
    %1214 = vmatprep.subr.mxu0 0.0
    %1215 = vmatpush1.msra.mxu0 %v1188
    %1216 = vmatprep.subr.mxu0 0.0
    %1217 = vmatpush1.msra.mxu0 %v1189
    %1218 = vmatprep.subr.mxu0 0.0
    %1219 = vmatpush1.msra.mxu0 %v1190
    %1220 = vmatprep.subr.mxu0 0.0
    %1221 = vmatpush1.msra.mxu0 %v1191
    %1222 = vmatprep.subr.mxu0 0.0
    %1223 = vmatpush1.msra.mxu0 %v1192
    %1224 = vmatprep.subr.mxu0 0.0
    %1225 = vmatpush1.msra.mxu0 %v1193
    %1226 = vmatprep.subr.mxu0 0.0
    %1227 = vmatpush1.msra.mxu0 %v1194
    %1228 = vmatprep.subr.mxu0 0.0
    %1229 = vmatpush1.msra.mxu0 %v1195
    %1230 = vmatprep.subr.mxu0 0.0
    %1231 = vmatpush1.msra.mxu0 %v1196
    %1232 = vmatprep.subr.mxu0 0.0
    %1233 = vmatpush1.msra.mxu0 %v1197
    %1234 = vmatprep.subr.mxu0 0.0
    %1235 = vmatpush1.msra.mxu0 0.0
    %1236 = vmatprep.subr.mxu0 0.0
    %1237 = vmatpush1.msra.mxu0 0.0
    %1238 = vmatprep.subr.mxu0 0.0
    %1239 = vmatpush1.msra.mxu0 0.0
    %1240 = vmatprep.subr.mxu0 0.0
    %1241 = vmatpush1.msra.mxu0 0.0
    %1242 = vmatprep.subr.mxu0 0.0
    %1243 = vmatpush1.msra.mxu0 0.0
    %1244 = vmatprep.subr.mxu0 0.0
    %1245 = vmatpush1.msra.mxu0 0.0
    %1246 = vmatprep.subr.mxu0 0.0
    %1247 = vmatpush1.msra.mxu0 0.0
    %1248 = vmatprep.subr.mxu0 0.0
    %1249 = vmatpush1.msra.mxu0 0.0
    %1250 = vmatprep.subr.mxu0 0.0
    %1251 = vmatpush1.msra.mxu0 0.0
    %1252 = vmatprep.subr.mxu0 0.0
    %1253 = vmatpush1.msra.mxu0 0.0
    %1254 = vmatprep.subr.mxu0 0.0
    %1255 = vmatpush1.msra.mxu0 0.0
    %1256 = vmatprep.subr.mxu0 0.0
    %1257 = vmatpush1.msra.mxu0 0.0
    %1258 = vmatprep.subr.mxu0 0.0
    %1259 = vmatpush1.msra.mxu0 0.0
    %1260 = vmatprep.subr.mxu0 0.0
    %1261 = vmatpush1.msra.mxu0 0.0
    %1262 = vmatprep.subr.mxu0 0.0
    %1263 = vmatpush1.msra.mxu0 0.0
    %1264 = vmatprep.subr.mxu0 0.0
    %1265 = vmatpush1.msra.mxu0 0.0
    %1266 = vmatprep.mubr.f32.mxu0 0.0
    %1267 = vmatmul.mubr.f32.gmra.mrb[0].mxu0 %v1180
    %v1268 = vpop.f32.mrb[0].mxu0
    %v1269 = vadd.f32 %v1201, %v1268
    %v1270 = vpop.f32.mrb[0].mxu0
    %1271 = vmatprep.mubr.f32.mxu0 0.0
    %1272 = vmatmul.mubr.f32.gmra.mrb[0].mxu0 %v1181
    %v1273 = vpop.f32.mrb[0].mxu0
    %v1274 = vadd.f32 %v1201, %v1273
    %v1275 = vpop.f32.mrb[0].mxu0
    %1276 = vdwg.mxu0
    %v1277 = vadd.f32 %v1269, %v999
    %v1278 = vadd.f32 %v1274, %v1000
    %s1279 = scalar_lea.vmem %s3, 16
    %v1280 = vld [vmem:[%s1279] sm:$0xff]
    %v1281 = vld [vmem:[%s1279 + $0x8] sm:$0xff]
    %v1282 = vsel %vm186, %v1277, 0.0
    %1283 = vadd.xlane.f32.xlu0 %v1282
    %v1284 = vpop.xlane.xlu0 %1283
    %v1285 = vsel %vm186, %v1278, 0.0
    %1286 = vadd.xlane.f32.xlu0 %v1285
    %v1287 = vpop.xlane.xlu0 %1286
    %v1288 = vmul.f32 %v1284, %v193
    %v1289 = vmul.f32 %v1287, %v193
    %v1290 = vsub.f32 %v1277, %v1288
    %v1291 = vsub.f32 %v1278, %v1289
    %v1292 = vmul.f32 %v1290, %v1290
    %v1293 = vmul.f32 %v1291, %v1291
    %v1294 = vsel %vm186, %v1292, 0.0
    %1295 = vadd.xlane.f32.xlu0 %v1294
    %v1296 = vpop.xlane.xlu0 %1295
    %v1297 = vsel %vm186, %v1293, 0.0
    %1298 = vadd.xlane.f32.xlu0 %v1297
    %v1299 = vpop.xlane.xlu0 %1298
    %v1300 = vmul.f32 %v1296, %v193
    %v1301 = vmul.f32 %v1299, %v193
    %v1302 = vadd.f32 %v1300, 1e-12
    %v1303 = vadd.f32 %v1301, 1e-12
    %v1304 = vrsqrt.pop %v1302
    %v1305 = vrsqrt.pop %v1303
    %v1306 = vmul.f32 %v1290, %v1304
    %v1307 = vmul.f32 %v1291, %v1305
    %v1308 = vlaneseq
    %v1309 = vshrl.u32 %v1308, 7
    %v1310 = vsub.s32 0, %v1309
    %v1311 = vrot.slane %v1280, %v1310
    %v1312 = vmul.f32 %v1306, %v1311
    %v1313 = vmul.f32 %v1307, %v1311
    %v1314 = vlaneseq
    %v1315 = vshrl.u32 %v1314, 7
    %v1316 = vsub.s32 1, %v1315
    %v1317 = vrot.slane %v1280, %v1316
    %v1318 = vadd.f32 %v1312, %v1317
    %v1319 = vadd.f32 %v1313, %v1317
    %s1320 = scalar_lea.vmem %s4, 192
    %v1321 = vld [vmem:[%s1320] sm:$0xff]
    %v1322 = vld [vmem:[%s1320 + $0x8] sm:$0xff]
    %v1323 = vld [vmem:[%s1320 + $0x10] sm:$0xff]
    %v1324 = vld [vmem:[%s1320 + $0x18] sm:$0xff]
    %v1325 = vld [vmem:[%s1320 + $0x20] sm:$0xff]
    %v1326 = vld [vmem:[%s1320 + $0x28] sm:$0xff]
    %v1327 = vld [vmem:[%s1320 + $0x30] sm:$0xff]
    %v1328 = vld [vmem:[%s1320 + $0x38] sm:$0xff]
    %v1329 = vld [vmem:[%s1320 + $0x40] sm:$0xff]
    %v1330 = vld [vmem:[%s1320 + $0x48] sm:$0xff]
    %v1331 = vld [vmem:[%s1320 + $0x50] sm:$0xff]
    %v1332 = vld [vmem:[%s1320 + $0x58] sm:$0xff]
    %v1333 = vld [vmem:[%s1320 + $0x60] sm:$0xff]
    %v1334 = vld [vmem:[%s1320 + $0x68] sm:$0xff]
    %v1335 = vld [vmem:[%s1320 + $0x70] sm:$0xff]
    %v1336 = vld [vmem:[%s1320 + $0x78] sm:$0xff]
    %v1337 = vld [vmem:[%s1320 + $0x80] sm:$0xff]
    %v1338 = vld [vmem:[%s1320 + $0x88] sm:$0xff]
    %v1339 = vld [vmem:[%s1320 + $0x90] sm:$0xff]
    %v1340 = vld [vmem:[%s1320 + $0x98] sm:$0xff]
    %v1341 = vld [vmem:[%s1320 + $0xa0] sm:$0xff]
    %v1342 = vld [vmem:[%s1320 + $0xa8] sm:$0xff]
    %v1343 = vld [vmem:[%s1320 + $0xb0] sm:$0xff]
    %v1344 = vld [vmem:[%s1320 + $0xb8] sm:$0xff]
    %v1346 = vsel %vm186, %v1318, 0
    %v1349 = vsel %vm186, %v1319, 0
    %1351 = vmatprep.subr.mxu0 %v1322
    %1352 = vmatpush1.msra.mxu0 %v1321
    %1353 = vmatprep.subr.mxu0 %v1328
    %1354 = vmatpush1.msra.mxu0 %v1327
    %1355 = vmatprep.subr.mxu0 %v1334
    %1356 = vmatpush1.msra.mxu0 %v1333
    %1357 = vmatprep.subr.mxu0 %v1340
    %1358 = vmatpush1.msra.mxu0 %v1339
    %1359 = vmatprep.subr.mxu0 0.0
    %1360 = vmatpush1.msra.mxu0 0.0
    %1361 = vmatprep.subr.mxu0 0.0
    %1362 = vmatpush1.msra.mxu0 0.0
    %1363 = vmatprep.subr.mxu0 0.0
    %1364 = vmatpush1.msra.mxu0 0.0
    %1365 = vmatprep.subr.mxu0 0.0
    %1366 = vmatpush1.msra.mxu0 0.0
    %1367 = vmatprep.subr.mxu0 0.0
    %1368 = vmatpush1.msra.mxu0 0.0
    %1369 = vmatprep.subr.mxu0 0.0
    %1370 = vmatpush1.msra.mxu0 0.0
    %1371 = vmatprep.subr.mxu0 0.0
    %1372 = vmatpush1.msra.mxu0 0.0
    %1373 = vmatprep.subr.mxu0 0.0
    %1374 = vmatpush1.msra.mxu0 0.0
    %1375 = vmatprep.subr.mxu0 0.0
    %1376 = vmatpush1.msra.mxu0 0.0
    %1377 = vmatprep.subr.mxu0 0.0
    %1378 = vmatpush1.msra.mxu0 0.0
    %1379 = vmatprep.subr.mxu0 0.0
    %1380 = vmatpush1.msra.mxu0 0.0
    %1381 = vmatprep.subr.mxu0 0.0
    %1382 = vmatpush1.msra.mxu0 0.0
    %1383 = vmatprep.subr.mxu0 0.0
    %1384 = vmatpush1.msra.mxu0 0.0
    %1385 = vmatprep.subr.mxu0 0.0
    %1386 = vmatpush1.msra.mxu0 0.0
    %1387 = vmatprep.subr.mxu0 0.0
    %1388 = vmatpush1.msra.mxu0 0.0
    %1389 = vmatprep.subr.mxu0 0.0
    %1390 = vmatpush1.msra.mxu0 0.0
    %1391 = vmatprep.subr.mxu0 0.0
    %1392 = vmatpush1.msra.mxu0 0.0
    %1393 = vmatprep.subr.mxu0 0.0
    %1394 = vmatpush1.msra.mxu0 0.0
    %1395 = vmatprep.subr.mxu0 0.0
    %1396 = vmatpush1.msra.mxu0 0.0
    %1397 = vmatprep.subr.mxu0 0.0
    %1398 = vmatpush1.msra.mxu0 0.0
    %1399 = vmatprep.subr.mxu0 0.0
    %1400 = vmatpush1.msra.mxu0 0.0
    %1401 = vmatprep.subr.mxu0 0.0
    %1402 = vmatpush1.msra.mxu0 0.0
    %1403 = vmatprep.subr.mxu0 0.0
    %1404 = vmatpush1.msra.mxu0 0.0
    %1405 = vmatprep.subr.mxu0 0.0
    %1406 = vmatpush1.msra.mxu0 0.0
    %1407 = vmatprep.subr.mxu0 0.0
    %1408 = vmatpush1.msra.mxu0 0.0
    %1409 = vmatprep.subr.mxu0 0.0
    %1410 = vmatpush1.msra.mxu0 0.0
    %1411 = vmatprep.subr.mxu0 0.0
    %1412 = vmatpush1.msra.mxu0 0.0
    %1413 = vmatprep.subr.mxu0 0.0
    %1414 = vmatpush1.msra.mxu0 0.0
    %1415 = vmatprep.mubr.f32.mxu0 0.0
    %1416 = vmatmul.mubr.f32.gmra.mrb[0].mxu0 %v1346
    %v1417 = vpop.f32.mrb[0].mxu0
    %v1418 = vadd.f32 0.0, %v1417
    %v1419 = vpop.f32.mrb[0].mxu0
    %v1420 = vadd.f32 0.0, %v1419
    %1421 = vmatprep.mubr.f32.mxu0 0.0
    %1422 = vmatmul.mubr.f32.gmra.mrb[0].mxu0 %v1349
    %v1423 = vpop.f32.mrb[0].mxu0
    %v1424 = vadd.f32 0.0, %v1423
    %v1425 = vpop.f32.mrb[0].mxu0
    %v1426 = vadd.f32 0.0, %v1425
    %1427 = vdwg.mxu0
    %1428 = vmatprep.subr.mxu0 %v1324
    %1429 = vmatpush1.msra.mxu0 %v1323
    %1430 = vmatprep.subr.mxu0 %v1330
    %1431 = vmatpush1.msra.mxu0 %v1329
    %1432 = vmatprep.subr.mxu0 %v1336
    %1433 = vmatpush1.msra.mxu0 %v1335
    %1434 = vmatprep.subr.mxu0 %v1342
    %1435 = vmatpush1.msra.mxu0 %v1341
    %1436 = vmatprep.subr.mxu0 0.0
    %1437 = vmatpush1.msra.mxu0 0.0
    %1438 = vmatprep.subr.mxu0 0.0
    %1439 = vmatpush1.msra.mxu0 0.0
    %1440 = vmatprep.subr.mxu0 0.0
    %1441 = vmatpush1.msra.mxu0 0.0
    %1442 = vmatprep.subr.mxu0 0.0
    %1443 = vmatpush1.msra.mxu0 0.0
    %1444 = vmatprep.subr.mxu0 0.0
    %1445 = vmatpush1.msra.mxu0 0.0
    %1446 = vmatprep.subr.mxu0 0.0
    %1447 = vmatpush1.msra.mxu0 0.0
    %1448 = vmatprep.subr.mxu0 0.0
    %1449 = vmatpush1.msra.mxu0 0.0
    %1450 = vmatprep.subr.mxu0 0.0
    %1451 = vmatpush1.msra.mxu0 0.0
    %1452 = vmatprep.subr.mxu0 0.0
    %1453 = vmatpush1.msra.mxu0 0.0
    %1454 = vmatprep.subr.mxu0 0.0
    %1455 = vmatpush1.msra.mxu0 0.0
    %1456 = vmatprep.subr.mxu0 0.0
    %1457 = vmatpush1.msra.mxu0 0.0
    %1458 = vmatprep.subr.mxu0 0.0
    %1459 = vmatpush1.msra.mxu0 0.0
    %1460 = vmatprep.subr.mxu0 0.0
    %1461 = vmatpush1.msra.mxu0 0.0
    %1462 = vmatprep.subr.mxu0 0.0
    %1463 = vmatpush1.msra.mxu0 0.0
    %1464 = vmatprep.subr.mxu0 0.0
    %1465 = vmatpush1.msra.mxu0 0.0
    %1466 = vmatprep.subr.mxu0 0.0
    %1467 = vmatpush1.msra.mxu0 0.0
    %1468 = vmatprep.subr.mxu0 0.0
    %1469 = vmatpush1.msra.mxu0 0.0
    %1470 = vmatprep.subr.mxu0 0.0
    %1471 = vmatpush1.msra.mxu0 0.0
    %1472 = vmatprep.subr.mxu0 0.0
    %1473 = vmatpush1.msra.mxu0 0.0
    %1474 = vmatprep.subr.mxu0 0.0
    %1475 = vmatpush1.msra.mxu0 0.0
    %1476 = vmatprep.subr.mxu0 0.0
    %1477 = vmatpush1.msra.mxu0 0.0
    %1478 = vmatprep.subr.mxu0 0.0
    %1479 = vmatpush1.msra.mxu0 0.0
    %1480 = vmatprep.subr.mxu0 0.0
    %1481 = vmatpush1.msra.mxu0 0.0
    %1482 = vmatprep.subr.mxu0 0.0
    %1483 = vmatpush1.msra.mxu0 0.0
    %1484 = vmatprep.subr.mxu0 0.0
    %1485 = vmatpush1.msra.mxu0 0.0
    %1486 = vmatprep.subr.mxu0 0.0
    %1487 = vmatpush1.msra.mxu0 0.0
    %1488 = vmatprep.subr.mxu0 0.0
    %1489 = vmatpush1.msra.mxu0 0.0
    %1490 = vmatprep.subr.mxu0 0.0
    %1491 = vmatpush1.msra.mxu0 0.0
    %1492 = vmatprep.mubr.f32.mxu0 0.0
    %1493 = vmatmul.mubr.f32.gmra.mrb[0].mxu0 %v1346
    %v1494 = vpop.f32.mrb[0].mxu0
    %v1495 = vadd.f32 0.0, %v1494
    %v1496 = vpop.f32.mrb[0].mxu0
    %v1497 = vadd.f32 0.0, %v1496
    %1498 = vmatprep.mubr.f32.mxu0 0.0
    %1499 = vmatmul.mubr.f32.gmra.mrb[0].mxu0 %v1349
    %v1500 = vpop.f32.mrb[0].mxu0
    %v1501 = vadd.f32 0.0, %v1500
    %v1502 = vpop.f32.mrb[0].mxu0
    %v1503 = vadd.f32 0.0, %v1502
    %1504 = vdwg.mxu0
    %1505 = vmatprep.subr.mxu0 %v1326
    %1506 = vmatpush1.msra.mxu0 %v1325
    %1507 = vmatprep.subr.mxu0 %v1332
    %1508 = vmatpush1.msra.mxu0 %v1331
    %1509 = vmatprep.subr.mxu0 %v1338
    %1510 = vmatpush1.msra.mxu0 %v1337
    %1511 = vmatprep.subr.mxu0 %v1344
    %1512 = vmatpush1.msra.mxu0 %v1343
    %1513 = vmatprep.subr.mxu0 0.0
    %1514 = vmatpush1.msra.mxu0 0.0
    %1515 = vmatprep.subr.mxu0 0.0
    %1516 = vmatpush1.msra.mxu0 0.0
    %1517 = vmatprep.subr.mxu0 0.0
    %1518 = vmatpush1.msra.mxu0 0.0
    %1519 = vmatprep.subr.mxu0 0.0
    %1520 = vmatpush1.msra.mxu0 0.0
    %1521 = vmatprep.subr.mxu0 0.0
    %1522 = vmatpush1.msra.mxu0 0.0
    %1523 = vmatprep.subr.mxu0 0.0
    %1524 = vmatpush1.msra.mxu0 0.0
    %1525 = vmatprep.subr.mxu0 0.0
    %1526 = vmatpush1.msra.mxu0 0.0
    %1527 = vmatprep.subr.mxu0 0.0
    %1528 = vmatpush1.msra.mxu0 0.0
    %1529 = vmatprep.subr.mxu0 0.0
    %1530 = vmatpush1.msra.mxu0 0.0
    %1531 = vmatprep.subr.mxu0 0.0
    %1532 = vmatpush1.msra.mxu0 0.0
    %1533 = vmatprep.subr.mxu0 0.0
    %1534 = vmatpush1.msra.mxu0 0.0
    %1535 = vmatprep.subr.mxu0 0.0
    %1536 = vmatpush1.msra.mxu0 0.0
    %1537 = vmatprep.subr.mxu0 0.0
    %1538 = vmatpush1.msra.mxu0 0.0
    %1539 = vmatprep.subr.mxu0 0.0
    %1540 = vmatpush1.msra.mxu0 0.0
    %1541 = vmatprep.subr.mxu0 0.0
    %1542 = vmatpush1.msra.mxu0 0.0
    %1543 = vmatprep.subr.mxu0 0.0
    %1544 = vmatpush1.msra.mxu0 0.0
    %1545 = vmatprep.subr.mxu0 0.0
    %1546 = vmatpush1.msra.mxu0 0.0
    %1547 = vmatprep.subr.mxu0 0.0
    %1548 = vmatpush1.msra.mxu0 0.0
    %1549 = vmatprep.subr.mxu0 0.0
    %1550 = vmatpush1.msra.mxu0 0.0
    %1551 = vmatprep.subr.mxu0 0.0
    %1552 = vmatpush1.msra.mxu0 0.0
    %1553 = vmatprep.subr.mxu0 0.0
    %1554 = vmatpush1.msra.mxu0 0.0
    %1555 = vmatprep.subr.mxu0 0.0
    %1556 = vmatpush1.msra.mxu0 0.0
    %1557 = vmatprep.subr.mxu0 0.0
    %1558 = vmatpush1.msra.mxu0 0.0
    %1559 = vmatprep.subr.mxu0 0.0
    %1560 = vmatpush1.msra.mxu0 0.0
    %1561 = vmatprep.subr.mxu0 0.0
    %1562 = vmatpush1.msra.mxu0 0.0
    %1563 = vmatprep.subr.mxu0 0.0
    %1564 = vmatpush1.msra.mxu0 0.0
    %1565 = vmatprep.subr.mxu0 0.0
    %1566 = vmatpush1.msra.mxu0 0.0
    %1567 = vmatprep.subr.mxu0 0.0
    %1568 = vmatpush1.msra.mxu0 0.0
    %1569 = vmatprep.mubr.f32.mxu0 0.0
    %1570 = vmatmul.mubr.f32.gmra.mrb[0].mxu0 %v1346
    %v1571 = vpop.f32.mrb[0].mxu0
    %v1572 = vadd.f32 0.0, %v1571
    %v1573 = vpop.f32.mrb[0].mxu0
    %v1574 = vadd.f32 0.0, %v1573
    %1575 = vmatprep.mubr.f32.mxu0 0.0
    %1576 = vmatmul.mubr.f32.gmra.mrb[0].mxu0 %v1349
    %v1577 = vpop.f32.mrb[0].mxu0
    %v1578 = vadd.f32 0.0, %v1577
    %v1579 = vpop.f32.mrb[0].mxu0
    %v1580 = vadd.f32 0.0, %v1579
    %1581 = vdwg.mxu0
    %v1582 = vlaneseq
    %v1583 = vshrl.u32 %v1582, 7
    %v1584 = vsub.s32 0, %v1583
    %v1585 = vrot.slane %v1281, %v1584
    %v1586 = vadd.f32 %v1418, %v1585
    %v1587 = vadd.f32 %v1424, %v1585
    %v1588 = vlaneseq
    %v1589 = vshrl.u32 %v1588, 7
    %v1590 = vsub.s32 2, %v1589
    %v1591 = vrot.slane %v1281, %v1590
    %v1592 = vadd.f32 %v1495, %v1591
    %v1593 = vadd.f32 %v1501, %v1591
    %v1594 = vlaneseq
    %v1595 = vshrl.u32 %v1594, 7
    %v1596 = vsub.s32 4, %v1595
    %v1597 = vrot.slane %v1281, %v1596
    %v1598 = vadd.f32 %v1572, %v1597
    %v1599 = vadd.f32 %v1578, %v1597
    %1600 = vmatprep.subr.mxu0 0.0
    %1601 = vmatpush1.xpose.msra.mxu0 %v1592
    %1602 = vmatprep.subr.mxu0 0.0
    %1603 = vmatpush1.xpose.msra.mxu0 %v1593
    %1604 = vmatprep.subr.mxu0 0.0
    %1605 = vmatpush1.xpose.msra.mxu0 0.0
    %1606 = vmatprep.subr.mxu0 0.0
    %1607 = vmatpush1.xpose.msra.mxu0 0.0
    %1608 = vmatprep.subr.mxu0 0.0
    %1609 = vmatpush1.xpose.msra.mxu0 0.0
    %1610 = vmatprep.subr.mxu0 0.0
    %1611 = vmatpush1.xpose.msra.mxu0 0.0
    %1612 = vmatprep.subr.mxu0 0.0
    %1613 = vmatpush1.xpose.msra.mxu0 0.0
    %1614 = vmatprep.subr.mxu0 0.0
    %1615 = vmatpush1.xpose.msra.mxu0 0.0
    %1616 = vmatprep.subr.mxu0 0.0
    %1617 = vmatpush1.xpose.msra.mxu0 0.0
    %1618 = vmatprep.subr.mxu0 0.0
    %1619 = vmatpush1.xpose.msra.mxu0 0.0
    %1620 = vmatprep.subr.mxu0 0.0
    %1621 = vmatpush1.xpose.msra.mxu0 0.0
    %1622 = vmatprep.subr.mxu0 0.0
    %1623 = vmatpush1.xpose.msra.mxu0 0.0
    %1624 = vmatprep.subr.mxu0 0.0
    %1625 = vmatpush1.xpose.msra.mxu0 0.0
    %1626 = vmatprep.subr.mxu0 0.0
    %1627 = vmatpush1.xpose.msra.mxu0 0.0
    %1628 = vmatprep.subr.mxu0 0.0
    %1629 = vmatpush1.xpose.msra.mxu0 0.0
    %1630 = vmatprep.subr.mxu0 0.0
    %1631 = vmatpush1.xpose.msra.mxu0 0.0
    %1632 = vmatprep.subr.mxu0 0.0
    %1633 = vmatpush1.xpose.msra.mxu0 0.0
    %1634 = vmatprep.subr.mxu0 0.0
    %1635 = vmatpush1.xpose.msra.mxu0 0.0
    %1636 = vmatprep.subr.mxu0 0.0
    %1637 = vmatpush1.xpose.msra.mxu0 0.0
    %1638 = vmatprep.subr.mxu0 0.0
    %1639 = vmatpush1.xpose.msra.mxu0 0.0
    %1640 = vmatprep.subr.mxu0 0.0
    %1641 = vmatpush1.xpose.msra.mxu0 0.0
    %1642 = vmatprep.subr.mxu0 0.0
    %1643 = vmatpush1.xpose.msra.mxu0 0.0
    %1644 = vmatprep.subr.mxu0 0.0
    %1645 = vmatpush1.xpose.msra.mxu0 0.0
    %1646 = vmatprep.subr.mxu0 0.0
    %1647 = vmatpush1.xpose.msra.mxu0 0.0
    %1648 = vmatprep.subr.mxu0 0.0
    %1649 = vmatpush1.xpose.msra.mxu0 0.0
    %1650 = vmatprep.subr.mxu0 0.0
    %1651 = vmatpush1.xpose.msra.mxu0 0.0
    %1652 = vmatprep.subr.mxu0 0.0
    %1653 = vmatpush1.xpose.msra.mxu0 0.0
    %1654 = vmatprep.subr.mxu0 0.0
    %1655 = vmatpush1.xpose.msra.mxu0 0.0
    %1656 = vmatprep.subr.mxu0 0.0
    %1657 = vmatpush1.xpose.msra.mxu0 0.0
    %1658 = vmatprep.subr.mxu0 0.0
    %1659 = vmatpush1.xpose.msra.mxu0 0.0
    %1660 = vmatprep.subr.mxu0 0.0
    %1661 = vmatpush1.xpose.msra.mxu0 0.0
    %1662 = vmatprep.subr.mxu0 0.0
    %1663 = vmatpush1.xpose.msra.mxu0 0.0
    %1664 = vmatprep.mubr.f32.mxu0 0.0
    %1665 = vmatmul.mubr.f32.gmra.mrb[0].mxu0 %v1586
    %v1666 = vpop.f32.mrb[0].mxu0
    %v1667 = vadd.f32 0.0, %v1666
    %v1668 = vpop.f32.mrb[0].mxu0
    %1669 = vmatprep.mubr.f32.mxu0 0.0
    %1670 = vmatmul.mubr.f32.gmra.mrb[0].mxu0 %v1587
    %v1671 = vpop.f32.mrb[0].mxu0
    %v1672 = vadd.f32 0.0, %v1671
    %v1673 = vpop.f32.mrb[0].mxu0
    %1674 = vdwg.mxu0
    %v1675 = vmul.f32 %v1667, 0.25
    %v1676 = vmul.f32 %v1672, 0.25
    %v1677 = vadd.f32 %v1675, %v182
    %v1678 = vadd.f32 %v1676, %v183
    %v1679 = vsel %vm584, %v1677, -inf
    %1680 = vmax.xlane.f32.xlu0 %v1679
    %v1681 = vpop.xlane.xlu0 %1680
    %v1682 = vsel %vm584, %v1678, -inf
    %1683 = vmax.xlane.f32.xlu0 %v1682
    %v1684 = vpop.xlane.xlu0 %1683
    %v1685 = vsub.f32 %v1677, %v1681
    %v1686 = vsub.f32 %v1678, %v1684
    %v1687 = vmul.f32 %v1685, 1.442695
    %v1688 = vpow.pop %v1687
    %v1689 = vmul.f32 %v1686, 1.442695
    %v1690 = vpow.pop %v1689
    %v1691 = vsel %vm584, %v1688, 0.0
    %1692 = vadd.xlane.f32.xlu0 %v1691
    %v1693 = vpop.xlane.xlu0 %1692
    %v1694 = vsel %vm584, %v1690, 0.0
    %1695 = vadd.xlane.f32.xlu0 %v1694
    %v1696 = vpop.xlane.xlu0 %1695
    %v1697 = vrcp.pop %v1693
    %v1698 = vrcp.pop %v1696
    %v1699 = vmul.f32 %v1688, %v1697
    %v1700 = vmul.f32 %v1690, %v1698
    %v1702 = vsel %vm584, %v1699, 0
    %v1705 = vsel %vm584, %v1700, 0
    %1707 = vmatprep.subr.mxu0 0.0
    %1708 = vmatpush1.msra.mxu0 %v1598
    %1709 = vmatprep.subr.mxu0 0.0
    %1710 = vmatpush1.msra.mxu0 %v1599
    %1711 = vmatprep.subr.mxu0 0.0
    %1712 = vmatpush1.msra.mxu0 0.0
    %1713 = vmatprep.subr.mxu0 0.0
    %1714 = vmatpush1.msra.mxu0 0.0
    %1715 = vmatprep.subr.mxu0 0.0
    %1716 = vmatpush1.msra.mxu0 0.0
    %1717 = vmatprep.subr.mxu0 0.0
    %1718 = vmatpush1.msra.mxu0 0.0
    %1719 = vmatprep.subr.mxu0 0.0
    %1720 = vmatpush1.msra.mxu0 0.0
    %1721 = vmatprep.subr.mxu0 0.0
    %1722 = vmatpush1.msra.mxu0 0.0
    %1723 = vmatprep.subr.mxu0 0.0
    %1724 = vmatpush1.msra.mxu0 0.0
    %1725 = vmatprep.subr.mxu0 0.0
    %1726 = vmatpush1.msra.mxu0 0.0
    %1727 = vmatprep.subr.mxu0 0.0
    %1728 = vmatpush1.msra.mxu0 0.0
    %1729 = vmatprep.subr.mxu0 0.0
    %1730 = vmatpush1.msra.mxu0 0.0
    %1731 = vmatprep.subr.mxu0 0.0
    %1732 = vmatpush1.msra.mxu0 0.0
    %1733 = vmatprep.subr.mxu0 0.0
    %1734 = vmatpush1.msra.mxu0 0.0
    %1735 = vmatprep.subr.mxu0 0.0
    %1736 = vmatpush1.msra.mxu0 0.0
    %1737 = vmatprep.subr.mxu0 0.0
    %1738 = vmatpush1.msra.mxu0 0.0
    %1739 = vmatprep.subr.mxu0 0.0
    %1740 = vmatpush1.msra.mxu0 0.0
    %1741 = vmatprep.subr.mxu0 0.0
    %1742 = vmatpush1.msra.mxu0 0.0
    %1743 = vmatprep.subr.mxu0 0.0
    %1744 = vmatpush1.msra.mxu0 0.0
    %1745 = vmatprep.subr.mxu0 0.0
    %1746 = vmatpush1.msra.mxu0 0.0
    %1747 = vmatprep.subr.mxu0 0.0
    %1748 = vmatpush1.msra.mxu0 0.0
    %1749 = vmatprep.subr.mxu0 0.0
    %1750 = vmatpush1.msra.mxu0 0.0
    %1751 = vmatprep.subr.mxu0 0.0
    %1752 = vmatpush1.msra.mxu0 0.0
    %1753 = vmatprep.subr.mxu0 0.0
    %1754 = vmatpush1.msra.mxu0 0.0
    %1755 = vmatprep.subr.mxu0 0.0
    %1756 = vmatpush1.msra.mxu0 0.0
    %1757 = vmatprep.subr.mxu0 0.0
    %1758 = vmatpush1.msra.mxu0 0.0
    %1759 = vmatprep.subr.mxu0 0.0
    %1760 = vmatpush1.msra.mxu0 0.0
    %1761 = vmatprep.subr.mxu0 0.0
    %1762 = vmatpush1.msra.mxu0 0.0
    %1763 = vmatprep.subr.mxu0 0.0
    %1764 = vmatpush1.msra.mxu0 0.0
    %1765 = vmatprep.subr.mxu0 0.0
    %1766 = vmatpush1.msra.mxu0 0.0
    %1767 = vmatprep.subr.mxu0 0.0
    %1768 = vmatpush1.msra.mxu0 0.0
    %1769 = vmatprep.subr.mxu0 0.0
    %1770 = vmatpush1.msra.mxu0 0.0
    %1771 = vmatprep.mubr.f32.mxu0 0.0
    %1772 = vmatmul.mubr.f32.gmra.mrb[0].mxu0 %v1702
    %v1773 = vpop.f32.mrb[0].mxu0
    %v1774 = vadd.f32 0.0, %v1773
    %v1775 = vpop.f32.mrb[0].mxu0
    %1776 = vmatprep.mubr.f32.mxu0 0.0
    %1777 = vmatmul.mubr.f32.gmra.mrb[0].mxu0 %v1705
    %v1778 = vpop.f32.mrb[0].mxu0
    %v1779 = vadd.f32 0.0, %v1778
    %v1780 = vpop.f32.mrb[0].mxu0
    %1781 = vdwg.mxu0
    %v1782 = vlaneseq
    %v1783 = vshrl.u32 %v1782, 7
    %v1784 = vsub.s32 1, %v1783
    %v1785 = vrot.slane %v1281, %v1784
    %v1786 = vadd.f32 %v1420, %v1785
    %v1787 = vadd.f32 %v1426, %v1785
    %v1788 = vlaneseq
    %v1789 = vshrl.u32 %v1788, 7
    %v1790 = vsub.s32 3, %v1789
    %v1791 = vrot.slane %v1281, %v1790
    %v1792 = vadd.f32 %v1497, %v1791
    %v1793 = vadd.f32 %v1503, %v1791
    %v1794 = vlaneseq
    %v1795 = vshrl.u32 %v1794, 7
    %v1796 = vsub.s32 5, %v1795
    %v1797 = vrot.slane %v1281, %v1796
    %v1798 = vadd.f32 %v1574, %v1797
    %v1799 = vadd.f32 %v1580, %v1797
    %1800 = vmatprep.subr.mxu0 0.0
    %1801 = vmatpush1.xpose.msra.mxu0 %v1792
    %1802 = vmatprep.subr.mxu0 0.0
    %1803 = vmatpush1.xpose.msra.mxu0 %v1793
    %1804 = vmatprep.subr.mxu0 0.0
    %1805 = vmatpush1.xpose.msra.mxu0 0.0
    %1806 = vmatprep.subr.mxu0 0.0
    %1807 = vmatpush1.xpose.msra.mxu0 0.0
    %1808 = vmatprep.subr.mxu0 0.0
    %1809 = vmatpush1.xpose.msra.mxu0 0.0
    %1810 = vmatprep.subr.mxu0 0.0
    %1811 = vmatpush1.xpose.msra.mxu0 0.0
    %1812 = vmatprep.subr.mxu0 0.0
    %1813 = vmatpush1.xpose.msra.mxu0 0.0
    %1814 = vmatprep.subr.mxu0 0.0
    %1815 = vmatpush1.xpose.msra.mxu0 0.0
    %1816 = vmatprep.subr.mxu0 0.0
    %1817 = vmatpush1.xpose.msra.mxu0 0.0
    %1818 = vmatprep.subr.mxu0 0.0
    %1819 = vmatpush1.xpose.msra.mxu0 0.0
    %1820 = vmatprep.subr.mxu0 0.0
    %1821 = vmatpush1.xpose.msra.mxu0 0.0
    %1822 = vmatprep.subr.mxu0 0.0
    %1823 = vmatpush1.xpose.msra.mxu0 0.0
    %1824 = vmatprep.subr.mxu0 0.0
    %1825 = vmatpush1.xpose.msra.mxu0 0.0
    %1826 = vmatprep.subr.mxu0 0.0
    %1827 = vmatpush1.xpose.msra.mxu0 0.0
    %1828 = vmatprep.subr.mxu0 0.0
    %1829 = vmatpush1.xpose.msra.mxu0 0.0
    %1830 = vmatprep.subr.mxu0 0.0
    %1831 = vmatpush1.xpose.msra.mxu0 0.0
    %1832 = vmatprep.subr.mxu0 0.0
    %1833 = vmatpush1.xpose.msra.mxu0 0.0
    %1834 = vmatprep.subr.mxu0 0.0
    %1835 = vmatpush1.xpose.msra.mxu0 0.0
    %1836 = vmatprep.subr.mxu0 0.0
    %1837 = vmatpush1.xpose.msra.mxu0 0.0
    %1838 = vmatprep.subr.mxu0 0.0
    %1839 = vmatpush1.xpose.msra.mxu0 0.0
    %1840 = vmatprep.subr.mxu0 0.0
    %1841 = vmatpush1.xpose.msra.mxu0 0.0
    %1842 = vmatprep.subr.mxu0 0.0
    %1843 = vmatpush1.xpose.msra.mxu0 0.0
    %1844 = vmatprep.subr.mxu0 0.0
    %1845 = vmatpush1.xpose.msra.mxu0 0.0
    %1846 = vmatprep.subr.mxu0 0.0
    %1847 = vmatpush1.xpose.msra.mxu0 0.0
    %1848 = vmatprep.subr.mxu0 0.0
    %1849 = vmatpush1.xpose.msra.mxu0 0.0
    %1850 = vmatprep.subr.mxu0 0.0
    %1851 = vmatpush1.xpose.msra.mxu0 0.0
    %1852 = vmatprep.subr.mxu0 0.0
    %1853 = vmatpush1.xpose.msra.mxu0 0.0
    %1854 = vmatprep.subr.mxu0 0.0
    %1855 = vmatpush1.xpose.msra.mxu0 0.0
    %1856 = vmatprep.subr.mxu0 0.0
    %1857 = vmatpush1.xpose.msra.mxu0 0.0
    %1858 = vmatprep.subr.mxu0 0.0
    %1859 = vmatpush1.xpose.msra.mxu0 0.0
    %1860 = vmatprep.subr.mxu0 0.0
    %1861 = vmatpush1.xpose.msra.mxu0 0.0
    %1862 = vmatprep.subr.mxu0 0.0
    %1863 = vmatpush1.xpose.msra.mxu0 0.0
    %1864 = vmatprep.mubr.f32.mxu0 0.0
    %1865 = vmatmul.mubr.f32.gmra.mrb[0].mxu0 %v1786
    %v1866 = vpop.f32.mrb[0].mxu0
    %v1867 = vadd.f32 0.0, %v1866
    %v1868 = vpop.f32.mrb[0].mxu0
    %1869 = vmatprep.mubr.f32.mxu0 0.0
    %1870 = vmatmul.mubr.f32.gmra.mrb[0].mxu0 %v1787
    %v1871 = vpop.f32.mrb[0].mxu0
    %v1872 = vadd.f32 0.0, %v1871
    %v1873 = vpop.f32.mrb[0].mxu0
    %1874 = vdwg.mxu0
    %v1875 = vmul.f32 %v1867, 0.25
    %v1876 = vmul.f32 %v1872, 0.25
    %v1877 = vadd.f32 %v1875, %v182
    %v1878 = vadd.f32 %v1876, %v183
    %v1879 = vsel %vm584, %v1877, -inf
    %1880 = vmax.xlane.f32.xlu0 %v1879
    %v1881 = vpop.xlane.xlu0 %1880
    %v1882 = vsel %vm584, %v1878, -inf
    %1883 = vmax.xlane.f32.xlu0 %v1882
    %v1884 = vpop.xlane.xlu0 %1883
    %v1885 = vsub.f32 %v1877, %v1881
    %v1886 = vsub.f32 %v1878, %v1884
    %v1887 = vmul.f32 %v1885, 1.442695
    %v1888 = vpow.pop %v1887
    %v1889 = vmul.f32 %v1886, 1.442695
    %v1890 = vpow.pop %v1889
    %v1891 = vsel %vm584, %v1888, 0.0
    %1892 = vadd.xlane.f32.xlu0 %v1891
    %v1893 = vpop.xlane.xlu0 %1892
    %v1894 = vsel %vm584, %v1890, 0.0
    %1895 = vadd.xlane.f32.xlu0 %v1894
    %v1896 = vpop.xlane.xlu0 %1895
    %v1897 = vrcp.pop %v1893
    %v1898 = vrcp.pop %v1896
    %v1899 = vmul.f32 %v1888, %v1897
    %v1900 = vmul.f32 %v1890, %v1898
    %v1902 = vsel %vm584, %v1899, 0
    %v1905 = vsel %vm584, %v1900, 0
    %1907 = vmatprep.subr.mxu0 0.0
    %1908 = vmatpush1.msra.mxu0 %v1798
    %1909 = vmatprep.subr.mxu0 0.0
    %1910 = vmatpush1.msra.mxu0 %v1799
    %1911 = vmatprep.subr.mxu0 0.0
    %1912 = vmatpush1.msra.mxu0 0.0
    %1913 = vmatprep.subr.mxu0 0.0
    %1914 = vmatpush1.msra.mxu0 0.0
    %1915 = vmatprep.subr.mxu0 0.0
    %1916 = vmatpush1.msra.mxu0 0.0
    %1917 = vmatprep.subr.mxu0 0.0
    %1918 = vmatpush1.msra.mxu0 0.0
    %1919 = vmatprep.subr.mxu0 0.0
    %1920 = vmatpush1.msra.mxu0 0.0
    %1921 = vmatprep.subr.mxu0 0.0
    %1922 = vmatpush1.msra.mxu0 0.0
    %1923 = vmatprep.subr.mxu0 0.0
    %1924 = vmatpush1.msra.mxu0 0.0
    %1925 = vmatprep.subr.mxu0 0.0
    %1926 = vmatpush1.msra.mxu0 0.0
    %1927 = vmatprep.subr.mxu0 0.0
    %1928 = vmatpush1.msra.mxu0 0.0
    %1929 = vmatprep.subr.mxu0 0.0
    %1930 = vmatpush1.msra.mxu0 0.0
    %1931 = vmatprep.subr.mxu0 0.0
    %1932 = vmatpush1.msra.mxu0 0.0
    %1933 = vmatprep.subr.mxu0 0.0
    %1934 = vmatpush1.msra.mxu0 0.0
    %1935 = vmatprep.subr.mxu0 0.0
    %1936 = vmatpush1.msra.mxu0 0.0
    %1937 = vmatprep.subr.mxu0 0.0
    %1938 = vmatpush1.msra.mxu0 0.0
    %1939 = vmatprep.subr.mxu0 0.0
    %1940 = vmatpush1.msra.mxu0 0.0
    %1941 = vmatprep.subr.mxu0 0.0
    %1942 = vmatpush1.msra.mxu0 0.0
    %1943 = vmatprep.subr.mxu0 0.0
    %1944 = vmatpush1.msra.mxu0 0.0
    %1945 = vmatprep.subr.mxu0 0.0
    %1946 = vmatpush1.msra.mxu0 0.0
    %1947 = vmatprep.subr.mxu0 0.0
    %1948 = vmatpush1.msra.mxu0 0.0
    %1949 = vmatprep.subr.mxu0 0.0
    %1950 = vmatpush1.msra.mxu0 0.0
    %1951 = vmatprep.subr.mxu0 0.0
    %1952 = vmatpush1.msra.mxu0 0.0
    %1953 = vmatprep.subr.mxu0 0.0
    %1954 = vmatpush1.msra.mxu0 0.0
    %1955 = vmatprep.subr.mxu0 0.0
    %1956 = vmatpush1.msra.mxu0 0.0
    %1957 = vmatprep.subr.mxu0 0.0
    %1958 = vmatpush1.msra.mxu0 0.0
    %1959 = vmatprep.subr.mxu0 0.0
    %1960 = vmatpush1.msra.mxu0 0.0
    %1961 = vmatprep.subr.mxu0 0.0
    %1962 = vmatpush1.msra.mxu0 0.0
    %1963 = vmatprep.subr.mxu0 0.0
    %1964 = vmatpush1.msra.mxu0 0.0
    %1965 = vmatprep.subr.mxu0 0.0
    %1966 = vmatpush1.msra.mxu0 0.0
    %1967 = vmatprep.subr.mxu0 0.0
    %1968 = vmatpush1.msra.mxu0 0.0
    %1969 = vmatprep.subr.mxu0 0.0
    %1970 = vmatpush1.msra.mxu0 0.0
    %1971 = vmatprep.mubr.f32.mxu0 0.0
    %1972 = vmatmul.mubr.f32.gmra.mrb[0].mxu0 %v1902
    %v1973 = vpop.f32.mrb[0].mxu0
    %v1974 = vadd.f32 0.0, %v1973
    %v1975 = vpop.f32.mrb[0].mxu0
    %1976 = vmatprep.mubr.f32.mxu0 0.0
    %1977 = vmatmul.mubr.f32.gmra.mrb[0].mxu0 %v1905
    %v1978 = vpop.f32.mrb[0].mxu0
    %v1979 = vadd.f32 0.0, %v1978
    %v1980 = vpop.f32.mrb[0].mxu0
    %1981 = vdwg.mxu0
    %s1982 = scalar_lea.vmem %s5, 256
    %v1983 = vld [vmem:[%s1982] sm:$0xff]
    %v1984 = vld [vmem:[%s1982 + $0x8] sm:$0xff]
    %v1985 = vld [vmem:[%s1982 + $0x10] sm:$0xff]
    %v1986 = vld [vmem:[%s1982 + $0x18] sm:$0xff]
    %v1987 = vld [vmem:[%s1982 + $0x20] sm:$0xff]
    %v1988 = vld [vmem:[%s1982 + $0x28] sm:$0xff]
    %v1989 = vld [vmem:[%s1982 + $0x30] sm:$0xff]
    %v1990 = vld [vmem:[%s1982 + $0x38] sm:$0xff]
    %v1991 = vld [vmem:[%s1982 + $0x40] sm:$0xff]
    %v1992 = vld [vmem:[%s1982 + $0x48] sm:$0xff]
    %v1993 = vld [vmem:[%s1982 + $0x50] sm:$0xff]
    %v1994 = vld [vmem:[%s1982 + $0x58] sm:$0xff]
    %v1995 = vld [vmem:[%s1982 + $0x60] sm:$0xff]
    %v1996 = vld [vmem:[%s1982 + $0x68] sm:$0xff]
    %v1997 = vld [vmem:[%s1982 + $0x70] sm:$0xff]
    %v1998 = vld [vmem:[%s1982 + $0x78] sm:$0xff]
    %v1999 = vld [vmem:[%s1982 + $0x80] sm:$0xff]
    %v2000 = vld [vmem:[%s1982 + $0x88] sm:$0xff]
    %v2001 = vld [vmem:[%s1982 + $0x90] sm:$0xff]
    %v2002 = vld [vmem:[%s1982 + $0x98] sm:$0xff]
    %v2003 = vld [vmem:[%s1982 + $0xa0] sm:$0xff]
    %v2004 = vld [vmem:[%s1982 + $0xa8] sm:$0xff]
    %v2005 = vld [vmem:[%s1982 + $0xb0] sm:$0xff]
    %v2006 = vld [vmem:[%s1982 + $0xb8] sm:$0xff]
    %v2007 = vld [vmem:[%s1982 + $0xc0] sm:$0xff]
    %v2008 = vld [vmem:[%s1982 + $0xc8] sm:$0xff]
    %v2009 = vld [vmem:[%s1982 + $0xd0] sm:$0xff]
    %v2010 = vld [vmem:[%s1982 + $0xd8] sm:$0xff]
    %v2011 = vld [vmem:[%s1982 + $0xe0] sm:$0xff]
    %v2012 = vld [vmem:[%s1982 + $0xe8] sm:$0xff]
    %v2013 = vld [vmem:[%s1982 + $0xf0] sm:$0xff]
    %v2014 = vld [vmem:[%s1982 + $0xf8] sm:$0xff]
    %v2015 = vlaneseq
    %v2016 = vshrl.u32 %v2015, 7
    %v2017 = vsub.s32 4, %v2016
    %v2018 = vrot.slane %v1280, %v2017
    %2019 = vmatprep.subr.mxu0 0.0
    %2020 = vmatpush1.msra.mxu0 %v1983
    %2021 = vmatprep.subr.mxu0 0.0
    %2022 = vmatpush1.msra.mxu0 %v1984
    %2023 = vmatprep.subr.mxu0 0.0
    %2024 = vmatpush1.msra.mxu0 %v1985
    %2025 = vmatprep.subr.mxu0 0.0
    %2026 = vmatpush1.msra.mxu0 %v1986
    %2027 = vmatprep.subr.mxu0 0.0
    %2028 = vmatpush1.msra.mxu0 %v1987
    %2029 = vmatprep.subr.mxu0 0.0
    %2030 = vmatpush1.msra.mxu0 %v1988
    %2031 = vmatprep.subr.mxu0 0.0
    %2032 = vmatpush1.msra.mxu0 %v1989
    %2033 = vmatprep.subr.mxu0 0.0
    %2034 = vmatpush1.msra.mxu0 %v1990
    %2035 = vmatprep.subr.mxu0 0.0
    %2036 = vmatpush1.msra.mxu0 %v1991
    %2037 = vmatprep.subr.mxu0 0.0
    %2038 = vmatpush1.msra.mxu0 %v1992
    %2039 = vmatprep.subr.mxu0 0.0
    %2040 = vmatpush1.msra.mxu0 %v1993
    %2041 = vmatprep.subr.mxu0 0.0
    %2042 = vmatpush1.msra.mxu0 %v1994
    %2043 = vmatprep.subr.mxu0 0.0
    %2044 = vmatpush1.msra.mxu0 %v1995
    %2045 = vmatprep.subr.mxu0 0.0
    %2046 = vmatpush1.msra.mxu0 %v1996
    %2047 = vmatprep.subr.mxu0 0.0
    %2048 = vmatpush1.msra.mxu0 %v1997
    %2049 = vmatprep.subr.mxu0 0.0
    %2050 = vmatpush1.msra.mxu0 %v1998
    %2051 = vmatprep.subr.mxu0 0.0
    %2052 = vmatpush1.msra.mxu0 %v1999
    %2053 = vmatprep.subr.mxu0 0.0
    %2054 = vmatpush1.msra.mxu0 %v2000
    %2055 = vmatprep.subr.mxu0 0.0
    %2056 = vmatpush1.msra.mxu0 %v2001
    %2057 = vmatprep.subr.mxu0 0.0
    %2058 = vmatpush1.msra.mxu0 %v2002
    %2059 = vmatprep.subr.mxu0 0.0
    %2060 = vmatpush1.msra.mxu0 %v2003
    %2061 = vmatprep.subr.mxu0 0.0
    %2062 = vmatpush1.msra.mxu0 %v2004
    %2063 = vmatprep.subr.mxu0 0.0
    %2064 = vmatpush1.msra.mxu0 %v2005
    %2065 = vmatprep.subr.mxu0 0.0
    %2066 = vmatpush1.msra.mxu0 %v2006
    %2067 = vmatprep.subr.mxu0 0.0
    %2068 = vmatpush1.msra.mxu0 %v2007
    %2069 = vmatprep.subr.mxu0 0.0
    %2070 = vmatpush1.msra.mxu0 %v2008
    %2071 = vmatprep.subr.mxu0 0.0
    %2072 = vmatpush1.msra.mxu0 %v2009
    %2073 = vmatprep.subr.mxu0 0.0
    %2074 = vmatpush1.msra.mxu0 %v2010
    %2075 = vmatprep.subr.mxu0 0.0
    %2076 = vmatpush1.msra.mxu0 %v2011
    %2077 = vmatprep.subr.mxu0 0.0
    %2078 = vmatpush1.msra.mxu0 %v2012
    %2079 = vmatprep.subr.mxu0 0.0
    %2080 = vmatpush1.msra.mxu0 %v2013
    %2081 = vmatprep.subr.mxu0 0.0
    %2082 = vmatpush1.msra.mxu0 %v2014
    %2083 = vmatprep.mubr.f32.mxu0 %v1974
    %2084 = vmatmul.mubr.f32.gmra.mrb[0].mxu0 %v1774
    %v2085 = vpop.f32.mrb[0].mxu0
    %v2086 = vadd.f32 %v2018, %v2085
    %v2087 = vpop.f32.mrb[0].mxu0
    %2088 = vmatprep.mubr.f32.mxu0 %v1979
    %2089 = vmatmul.mubr.f32.gmra.mrb[0].mxu0 %v1779
    %v2090 = vpop.f32.mrb[0].mxu0
    %v2091 = vadd.f32 %v2018, %v2090
    %v2092 = vpop.f32.mrb[0].mxu0
    %2093 = vdwg.mxu0
    %v2094 = vadd.f32 %v2086, %v1277
    %v2095 = vadd.f32 %v2091, %v1278
    %v2096 = vsel %vm186, %v2094, 0.0
    %2097 = vadd.xlane.f32.xlu0 %v2096
    %v2098 = vpop.xlane.xlu0 %2097
    %v2099 = vsel %vm186, %v2095, 0.0
    %2100 = vadd.xlane.f32.xlu0 %v2099
    %v2101 = vpop.xlane.xlu0 %2100
    %v2102 = vmul.f32 %v2098, %v193
    %v2103 = vmul.f32 %v2101, %v193
    %v2104 = vsub.f32 %v2094, %v2102
    %v2105 = vsub.f32 %v2095, %v2103
    %v2106 = vmul.f32 %v2104, %v2104
    %v2107 = vmul.f32 %v2105, %v2105
    %v2108 = vsel %vm186, %v2106, 0.0
    %2109 = vadd.xlane.f32.xlu0 %v2108
    %v2110 = vpop.xlane.xlu0 %2109
    %v2111 = vsel %vm186, %v2107, 0.0
    %2112 = vadd.xlane.f32.xlu0 %v2111
    %v2113 = vpop.xlane.xlu0 %2112
    %v2114 = vmul.f32 %v2110, %v193
    %v2115 = vmul.f32 %v2113, %v193
    %v2116 = vadd.f32 %v2114, 1e-12
    %v2117 = vadd.f32 %v2115, 1e-12
    %v2118 = vrsqrt.pop %v2116
    %v2119 = vrsqrt.pop %v2117
    %v2120 = vmul.f32 %v2104, %v2118
    %v2121 = vmul.f32 %v2105, %v2119
    %v2122 = vlaneseq
    %v2123 = vshrl.u32 %v2122, 7
    %v2124 = vsub.s32 2, %v2123
    %v2125 = vrot.slane %v1280, %v2124
    %v2126 = vmul.f32 %v2120, %v2125
    %v2127 = vmul.f32 %v2121, %v2125
    %v2128 = vlaneseq
    %v2129 = vshrl.u32 %v2128, 7
    %v2130 = vsub.s32 3, %v2129
    %v2131 = vrot.slane %v1280, %v2130
    %v2132 = vadd.f32 %v2126, %v2131
    %v2133 = vadd.f32 %v2127, %v2131
    %s2134 = scalar_lea.vmem %s6, 32
    %v2135 = vld [vmem:[%s2134] sm:$0xff]
    %v2136 = vld [vmem:[%s2134 + $0x8] sm:$0xff]
    %v2137 = vld [vmem:[%s2134 + $0x10] sm:$0xff]
    %v2138 = vld [vmem:[%s2134 + $0x18] sm:$0xff]
    %v2139 = vlaneseq
    %v2140 = vshrl.u32 %v2139, 7
    %v2141 = vsub.s32 6, %v2140
    %v2142 = vrot.slane %v1280, %v2141
    %v2144 = vsel %vm186, %v2132, 0
    %v2147 = vsel %vm186, %v2133, 0
    %2149 = vmatprep.subr.mxu0 0.0
    %2150 = vmatpush1.msra.mxu0 %v2135
    %2151 = vmatprep.subr.mxu0 0.0
    %2152 = vmatpush1.msra.mxu0 %v2136
    %2153 = vmatprep.subr.mxu0 0.0
    %2154 = vmatpush1.msra.mxu0 %v2137
    %2155 = vmatprep.subr.mxu0 0.0
    %2156 = vmatpush1.msra.mxu0 %v2138
    %2157 = vmatprep.subr.mxu0 0.0
    %2158 = vmatpush1.msra.mxu0 0.0
    %2159 = vmatprep.subr.mxu0 0.0
    %2160 = vmatpush1.msra.mxu0 0.0
    %2161 = vmatprep.subr.mxu0 0.0
    %2162 = vmatpush1.msra.mxu0 0.0
    %2163 = vmatprep.subr.mxu0 0.0
    %2164 = vmatpush1.msra.mxu0 0.0
    %2165 = vmatprep.subr.mxu0 0.0
    %2166 = vmatpush1.msra.mxu0 0.0
    %2167 = vmatprep.subr.mxu0 0.0
    %2168 = vmatpush1.msra.mxu0 0.0
    %2169 = vmatprep.subr.mxu0 0.0
    %2170 = vmatpush1.msra.mxu0 0.0
    %2171 = vmatprep.subr.mxu0 0.0
    %2172 = vmatpush1.msra.mxu0 0.0
    %2173 = vmatprep.subr.mxu0 0.0
    %2174 = vmatpush1.msra.mxu0 0.0
    %2175 = vmatprep.subr.mxu0 0.0
    %2176 = vmatpush1.msra.mxu0 0.0
    %2177 = vmatprep.subr.mxu0 0.0
    %2178 = vmatpush1.msra.mxu0 0.0
    %2179 = vmatprep.subr.mxu0 0.0
    %2180 = vmatpush1.msra.mxu0 0.0
    %2181 = vmatprep.subr.mxu0 0.0
    %2182 = vmatpush1.msra.mxu0 0.0
    %2183 = vmatprep.subr.mxu0 0.0
    %2184 = vmatpush1.msra.mxu0 0.0
    %2185 = vmatprep.subr.mxu0 0.0
    %2186 = vmatpush1.msra.mxu0 0.0
    %2187 = vmatprep.subr.mxu0 0.0
    %2188 = vmatpush1.msra.mxu0 0.0
    %2189 = vmatprep.subr.mxu0 0.0
    %2190 = vmatpush1.msra.mxu0 0.0
    %2191 = vmatprep.subr.mxu0 0.0
    %2192 = vmatpush1.msra.mxu0 0.0
    %2193 = vmatprep.subr.mxu0 0.0
    %2194 = vmatpush1.msra.mxu0 0.0
    %2195 = vmatprep.subr.mxu0 0.0
    %2196 = vmatpush1.msra.mxu0 0.0
    %2197 = vmatprep.subr.mxu0 0.0
    %2198 = vmatpush1.msra.mxu0 0.0
    %2199 = vmatprep.subr.mxu0 0.0
    %2200 = vmatpush1.msra.mxu0 0.0
    %2201 = vmatprep.subr.mxu0 0.0
    %2202 = vmatpush1.msra.mxu0 0.0
    %2203 = vmatprep.subr.mxu0 0.0
    %2204 = vmatpush1.msra.mxu0 0.0
    %2205 = vmatprep.subr.mxu0 0.0
    %2206 = vmatpush1.msra.mxu0 0.0
    %2207 = vmatprep.subr.mxu0 0.0
    %2208 = vmatpush1.msra.mxu0 0.0
    %2209 = vmatprep.subr.mxu0 0.0
    %2210 = vmatpush1.msra.mxu0 0.0
    %2211 = vmatprep.subr.mxu0 0.0
    %2212 = vmatpush1.msra.mxu0 0.0
    %2213 = vmatprep.mubr.f32.mxu0 0.0
    %2214 = vmatmul.mubr.f32.gmra.mrb[0].mxu0 %v2144
    %v2215 = vpop.f32.mrb[0].mxu0
    %v2216 = vadd.f32 %v2142, %v2215
    %v2217 = vpop.f32.mrb[0].mxu0
    %2218 = vmatprep.mubr.f32.mxu0 0.0
    %2219 = vmatmul.mubr.f32.gmra.mrb[0].mxu0 %v2147
    %v2220 = vpop.f32.mrb[0].mxu0
    %v2221 = vadd.f32 %v2142, %v2220
    %v2222 = vpop.f32.mrb[0].mxu0
    %2223 = vdwg.mxu0
    %v2224 = vmul.f32 %v2216, 0.5
    %v2225 = vmul.f32 %v2221, 0.5
    %v2226 = vmul.f32 %v2216, 0.70710677
    %v2227 = vmul.f32 %v2221, 0.70710677
    %vm2228 = vcmp.ge.f32.partialorder %v2226, 0.0
    %vm2229 = vcmp.ge.f32.partialorder %v2227, 0.0
    %v2230 = vsel %vm2228, 1.0, -1.0
    %v2231 = vsel %vm2229, 1.0, -1.0
    %v2232 = vand.u32 2147483647, %v2226
    %v2233 = vand.u32 2147483647, %v2227
    %v2234 = vmul.f32 %v2232, 0.3275911
    %v2235 = vmul.f32 %v2233, 0.3275911
    %v2236 = vadd.f32 %v2234, 1.0
    %v2237 = vadd.f32 %v2235, 1.0
    %v2238 = vrcp.pop %v2236
    %v2239 = vmul.f32 1.0, %v2238
    %v2240 = vrcp.pop %v2237
    %v2241 = vmul.f32 1.0, %v2240
    %v2242 = vmul.f32 %v2239, 1.0614054
    %v2243 = vmul.f32 %v2241, 1.0614054
    %v2244 = vadd.f32 %v2242, -1.4531521
    %v2245 = vadd.f32 %v2243, -1.4531521
    %v2246 = vmul.f32 %v2244, %v2239
    %v2247 = vmul.f32 %v2245, %v2241
    %v2248 = vadd.f32 %v2246, 1.4214138
    %v2249 = vadd.f32 %v2247, 1.4214138
    %v2250 = vmul.f32 %v2248, %v2239
    %v2251 = vmul.f32 %v2249, %v2241
    %v2252 = vadd.f32 %v2250, -0.28449672
    %v2253 = vadd.f32 %v2251, -0.28449672
    %v2254 = vmul.f32 %v2252, %v2239
    %v2255 = vmul.f32 %v2253, %v2241
    %v2256 = vadd.f32 %v2254, 0.2548296
    %v2257 = vadd.f32 %v2255, 0.2548296
    %v2258 = vmul.f32 %v2256, %v2239
    %v2259 = vmul.f32 %v2257, %v2241
    %v2260 = vsub.f32 0.0, %v2232
    %v2261 = vsub.f32 0.0, %v2233
    %v2262 = vmul.f32 %v2260, %v2232
    %v2263 = vmul.f32 %v2261, %v2233
    %v2264 = vmul.f32 %v2262, 1.442695
    %v2265 = vpow.pop %v2264
    %v2266 = vmul.f32 %v2263, 1.442695
    %v2267 = vpow.pop %v2266
    %v2268 = vmul.f32 %v2258, %v2265
    %v2269 = vmul.f32 %v2259, %v2267
    %v2270 = vsub.f32 1.0, %v2268
    %v2271 = vsub.f32 1.0, %v2269
    %v2272 = vmul.f32 %v2230, %v2270
    %v2273 = vmul.f32 %v2231, %v2271
    %v2274 = vadd.f32 %v2272, 1.0
    %v2275 = vadd.f32 %v2273, 1.0
    %v2276 = vmul.f32 %v2224, %v2274
    %v2277 = vmul.f32 %v2225, %v2275
    %s2278 = scalar_lea.vmem %s7, 128
    %v2279 = vld [vmem:[%s2278] sm:$0xff]
    %v2280 = vld [vmem:[%s2278 + $0x8] sm:$0xff]
    %v2281 = vld [vmem:[%s2278 + $0x10] sm:$0xff]
    %v2282 = vld [vmem:[%s2278 + $0x18] sm:$0xff]
    %v2283 = vld [vmem:[%s2278 + $0x20] sm:$0xff]
    %v2284 = vld [vmem:[%s2278 + $0x28] sm:$0xff]
    %v2285 = vld [vmem:[%s2278 + $0x30] sm:$0xff]
    %v2286 = vld [vmem:[%s2278 + $0x38] sm:$0xff]
    %v2287 = vld [vmem:[%s2278 + $0x40] sm:$0xff]
    %v2288 = vld [vmem:[%s2278 + $0x48] sm:$0xff]
    %v2289 = vld [vmem:[%s2278 + $0x50] sm:$0xff]
    %v2290 = vld [vmem:[%s2278 + $0x58] sm:$0xff]
    %v2291 = vld [vmem:[%s2278 + $0x60] sm:$0xff]
    %v2292 = vld [vmem:[%s2278 + $0x68] sm:$0xff]
    %v2293 = vld [vmem:[%s2278 + $0x70] sm:$0xff]
    %v2294 = vld [vmem:[%s2278 + $0x78] sm:$0xff]
    %v2295 = vlaneseq
    %v2296 = vshrl.u32 %v2295, 7
    %v2297 = vsub.s32 5, %v2296
    %v2298 = vrot.slane %v1280, %v2297
    %2299 = vmatprep.subr.mxu0 0.0
    %2300 = vmatpush1.msra.mxu0 %v2279
    %2301 = vmatprep.subr.mxu0 0.0
    %2302 = vmatpush1.msra.mxu0 %v2280
    %2303 = vmatprep.subr.mxu0 0.0
    %2304 = vmatpush1.msra.mxu0 %v2281
    %2305 = vmatprep.subr.mxu0 0.0
    %2306 = vmatpush1.msra.mxu0 %v2282
    %2307 = vmatprep.subr.mxu0 0.0
    %2308 = vmatpush1.msra.mxu0 %v2283
    %2309 = vmatprep.subr.mxu0 0.0
    %2310 = vmatpush1.msra.mxu0 %v2284
    %2311 = vmatprep.subr.mxu0 0.0
    %2312 = vmatpush1.msra.mxu0 %v2285
    %2313 = vmatprep.subr.mxu0 0.0
    %2314 = vmatpush1.msra.mxu0 %v2286
    %2315 = vmatprep.subr.mxu0 0.0
    %2316 = vmatpush1.msra.mxu0 %v2287
    %2317 = vmatprep.subr.mxu0 0.0
    %2318 = vmatpush1.msra.mxu0 %v2288
    %2319 = vmatprep.subr.mxu0 0.0
    %2320 = vmatpush1.msra.mxu0 %v2289
    %2321 = vmatprep.subr.mxu0 0.0
    %2322 = vmatpush1.msra.mxu0 %v2290
    %2323 = vmatprep.subr.mxu0 0.0
    %2324 = vmatpush1.msra.mxu0 %v2291
    %2325 = vmatprep.subr.mxu0 0.0
    %2326 = vmatpush1.msra.mxu0 %v2292
    %2327 = vmatprep.subr.mxu0 0.0
    %2328 = vmatpush1.msra.mxu0 %v2293
    %2329 = vmatprep.subr.mxu0 0.0
    %2330 = vmatpush1.msra.mxu0 %v2294
    %2331 = vmatprep.subr.mxu0 0.0
    %2332 = vmatpush1.msra.mxu0 0.0
    %2333 = vmatprep.subr.mxu0 0.0
    %2334 = vmatpush1.msra.mxu0 0.0
    %2335 = vmatprep.subr.mxu0 0.0
    %2336 = vmatpush1.msra.mxu0 0.0
    %2337 = vmatprep.subr.mxu0 0.0
    %2338 = vmatpush1.msra.mxu0 0.0
    %2339 = vmatprep.subr.mxu0 0.0
    %2340 = vmatpush1.msra.mxu0 0.0
    %2341 = vmatprep.subr.mxu0 0.0
    %2342 = vmatpush1.msra.mxu0 0.0
    %2343 = vmatprep.subr.mxu0 0.0
    %2344 = vmatpush1.msra.mxu0 0.0
    %2345 = vmatprep.subr.mxu0 0.0
    %2346 = vmatpush1.msra.mxu0 0.0
    %2347 = vmatprep.subr.mxu0 0.0
    %2348 = vmatpush1.msra.mxu0 0.0
    %2349 = vmatprep.subr.mxu0 0.0
    %2350 = vmatpush1.msra.mxu0 0.0
    %2351 = vmatprep.subr.mxu0 0.0
    %2352 = vmatpush1.msra.mxu0 0.0
    %2353 = vmatprep.subr.mxu0 0.0
    %2354 = vmatpush1.msra.mxu0 0.0
    %2355 = vmatprep.subr.mxu0 0.0
    %2356 = vmatpush1.msra.mxu0 0.0
    %2357 = vmatprep.subr.mxu0 0.0
    %2358 = vmatpush1.msra.mxu0 0.0
    %2359 = vmatprep.subr.mxu0 0.0
    %2360 = vmatpush1.msra.mxu0 0.0
    %2361 = vmatprep.subr.mxu0 0.0
    %2362 = vmatpush1.msra.mxu0 0.0
    %2363 = vmatprep.mubr.f32.mxu0 0.0
    %2364 = vmatmul.mubr.f32.gmra.mrb[0].mxu0 %v2276
    %v2365 = vpop.f32.mrb[0].mxu0
    %v2366 = vadd.f32 %v2298, %v2365
    %v2367 = vpop.f32.mrb[0].mxu0
    %2368 = vmatprep.mubr.f32.mxu0 0.0
    %2369 = vmatmul.mubr.f32.gmra.mrb[0].mxu0 %v2277
    %v2370 = vpop.f32.mrb[0].mxu0
    %v2371 = vadd.f32 %v2298, %v2370
    %v2372 = vpop.f32.mrb[0].mxu0
    %2373 = vdwg.mxu0
    %v2374 = vadd.f32 %v2366, %v2094
    %v2375 = vadd.f32 %v2371, %v2095
    %v2376 = vsel %vm186, %v2374, 0.0
    %2377 = vadd.xlane.f32.xlu0 %v2376
    %v2378 = vpop.xlane.xlu0 %2377
    %v2379 = vsel %vm186, %v2375, 0.0
    %2380 = vadd.xlane.f32.xlu0 %v2379
    %v2381 = vpop.xlane.xlu0 %2380
    %v2382 = vmul.f32 %v2378, %v193
    %v2383 = vmul.f32 %v2381, %v193
    %v2384 = vsub.f32 %v2374, %v2382
    %v2385 = vsub.f32 %v2375, %v2383
    %v2386 = vmul.f32 %v2384, %v2384
    %v2387 = vmul.f32 %v2385, %v2385
    %v2388 = vsel %vm186, %v2386, 0.0
    %2389 = vadd.xlane.f32.xlu0 %v2388
    %v2390 = vpop.xlane.xlu0 %2389
    %v2391 = vsel %vm186, %v2387, 0.0
    %2392 = vadd.xlane.f32.xlu0 %v2391
    %v2393 = vpop.xlane.xlu0 %2392
    %v2394 = vmul.f32 %v2390, %v193
    %v2395 = vmul.f32 %v2393, %v193
    %v2396 = vadd.f32 %v2394, 1e-12
    %v2397 = vadd.f32 %v2395, 1e-12
    %v2398 = vrsqrt.pop %v2396
    %v2399 = vrsqrt.pop %v2397
    %v2400 = vmul.f32 %v2384, %v2398
    %v2401 = vmul.f32 %v2385, %v2399
    %v2402 = vlaneseq
    %v2403 = vshrl.u32 %v2402, 7
    %v2404 = vsub.s32 7, %v2403
    %v2405 = vrot.slane %v33, %v2404
    %v2406 = vmul.f32 %v2400, %v2405
    %v2407 = vmul.f32 %v2401, %v2405
    %v2408 = vlaneseq
    %v2409 = vshrl.u32 %v2408, 7
    %v2410 = vsub.s32 0, %v2409
    %v2411 = vrot.slane %v34, %v2410
    %v2412 = vadd.f32 %v2406, %v2411
    %v2413 = vadd.f32 %v2407, %v2411
    %v2415 = vrot.slane %v2413, 7
    %v2417 = vsel %vm156, %v2412, %v2415
    %v2418 = vld [vmem:[%s8] sm:$0xff]
    %v2419 = vld [vmem:[%s8 + $0x8] sm:$0xff]
    %v2420 = vld [vmem:[%s8 + $0x10] sm:$0xff]
    %v2421 = vld [vmem:[%s8 + $0x18] sm:$0xff]
    %v2422 = vlaneseq
    %v2423 = vshrl.u32 %v2422, 7
    %v2424 = vsub.s32 1, %v2423
    %v2425 = vrot.slane %v34, %v2424
    %v2427 = vsel %vm186, %v2417, 0
    %2429 = vmatprep.subr.mxu0 0.0
    %2430 = vmatpush1.msra.mxu0 %v2418
    %2431 = vmatprep.subr.mxu0 0.0
    %2432 = vmatpush1.msra.mxu0 %v2419
    %2433 = vmatprep.subr.mxu0 0.0
    %2434 = vmatpush1.msra.mxu0 %v2420
    %2435 = vmatprep.subr.mxu0 0.0
    %2436 = vmatpush1.msra.mxu0 %v2421
    %2437 = vmatprep.subr.mxu0 0.0
    %2438 = vmatpush1.msra.mxu0 0.0
    %2439 = vmatprep.subr.mxu0 0.0
    %2440 = vmatpush1.msra.mxu0 0.0
    %2441 = vmatprep.subr.mxu0 0.0
    %2442 = vmatpush1.msra.mxu0 0.0
    %2443 = vmatprep.subr.mxu0 0.0
    %2444 = vmatpush1.msra.mxu0 0.0
    %2445 = vmatprep.subr.mxu0 0.0
    %2446 = vmatpush1.msra.mxu0 0.0
    %2447 = vmatprep.subr.mxu0 0.0
    %2448 = vmatpush1.msra.mxu0 0.0
    %2449 = vmatprep.subr.mxu0 0.0
    %2450 = vmatpush1.msra.mxu0 0.0
    %2451 = vmatprep.subr.mxu0 0.0
    %2452 = vmatpush1.msra.mxu0 0.0
    %2453 = vmatprep.subr.mxu0 0.0
    %2454 = vmatpush1.msra.mxu0 0.0
    %2455 = vmatprep.subr.mxu0 0.0
    %2456 = vmatpush1.msra.mxu0 0.0
    %2457 = vmatprep.subr.mxu0 0.0
    %2458 = vmatpush1.msra.mxu0 0.0
    %2459 = vmatprep.subr.mxu0 0.0
    %2460 = vmatpush1.msra.mxu0 0.0
    %2461 = vmatprep.subr.mxu0 0.0
    %2462 = vmatpush1.msra.mxu0 0.0
    %2463 = vmatprep.subr.mxu0 0.0
    %2464 = vmatpush1.msra.mxu0 0.0
    %2465 = vmatprep.subr.mxu0 0.0
    %2466 = vmatpush1.msra.mxu0 0.0
    %2467 = vmatprep.subr.mxu0 0.0
    %2468 = vmatpush1.msra.mxu0 0.0
    %2469 = vmatprep.subr.mxu0 0.0
    %2470 = vmatpush1.msra.mxu0 0.0
    %2471 = vmatprep.subr.mxu0 0.0
    %2472 = vmatpush1.msra.mxu0 0.0
    %2473 = vmatprep.subr.mxu0 0.0
    %2474 = vmatpush1.msra.mxu0 0.0
    %2475 = vmatprep.subr.mxu0 0.0
    %2476 = vmatpush1.msra.mxu0 0.0
    %2477 = vmatprep.subr.mxu0 0.0
    %2478 = vmatpush1.msra.mxu0 0.0
    %2479 = vmatprep.subr.mxu0 0.0
    %2480 = vmatpush1.msra.mxu0 0.0
    %2481 = vmatprep.subr.mxu0 0.0
    %2482 = vmatpush1.msra.mxu0 0.0
    %2483 = vmatprep.subr.mxu0 0.0
    %2484 = vmatpush1.msra.mxu0 0.0
    %2485 = vmatprep.subr.mxu0 0.0
    %2486 = vmatpush1.msra.mxu0 0.0
    %2487 = vmatprep.subr.mxu0 0.0
    %2488 = vmatpush1.msra.mxu0 0.0
    %2489 = vmatprep.subr.mxu0 0.0
    %2490 = vmatpush1.msra.mxu0 0.0
    %2491 = vmatprep.subr.mxu0 0.0
    %2492 = vmatpush1.msra.mxu0 0.0
    %2493 = vmatprep.mubr.f32.mxu0 0.0
    %2494 = vmatmul.mubr.f32.gmra.mrb[0].mxu0 %v2427
    %v2495 = vpop.f32.mrb[0].mxu0
    %v2496 = vadd.f32 %v2425, %v2495
    %v2497 = vpop.f32.mrb[0].mxu0
    %2498 = vdwg.mxu0
    %2499 = vst [vmem:[#allocation2] sm:$0x3] %v2496
    // Predicated region
    $region38: #{vit_forward.1} parent=1 // pred_check
      _
    $region39: #{vit_forward.1} parent=1 // pred_check_branch
      %2501 = sbr.rel (0) target = $region41
    $region40: #{vit_forward.1} parent=1 // pred_region
      %s2503 = ssub.s32 32, 32
      %2504 = vsyncadd [#allocation3], %s2503
      %s2506 = sshll.u32 [#allocation2], 4
      %s2507 = int_to_ptr.vmem [resolvable:$true] %s2506
      %2509 = dma.vmem_to_hbm [thread:$0]  %s2507, 32, %s9, [#allocation3]
    $region41: #{vit_forward.1} parent=1 // pred_fallthru
      _
    // Predicated region
    $region42: #{vit_forward.1} parent=1 // pred_check
      _
    $region43: #{vit_forward.1} parent=1 // pred_check_branch
      %2511 = sbr.rel (0) target = $region45
    $region44: #{vit_forward.1} parent=1 // pred_region
      %2512 = dma.done [#allocation3], 32
    $region45: #{vit_forward.1} parent=1 // pred_fallthru
      _
    %2513 = vsyncpa [#allocation3], 1

</llo_original>
